<compile_context>
chip_gen: v7x
topology: tpu7x:2x2x1
jax: 0.10.0
libtpu: 0.0.40
codegen_flags: <defaults>
</compile_context>

<pallas_src>
import functools

import jax
import jax.numpy as jnp
import numpy as np
from jax import lax
from jax.experimental import pallas as pl
from jax.experimental.pallas import tpu as pltpu


# ----------------------------------------------------------------------------
# Plain-JAX glue: bilinear x2 upsample (align_corners=True), gather based.
# ----------------------------------------------------------------------------
def _bilinear_up2_align_corners(x):
    # x: (N, H, W, C) float32
    N, H, W, C = x.shape
    Ho, Wo = 2 * H, 2 * W
    ys = jnp.arange(Ho, dtype=jnp.float32) * (H - 1) / (Ho - 1)
    xs = jnp.arange(Wo, dtype=jnp.float32) * (W - 1) / (Wo - 1)
    y0 = jnp.floor(ys).astype(jnp.int32)
    x0 = jnp.floor(xs).astype(jnp.int32)
    y1 = jnp.minimum(y0 + 1, H - 1)
    x1 = jnp.minimum(x0 + 1, W - 1)
    wy = (ys - y0.astype(jnp.float32))[None, :, None, None]
    wx = (xs - x0.astype(jnp.float32))[None, None, :, None]

    def g(yy, xx):
        return x[:, yy][:, :, xx]  # (N, Ho, Wo, C)

    return (g(y0, x0) * (1.0 - wy) * (1.0 - wx)
            + g(y0, x1) * (1.0 - wy) * wx
            + g(y1, x0) * wy * (1.0 - wx)
            + g(y1, x1) * wy * wx)


def _fold_bn(gamma, beta, mean, var, eps=1e-5):
    s = gamma / jnp.sqrt(var + eps)
    b = beta - mean * s
    return s, b


# ----------------------------------------------------------------------------
# Pallas kernel: one batch element per grid step (NHWC, channels on lanes).
# ----------------------------------------------------------------------------
def _cff_kernel(cout, xl_ref, xh_ref, wbig_ref, whigh_ref, bias_ref,
                out_ref, pad_ref):
    _, H, W, Cl = xl_ref.shape
    Ch = xh_ref.shape[-1]
    Ctot = out_ref.shape[-1]
    HW = H * W
    z = jnp.zeros((), pad_ref.dtype)

    # In-kernel zero padding (pad=2 on each spatial side) in a VMEM scratch.
    # Only the 2-wide halo is zeroed each step (the interior is overwritten);
    # this stays correct under megacore sharding because the halo is re-zeroed
    # on every grid step, not just the first one.
    pad_ref[0:2, :, :] = jnp.full((2, W + 4, Cl), z)
    pad_ref[H + 2:H + 4, :, :] = jnp.full((2, W + 4, Cl), z)
    pad_ref[2:2 + H, 0:2, :] = jnp.full((H, 2, Cl), z)
    pad_ref[2:2 + H, W + 2:W + 4, :] = jnp.full((H, 2, Cl), z)
    pad_ref[2:2 + H, 2:2 + W, :] = xl_ref[0]

    # conv_low (3x3, dilation=2) with conv_cls + BN scales folded into the
    # weights: 9 tap matmuls accumulating into a (HW, Cout+ncls) f32 value.
    # The 3 dx-shifted views are hoisted & flattened once; taps are then just
    # row-range slices (start is always a multiple of W).
    acc = jnp.zeros((HW, Ctot), jnp.float32)
    for j, dx in enumerate((0, 2, 4)):
        col = pad_ref[:, dx:dx + W, :].reshape((H + 4) * W, Cl)
        for i in range(3):
            dy = 2 * i
            patch = col[dy * W:dy * W + HW, :]
            acc = acc + jnp.dot(patch, wbig_ref[3 * i + j],
                                preferred_element_type=jnp.float32)

    # conv_high (1x1) — its weight has zero columns for the cls channels.
    xh = xh_ref[0].reshape(HW, Ch)
    acc = acc + jnp.dot(xh, whigh_ref[...],
                        preferred_element_type=jnp.float32)

    # fused bias (BN shifts + cls bias term), then relu only on the fused
    # (first `cout`) channels; cls channels pass through untouched.
    y = acc + bias_ref[...]
    ch_idx = lax.broadcasted_iota(jnp.int32, (1, Ctot), 1)
    y = jnp.where(ch_idx < cout, jnp.maximum(y, 0.0), y)

    out_ref[0] = y.reshape(H, W, Ctot).astype(out_ref.dtype)


def cff_block_pallas(xl_nchw, xh_nchw, params):
    # NCHW -> NHWC (channels on the 128-lane dim)
    xl = jnp.transpose(xl_nchw, (0, 2, 3, 1)).astype(jnp.float32)
    xh = jnp.transpose(xh_nchw, (0, 2, 3, 1)).astype(jnp.float32)

    xl_up = _bilinear_up2_align_corners(xl)          # (N, H, W, Cl)
    N, H, W, Cl = xl_up.shape
    Ch = xh.shape[-1]
    assert xh.shape[1] == H and xh.shape[2] == W

    w_low = params["w_low"].astype(jnp.float32)      # (Cout, Cl, 3, 3)
    w_high = params["w_high"].astype(jnp.float32)    # (Cout, Ch, 1, 1)
    w_cls = params["w_cls"].astype(jnp.float32)      # (ncls, Cout, 1, 1)
    Cout = w_low.shape[0]
    ncls = w_cls.shape[0]
    Ctot = Cout + ncls

    s_low, b_low = _fold_bn(params["bn_low_gamma"], params["bn_low_beta"],
                            params["bn_low_mean"], params["bn_low_var"])
    s_high, b_high = _fold_bn(params["bn_high_gamma"], params["bn_high_beta"],
                              params["bn_high_mean"], params["bn_high_var"])

    # ---- weight repack / folding (all f32, cast to bf16 at the end) -------
    w_low_taps = jnp.transpose(w_low, (2, 3, 1, 0)).reshape(9, Cl, Cout)
    w_high_mat = jnp.transpose(w_high[:, :, 0, 0], (1, 0))      # (Ch, Cout)
    w_cls_mat = jnp.transpose(w_cls[:, :, 0, 0], (1, 0))        # (Cout, ncls)

    # conv_low with BN scale folded in, plus conv_cls composed on top of it.
    w_low_fused = w_low_taps * s_low[None, None, :]                       # (9,Cl,Cout)
    w_cls_fused = jnp.einsum("tio,ok->tik", w_low_taps,
                             s_low[:, None] * w_cls_mat)                  # (9,Cl,ncls)
    w_big = jnp.concatenate([w_low_fused, w_cls_fused],
                            axis=-1).astype(jnp.bfloat16)                 # (9,Cl,Ctot)

    # conv_high with BN scale folded in; zero columns for the cls channels.
    w_high_big = jnp.concatenate(
        [w_high_mat * s_high[None, :], jnp.zeros((Ch, ncls), jnp.float32)],
        axis=-1).astype(jnp.bfloat16)                                     # (Ch,Ctot)

    # combined bias: BN shifts on the fused channels, b_low @ w_cls on cls.
    bias_big = jnp.concatenate([b_low + b_high,
                                b_low @ w_cls_mat]).reshape(1, Ctot)      # f32

    # activations as bf16 (accumulation stays f32 in the kernel)
    xl_up_b = xl_up.astype(jnp.bfloat16)
    xh_b = xh.astype(jnp.bfloat16)

    out = pl.pallas_call(
        functools.partial(_cff_kernel, Cout),
        out_shape=jax.ShapeDtypeStruct((N, H, W, Ctot), jnp.float32),
        grid_spec=pltpu.PrefetchScalarGridSpec(
            num_scalar_prefetch=0,
            grid=(N,),
            in_specs=[
                pl.BlockSpec((1, H, W, Cl), lambda n: (n, 0, 0, 0)),
                pl.BlockSpec((1, H, W, Ch), lambda n: (n, 0, 0, 0)),
                pl.BlockSpec((9, Cl, Ctot), lambda n: (0, 0, 0)),
                pl.BlockSpec((Ch, Ctot), lambda n: (0, 0)),
                pl.BlockSpec((1, Ctot), lambda n: (0, 0)),
            ],
            out_specs=pl.BlockSpec((1, H, W, Ctot), lambda n: (n, 0, 0, 0)),
            scratch_shapes=[pltpu.VMEM((H + 4, W + 4, Cl), jnp.bfloat16)],
        ),
        compiler_params=pltpu.CompilerParams(
            dimension_semantics=("parallel",),
            vmem_limit_bytes=32 * 1024 * 1024),
    )(xl_up_b, xh_b, w_big, w_high_big, bias_big)

    # single concatenated NHWC result -> NCHW, then split fused / cls parts
    out_nchw = jnp.transpose(out, (0, 3, 1, 2))
    return out_nchw[:, :Cout], out_nchw[:, Cout:]


# ----------------------------------------------------------------------------
# Pure-JAX f32 reference (for correctness check)
# ----------------------------------------------------------------------------
def cff_block_reference(xl_nchw, xh_nchw, params):
    xl = jnp.transpose(xl_nchw, (0, 2, 3, 1)).astype(jnp.float32)
    xh = jnp.transpose(xh_nchw, (0, 2, 3, 1)).astype(jnp.float32)
    xl_up = _bilinear_up2_align_corners(xl)
    dn = ("NHWC", "HWIO", "NHWC")

    s_low, b_low = _fold_bn(params["bn_low_gamma"], params["bn_low_beta"],
                            params["bn_low_mean"], params["bn_low_var"])
    s_high, b_high = _fold_bn(params["bn_high_gamma"], params["bn_high_beta"],
                              params["bn_high_mean"], params["bn_high_var"])

    w_low = jnp.transpose(params["w_low"], (2, 3, 1, 0))
    yl = lax.conv_general_dilated(xl_up, w_low, (1, 1), ((2, 2), (2, 2)),
                                  rhs_dilation=(2, 2), dimension_numbers=dn,
                                  precision=lax.Precision.HIGHEST)
    yl = yl * s_low + b_low

    w_high = jnp.transpose(params["w_high"], (2, 3, 1, 0))
    yh = lax.conv_general_dilated(xh, w_high, (1, 1), "VALID",
                                  dimension_numbers=dn,
                                  precision=lax.Precision.HIGHEST)
    yh = yh * s_high + b_high

    x = jax.nn.relu(yl + yh)

    w_cls = jnp.transpose(params["w_cls"], (2, 3, 1, 0))
    cls = lax.conv_general_dilated(yl, w_cls, (1, 1), "VALID",
                                   dimension_numbers=dn,
                                   precision=lax.Precision.HIGHEST)
    return (jnp.transpose(x, (0, 3, 1, 2)),
            jnp.transpose(cls, (0, 3, 1, 2)))


# ----------------------------------------------------------------------------
# Deterministic parameter init + run
# ----------------------------------------------------------------------------
def make_params(key, in_low, in_high, out_c, num_classes):
    ks = jax.random.split(key, 12)
    return {
        "w_low": 0.1 * jax.random.normal(ks[0], (out_c, in_low, 3, 3), jnp.float32),
        "bn_low_gamma": jax.random.uniform(ks[1], (out_c,), jnp.float32, 0.5, 1.5),
        "bn_low_beta": 0.1 * jax.random.normal(ks[2], (out_c,), jnp.float32),
        "bn_low_mean": 0.1 * jax.random.normal(ks[3], (out_c,), jnp.float32),
        "bn_low_var": jax.random.uniform(ks[4], (out_c,), jnp.float32, 0.5, 1.5),
        "w_high": 0.1 * jax.random.normal(ks[5], (out_c, in_high, 1, 1), jnp.float32),
        "bn_high_gamma": jax.random.uniform(ks[6], (out_c,), jnp.float32, 0.5, 1.5),
        "bn_high_beta": 0.1 * jax.random.normal(ks[7], (out_c,), jnp.float32),
        "bn_high_mean": 0.1 * jax.random.normal(ks[8], (out_c,), jnp.float32),
        "bn_high_var": jax.random.uniform(ks[9], (out_c,), jnp.float32, 0.5, 1.5),
        "w_cls": 0.1 * jax.random.normal(ks[10], (num_classes, out_c, 1, 1), jnp.float32),
    }


if __name__ == "__main__":
    key = jax.random.PRNGKey(0)
    k_xl, k_xh, k_p = jax.random.split(key, 3)

    N = 2
    in_low, in_high, out_c, num_classes = 6, 4, 8, 5
    Hl, Wl = 8, 8              # low-res input; upsampled x2 -> 16x16
    Hh, Wh = 16, 16            # high-res input

    xl = jax.random.normal(k_xl, (N, in_low, Hl, Wl), jnp.float32)   # NCHW
    xh = jax.random.normal(k_xh, (N, in_high, Hh, Wh), jnp.float32)  # NCHW
    params = make_params(k_p, in_low, in_high, out_c, num_classes)

    x_out, x_cls = cff_block_pallas(xl, xh, params)
    jax.block_until_ready(x_out)
    jax.block_until_ready(x_cls)

    x_ref, cls_ref = cff_block_reference(xl, xh, params)
    # tolerance accounts for bf16 activations/weights in the Pallas path vs
    # the pure-f32 reference (f32 accumulation in both).
    np.testing.assert_allclose(np.asarray(x_out), np.asarray(x_ref),
                               rtol=3e-2, atol=3e-2)
    np.testing.assert_allclose(np.asarray(x_cls), np.asarray(cls_ref),
                               rtol=3e-2, atol=3e-2)

    print("KERNEL_OK")
</pallas_src>

<mosaic_0001>
module attributes {stable_mosaic.version = 11 : i64} {
  func.func @_cff_kernel(%arg0: i32, %arg1: memref<1x16x16x6xbf16, #tpu.memory_space<vmem>>, %arg2: memref<1x16x16x4xbf16, #tpu.memory_space<vmem>>, %arg3: memref<9x6x13xbf16, #tpu.memory_space<vmem>>, %arg4: memref<4x13xbf16, #tpu.memory_space<vmem>>, %arg5: memref<1x13xf32, #tpu.memory_space<vmem>>, %arg6: memref<1x16x16x13xf32, #tpu.memory_space<vmem>>, %arg7: memref<20x20x6xbf16, #tpu.memory_space<vmem>>) attributes {dimension_semantics = [#tpu.dimension_semantics<parallel>], iteration_bounds = array<i64: 2>, scalar_prefetch = 0 : i64, scratch_operands = 1 : i64, tpu.core_type = #tpu.core_type<tc>, window_params = [{transform_indices = @transform_0, window_bounds = array<i64: 1, 16, 16, 6>}, {transform_indices = @transform_1, window_bounds = array<i64: 1, 16, 16, 4>}, {pipeline_mode = #tpu.pipeline_mode<synchronous>, transform_indices = @transform_2, window_bounds = array<i64: 9, 6, 13>}, {pipeline_mode = #tpu.pipeline_mode<synchronous>, transform_indices = @transform_3, window_bounds = array<i64: 4, 13>}, {pipeline_mode = #tpu.pipeline_mode<synchronous>, transform_indices = @transform_4, window_bounds = array<i64: 1, 13>}, {transform_indices = @transform_5, window_bounds = array<i64: 1, 16, 16, 13>}]} {
    %cst = arith.constant 0.000000e+00 : bf16
    %0 = vector.broadcast %cst : bf16 to vector<2x20x6xbf16>
    %c0 = arith.constant 0 : index
    %c0_0 = arith.constant 0 : index
    %c0_1 = arith.constant 0 : index
    %1 = vector.load %arg7[%c0, %c0_0, %c0_1] : memref<20x20x6xbf16, #tpu.memory_space<vmem>>, vector<2x20x6xbf16>
    tpu.vector_store %arg7[%c0, %c0_0, %c0_1], %0 {strides = array<i32>} : memref<20x20x6xbf16, #tpu.memory_space<vmem>>, vector<2x20x6xbf16>,
    %cst_2 = arith.constant 0.000000e+00 : bf16
    %2 = vector.broadcast %cst_2 : bf16 to vector<2x20x6xbf16>
    %c18 = arith.constant 18 : index
    %c0_3 = arith.constant 0 : index
    %c0_4 = arith.constant 0 : index
    %3 = vector.load %arg7[%c18, %c0_3, %c0_4] : memref<20x20x6xbf16, #tpu.memory_space<vmem>>, vector<2x20x6xbf16>
    tpu.vector_store %arg7[%c18, %c0_3, %c0_4], %2 {strides = array<i32>} : memref<20x20x6xbf16, #tpu.memory_space<vmem>>, vector<2x20x6xbf16>,
    %cst_5 = arith.constant 0.000000e+00 : bf16
    %4 = vector.broadcast %cst_5 : bf16 to vector<16x2x6xbf16>
    %c2 = arith.constant 2 : index
    %c0_6 = arith.constant 0 : index
    %c0_7 = arith.constant 0 : index
    %5 = vector.load %arg7[%c2, %c0_6, %c0_7] : memref<20x20x6xbf16, #tpu.memory_space<vmem>>, vector<16x2x6xbf16>
    tpu.vector_store %arg7[%c2, %c0_6, %c0_7], %4 {strides = array<i32>} : memref<20x20x6xbf16, #tpu.memory_space<vmem>>, vector<16x2x6xbf16>,
    %cst_8 = arith.constant 0.000000e+00 : bf16
    %6 = vector.broadcast %cst_8 : bf16 to vector<16x2x6xbf16>
    %c2_9 = arith.constant 2 : index
    %c18_10 = arith.constant 18 : index
    %c0_11 = arith.constant 0 : index
    %7 = vector.load %arg7[%c2_9, %c18_10, %c0_11] : memref<20x20x6xbf16, #tpu.memory_space<vmem>>, vector<16x2x6xbf16>
    tpu.vector_store %arg7[%c2_9, %c18_10, %c0_11], %6 {strides = array<i32>} : memref<20x20x6xbf16, #tpu.memory_space<vmem>>, vector<16x2x6xbf16>,
    %c0_12 = arith.constant 0 : index
    %c0_13 = arith.constant 0 : index
    %c0_14 = arith.constant 0 : index
    %c0_15 = arith.constant 0 : index
    %8 = vector.load %arg1[%c0_12, %c0_13, %c0_14, %c0_15] : memref<1x16x16x6xbf16, #tpu.memory_space<vmem>>, vector<1x16x16x6xbf16>
    %9 = vector.shape_cast %8 : vector<1x16x16x6xbf16> to vector<16x16x6xbf16>
    %c2_16 = arith.constant 2 : index
    %c2_17 = arith.constant 2 : index
    %c0_18 = arith.constant 0 : index
    %10 = vector.load %arg7[%c2_16, %c2_17, %c0_18] : memref<20x20x6xbf16, #tpu.memory_space<vmem>>, vector<16x16x6xbf16>
    tpu.vector_store %arg7[%c2_16, %c2_17, %c0_18], %9 {strides = array<i32>} : memref<20x20x6xbf16, #tpu.memory_space<vmem>>, vector<16x16x6xbf16>,
    %cst_19 = arith.constant 0.000000e+00 : f32
    %11 = vector.broadcast %cst_19 : f32 to vector<256x13xf32>
    %c0_20 = arith.constant 0 : index
    %c0_21 = arith.constant 0 : index
    %c0_22 = arith.constant 0 : index
    %12 = vector.load %arg7[%c0_20, %c0_21, %c0_22] : memref<20x20x6xbf16, #tpu.memory_space<vmem>>, vector<20x16x6xbf16>
    %13 = vector.shape_cast %12 : vector<20x16x6xbf16> to vector<320x6xbf16>
    %14 = vector.extract_strided_slice %13 {offsets = [0, 0], sizes = [256, 6], strides = [1, 1]} : vector<320x6xbf16> to vector<256x6xbf16>
    %c0_23 = arith.constant 0 : index
    %c0_24 = arith.constant 0 : index
    %c0_25 = arith.constant 0 : index
    %15 = vector.load %arg3[%c0_23, %c0_24, %c0_25] : memref<9x6x13xbf16, #tpu.memory_space<vmem>>, vector<1x6x13xbf16>
    %16 = vector.shape_cast %15 : vector<1x6x13xbf16> to vector<6x13xbf16>
    %cst_26 = arith.constant dense<0.000000e+00> : vector<256x13xf32>
    %17 = tpu.matmul %14, %16, %cst_26 {dimension_numbers = #tpu.dot_dimension_numbers<[1], [0], [0], [1], [0, 0, 1, 1], [], []>} : vector<256x6xbf16>, vector<6x13xbf16>, vector<256x13xf32> -> vector<256x13xf32>
    %18 = arith.addf %11, %17 : vector<256x13xf32>
    %19 = vector.extract_strided_slice %13 {offsets = [32, 0], sizes = [256, 6], strides = [1, 1]} : vector<320x6xbf16> to vector<256x6xbf16>
    %c3 = arith.constant 3 : index
    %c0_27 = arith.constant 0 : index
    %c0_28 = arith.constant 0 : index
    %20 = vector.load %arg3[%c3, %c0_27, %c0_28] : memref<9x6x13xbf16, #tpu.memory_space<vmem>>, vector<1x6x13xbf16>
    %21 = vector.shape_cast %20 : vector<1x6x13xbf16> to vector<6x13xbf16>
    %cst_29 = arith.constant dense<0.000000e+00> : vector<256x13xf32>
    %22 = tpu.matmul %19, %21, %cst_29 {dimension_numbers = #tpu.dot_dimension_numbers<[1], [0], [0], [1], [0, 0, 1, 1], [], []>} : vector<256x6xbf16>, vector<6x13xbf16>, vector<256x13xf32> -> vector<256x13xf32>
    %23 = arith.addf %18, %22 : vector<256x13xf32>
    %24 = vector.extract_strided_slice %13 {offsets = [64, 0], sizes = [256, 6], strides = [1, 1]} : vector<320x6xbf16> to vector<256x6xbf16>
    %c6 = arith.constant 6 : index
    %c0_30 = arith.constant 0 : index
    %c0_31 = arith.constant 0 : index
    %25 = vector.load %arg3[%c6, %c0_30, %c0_31] : memref<9x6x13xbf16, #tpu.memory_space<vmem>>, vector<1x6x13xbf16>
    %26 = vector.shape_cast %25 : vector<1x6x13xbf16> to vector<6x13xbf16>
    %cst_32 = arith.constant dense<0.000000e+00> : vector<256x13xf32>
    %27 = tpu.matmul %24, %26, %cst_32 {dimension_numbers = #tpu.dot_dimension_numbers<[1], [0], [0], [1], [0, 0, 1, 1], [], []>} : vector<256x6xbf16>, vector<6x13xbf16>, vector<256x13xf32> -> vector<256x13xf32>
    %28 = arith.addf %23, %27 : vector<256x13xf32>
    %c0_33 = arith.constant 0 : index
    %c2_34 = arith.constant 2 : index
    %c0_35 = arith.constant 0 : index
    %29 = vector.load %arg7[%c0_33, %c2_34, %c0_35] : memref<20x20x6xbf16, #tpu.memory_space<vmem>>, vector<20x16x6xbf16>
    %30 = vector.shape_cast %29 : vector<20x16x6xbf16> to vector<320x6xbf16>
    %31 = vector.extract_strided_slice %30 {offsets = [0, 0], sizes = [256, 6], strides = [1, 1]} : vector<320x6xbf16> to vector<256x6xbf16>
    %c1 = arith.constant 1 : index
    %c0_36 = arith.constant 0 : index
    %c0_37 = arith.constant 0 : index
    %32 = vector.load %arg3[%c1, %c0_36, %c0_37] : memref<9x6x13xbf16, #tpu.memory_space<vmem>>, vector<1x6x13xbf16>
    %33 = vector.shape_cast %32 : vector<1x6x13xbf16> to vector<6x13xbf16>
    %cst_38 = arith.constant dense<0.000000e+00> : vector<256x13xf32>
    %34 = tpu.matmul %31, %33, %cst_38 {dimension_numbers = #tpu.dot_dimension_numbers<[1], [0], [0], [1], [0, 0, 1, 1], [], []>} : vector<256x6xbf16>, vector<6x13xbf16>, vector<256x13xf32> -> vector<256x13xf32>
    %35 = arith.addf %28, %34 : vector<256x13xf32>
    %36 = vector.extract_strided_slice %30 {offsets = [32, 0], sizes = [256, 6], strides = [1, 1]} : vector<320x6xbf16> to vector<256x6xbf16>
    %c4 = arith.constant 4 : index
    %c0_39 = arith.constant 0 : index
    %c0_40 = arith.constant 0 : index
    %37 = vector.load %arg3[%c4, %c0_39, %c0_40] : memref<9x6x13xbf16, #tpu.memory_space<vmem>>, vector<1x6x13xbf16>
    %38 = vector.shape_cast %37 : vector<1x6x13xbf16> to vector<6x13xbf16>
    %cst_41 = arith.constant dense<0.000000e+00> : vector<256x13xf32>
    %39 = tpu.matmul %36, %38, %cst_41 {dimension_numbers = #tpu.dot_dimension_numbers<[1], [0], [0], [1], [0, 0, 1, 1], [], []>} : vector<256x6xbf16>, vector<6x13xbf16>, vector<256x13xf32> -> vector<256x13xf32>
    %40 = arith.addf %35, %39 : vector<256x13xf32>
    %41 = vector.extract_strided_slice %30 {offsets = [64, 0], sizes = [256, 6], strides = [1, 1]} : vector<320x6xbf16> to vector<256x6xbf16>
    %c7 = arith.constant 7 : index
    %c0_42 = arith.constant 0 : index
    %c0_43 = arith.constant 0 : index
    %42 = vector.load %arg3[%c7, %c0_42, %c0_43] : memref<9x6x13xbf16, #tpu.memory_space<vmem>>, vector<1x6x13xbf16>
    %43 = vector.shape_cast %42 : vector<1x6x13xbf16> to vector<6x13xbf16>
    %cst_44 = arith.constant dense<0.000000e+00> : vector<256x13xf32>
    %44 = tpu.matmul %41, %43, %cst_44 {dimension_numbers = #tpu.dot_dimension_numbers<[1], [0], [0], [1], [0, 0, 1, 1], [], []>} : vector<256x6xbf16>, vector<6x13xbf16>, vector<256x13xf32> -> vector<256x13xf32>
    %45 = arith.addf %40, %44 : vector<256x13xf32>
    %c0_45 = arith.constant 0 : index
    %c4_46 = arith.constant 4 : index
    %c0_47 = arith.constant 0 : index
    %46 = vector.load %arg7[%c0_45, %c4_46, %c0_47] : memref<20x20x6xbf16, #tpu.memory_space<vmem>>, vector<20x16x6xbf16>
    %47 = vector.shape_cast %46 : vector<20x16x6xbf16> to vector<320x6xbf16>
    %48 = vector.extract_strided_slice %47 {offsets = [0, 0], sizes = [256, 6], strides = [1, 1]} : vector<320x6xbf16> to vector<256x6xbf16>
    %c2_48 = arith.constant 2 : index
    %c0_49 = arith.constant 0 : index
    %c0_50 = arith.constant 0 : index
    %49 = vector.load %arg3[%c2_48, %c0_49, %c0_50] : memref<9x6x13xbf16, #tpu.memory_space<vmem>>, vector<1x6x13xbf16>
    %50 = vector.shape_cast %49 : vector<1x6x13xbf16> to vector<6x13xbf16>
    %cst_51 = arith.constant dense<0.000000e+00> : vector<256x13xf32>
    %51 = tpu.matmul %48, %50, %cst_51 {dimension_numbers = #tpu.dot_dimension_numbers<[1], [0], [0], [1], [0, 0, 1, 1], [], []>} : vector<256x6xbf16>, vector<6x13xbf16>, vector<256x13xf32> -> vector<256x13xf32>
    %52 = arith.addf %45, %51 : vector<256x13xf32>
    %53 = vector.extract_strided_slice %47 {offsets = [32, 0], sizes = [256, 6], strides = [1, 1]} : vector<320x6xbf16> to vector<256x6xbf16>
    %c5 = arith.constant 5 : index
    %c0_52 = arith.constant 0 : index
    %c0_53 = arith.constant 0 : index
    %54 = vector.load %arg3[%c5, %c0_52, %c0_53] : memref<9x6x13xbf16, #tpu.memory_space<vmem>>, vector<1x6x13xbf16>
    %55 = vector.shape_cast %54 : vector<1x6x13xbf16> to vector<6x13xbf16>
    %cst_54 = arith.constant dense<0.000000e+00> : vector<256x13xf32>
    %56 = tpu.matmul %53, %55, %cst_54 {dimension_numbers = #tpu.dot_dimension_numbers<[1], [0], [0], [1], [0, 0, 1, 1], [], []>} : vector<256x6xbf16>, vector<6x13xbf16>, vector<256x13xf32> -> vector<256x13xf32>
    %57 = arith.addf %52, %56 : vector<256x13xf32>
    %58 = vector.extract_strided_slice %47 {offsets = [64, 0], sizes = [256, 6], strides = [1, 1]} : vector<320x6xbf16> to vector<256x6xbf16>
    %c8 = arith.constant 8 : index
    %c0_55 = arith.constant 0 : index
    %c0_56 = arith.constant 0 : index
    %59 = vector.load %arg3[%c8, %c0_55, %c0_56] : memref<9x6x13xbf16, #tpu.memory_space<vmem>>, vector<1x6x13xbf16>
    %60 = vector.shape_cast %59 : vector<1x6x13xbf16> to vector<6x13xbf16>
    %cst_57 = arith.constant dense<0.000000e+00> : vector<256x13xf32>
    %61 = tpu.matmul %58, %60, %cst_57 {dimension_numbers = #tpu.dot_dimension_numbers<[1], [0], [0], [1], [0, 0, 1, 1], [], []>} : vector<256x6xbf16>, vector<6x13xbf16>, vector<256x13xf32> -> vector<256x13xf32>
    %62 = arith.addf %57, %61 : vector<256x13xf32>
    %c0_58 = arith.constant 0 : index
    %c0_59 = arith.constant 0 : index
    %c0_60 = arith.constant 0 : index
    %c0_61 = arith.constant 0 : index
    %63 = vector.load %arg2[%c0_58, %c0_59, %c0_60, %c0_61] : memref<1x16x16x4xbf16, #tpu.memory_space<vmem>>, vector<1x16x16x4xbf16>
    %64 = vector.shape_cast %63 : vector<1x16x16x4xbf16> to vector<16x16x4xbf16>
    %65 = vector.shape_cast %64 : vector<16x16x4xbf16> to vector<256x4xbf16>
    %c0_62 = arith.constant 0 : index
    %c0_63 = arith.constant 0 : index
    %66 = vector.load %arg4[%c0_62, %c0_63] : memref<4x13xbf16, #tpu.memory_space<vmem>>, vector<4x13xbf16>
    %cst_64 = arith.constant dense<0.000000e+00> : vector<256x13xf32>
    %67 = tpu.matmul %65, %66, %cst_64 {dimension_numbers = #tpu.dot_dimension_numbers<[1], [0], [0], [1], [0, 0, 1, 1], [], []>} : vector<256x4xbf16>, vector<4x13xbf16>, vector<256x13xf32> -> vector<256x13xf32>
    %68 = arith.addf %62, %67 : vector<256x13xf32>
    %c0_65 = arith.constant 0 : index
    %c0_66 = arith.constant 0 : index
    %69 = vector.load %arg5[%c0_65, %c0_66] : memref<1x13xf32, #tpu.memory_space<vmem>>, vector<1x13xf32>
    %70 = vector.broadcast %69 : vector<1x13xf32> to vector<256x13xf32>
    %71 = arith.addf %68, %70 : vector<256x13xf32>
    %72 = tpu.iota {dimensions = array<i32: 1>} : vector<1x13xi32>
    %c8_i32 = arith.constant 8 : i32
    %73 = vector.broadcast %c8_i32 : i32 to vector<1x13xi32>
    %74 = arith.cmpi slt, %72, %73 : vector<1x13xi32>
    %cst_67 = arith.constant 0.000000e+00 : f32
    %75 = vector.broadcast %cst_67 : f32 to vector<256x13xf32>
    %76 = arith.maximumf %71, %75 : vector<256x13xf32>
    %77 = vector.shape_cast %74 : vector<1x13xi1> to vector<1x13xi1>
    %78 = vector.broadcast %77 : vector<1x13xi1> to vector<256x13xi1>
    %79 = arith.select %78, %76, %71 : vector<256x13xi1>, vector<256x13xf32>
    %80 = vector.shape_cast %79 : vector<256x13xf32> to vector<16x16x13xf32>
    %c0_68 = arith.constant 0 : index
    %c0_69 = arith.constant 0 : index
    %c0_70 = arith.constant 0 : index
    %c0_71 = arith.constant 0 : index
    %81 = vector.load %arg6[%c0_68, %c0_69, %c0_70, %c0_71] : memref<1x16x16x13xf32, #tpu.memory_space<vmem>>, vector<1x16x16x13xf32>
    %82 = vector.shape_cast %81 : vector<1x16x16x13xf32> to vector<16x16x13xf32>
    %83 = vector.shape_cast %80 : vector<16x16x13xf32> to vector<1x16x16x13xf32>
    tpu.vector_store %arg6[%c0_68, %c0_69, %c0_70, %c0_71], %83 {strides = array<i32>} : memref<1x16x16x13xf32, #tpu.memory_space<vmem>>, vector<1x16x16x13xf32>,
    return
  }
  func.func @transform_0(%arg0: i32) -> (i32, i32, i32, i32) {
    %c0_i32 = arith.constant 0 : i32
    %c0_i32_0 = arith.constant 0 : i32
    %c0_i32_1 = arith.constant 0 : i32
    %c0_i32_2 = arith.constant 0 : i32
    return %arg0, %c0_i32, %c0_i32_0, %c0_i32_1 : i32, i32, i32, i32
  }
  func.func @transform_1(%arg0: i32) -> (i32, i32, i32, i32) {
    %c0_i32 = arith.constant 0 : i32
    %c0_i32_0 = arith.constant 0 : i32
    %c0_i32_1 = arith.constant 0 : i32
    %c0_i32_2 = arith.constant 0 : i32
    return %arg0, %c0_i32, %c0_i32_0, %c0_i32_1 : i32, i32, i32, i32
  }
  func.func @transform_2(%arg0: i32) -> (i32, i32, i32) {
    %c0_i32 = arith.constant 0 : i32
    %c0_i32_0 = arith.constant 0 : i32
    %c0_i32_1 = arith.constant 0 : i32
    %c0_i32_2 = arith.constant 0 : i32
    return %c0_i32, %c0_i32_0, %c0_i32_1 : i32, i32, i32
  }
  func.func @transform_3(%arg0: i32) -> (i32, i32) {
    %c0_i32 = arith.constant 0 : i32
    %c0_i32_0 = arith.constant 0 : i32
    %c0_i32_1 = arith.constant 0 : i32
    return %c0_i32, %c0_i32_0 : i32, i32
  }
  func.func @transform_4(%arg0: i32) -> (i32, i32) {
    %c0_i32 = arith.constant 0 : i32
    %c0_i32_0 = arith.constant 0 : i32
    %c0_i32_1 = arith.constant 0 : i32
    return %c0_i32, %c0_i32_0 : i32, i32
  }
  func.func @transform_5(%arg0: i32) -> (i32, i32, i32, i32) {
    %c0_i32 = arith.constant 0 : i32
    %c0_i32_0 = arith.constant 0 : i32
    %c0_i32_1 = arith.constant 0 : i32
    %c0_i32_2 = arith.constant 0 : i32
    return %arg0, %c0_i32, %c0_i32_0, %c0_i32_1 : i32, i32, i32, i32
  }
}

</mosaic_0001>

<llo_original>
// kernel: tpu_custom_call.1
$region0: #{tpu_custom_call.1}
  #allocation0 [shape = 'u32[]', space=smem, size = 0x4, offset = 0x4, fixed_abs, tag = 'smem constant byte address 0x4 - core index']
  #allocation1 [shape = 'u32[144,128]{1,0:T(1,128)}', space=vmem, size = 0x12000, scoped, tag = 'internal scratch']
  #allocation2 [shape = 'bf16[20,20,6]{2,1,0:T(8,128)(2,1)}', space=vmem, size = 0x1e000, scoped, tag = 'scratch operand']
  %s0 = inlined_call_operand.vmem [shape: bf16[2,16,16,6], index: 0, kind: input, shape index: {}]
  %s1 = inlined_call_operand.vmem [shape: bf16[2,16,16,4], index: 1, kind: input, shape index: {}]
  %s2 = inlined_call_operand.vmem [shape: bf16[9,6,13], index: 2, kind: input, shape index: {}]
  %s3 = inlined_call_operand.vmem [shape: bf16[4,13], index: 3, kind: input, shape index: {}]
  %s4 = inlined_call_operand.vmem [shape: f32[1,13], index: 4, kind: input, shape index: {}]
  %s5 = inlined_call_operand.vmem [shape: f32[2,16,16,13], index: 5, kind: output, shape index: {}]
  %s6 = sld [smem:[#allocation0]]
  $region53: #{tpu_custom_call.1} parent=0
    _
  %s8 = ssub.s32 1, %s6
  %s9 = scalar_select 0, %s8, %s6
  loop: start=0, step=1, limit=4
  $region2: #{tpu_custom_call.1} parent=0 // loop_pre_header
    _
  $region3: #{tpu_custom_call.1} parent=0 // loop_header
    %s11 = sphi 0, %s15
    %p12 = scmp.ge.s32.totalorder %s11, 4
    %s21 = sphi 0, %s23
    %s24 = sphi 0, %s21
    %s25 = sphi 0, %s24
    %s41 = sphi 0, %s25
    %s47 = sphi 0, %s49
    %s50 = sphi 0, %s47
    %s51 = sphi 0, %s50
    %s67 = sphi 0, %s51
    %s71 = sphi 0, %s71
    %s73 = sphi 0, %s71
    %s74 = sphi 0, %s73
    %s88 = sphi 0, %s74
    %s92 = sphi 0, %s92
    %s94 = sphi 0, %s92
    %s95 = sphi 0, %s94
    %s109 = sphi 0, %s95
    %s113 = sphi 0, %s113
    %s115 = sphi 0, %s113
    %s116 = sphi 0, %s115
    %s130 = sphi 0, %s116
    %s136 = sphi 0, %s138
    %s139 = sphi 0, %s136
    %s140 = sphi 0, %s139
    %s156 = sphi 0, %s140
  $region4: #{tpu_custom_call.1} parent=0 // loop_header_branch
    %14 = sbr.rel (%p12) target = $region8
  $region5: #{tpu_custom_call.1} parent=0 // loop_body
    %s16 = ssub.s32 %s11, 1
    %s17 = ssub.s32 %s11, 2
    %s18 = sadd.s32 %s11, 1
    %s19 = ssub.s32 %s11, %s18
    %p20 = scmp.eq.s32.totalorder %s19, 0
    %s22 = sadd.s32 %s21, 1
    %s23 = scalar_select %p20, %s21, %s22
    %p26 = pneg %p20
    %p27 = scmp.eq.s32.totalorder %s11, 1
    %p28 = por %p26, %p27
    %p29 = scmp.ne.s32.totalorder %s21, %s24
    %p30 = scmp.eq.s32.totalorder %s11, 0
    %p31 = por %p29, %p30
    %p32 = scmp.ne.s32.totalorder %s21, %s24
    %p33 = scmp.eq.s32.totalorder %s16, 1
    %p34 = por %p32, %p33
    %p35 = scmp.ne.s32.totalorder %s24, %s25
    %p36 = scmp.eq.s32.totalorder %s16, 0
    %p37 = por %p35, %p36
    %p38 = scmp.ne.s32.totalorder %s24, %s25
    %p39 = scmp.eq.s32.totalorder %s17, 1
    %p40 = por %p38, %p39
    %p42 = scmp.ne.s32.totalorder %s25, %s41
    %p43 = scmp.eq.s32.totalorder %s17, 0
    %p44 = por %p42, %p43
    %s45 = ssub.s32 %s11, %s18
    %p46 = scmp.eq.s32.totalorder %s45, 0
    %s48 = sadd.s32 %s47, 1
    %s49 = scalar_select %p46, %s47, %s48
    %p52 = pneg %p46
    %p53 = scmp.eq.s32.totalorder %s11, 1
    %p54 = por %p52, %p53
    %p55 = scmp.ne.s32.totalorder %s47, %s50
    %p56 = scmp.eq.s32.totalorder %s11, 0
    %p57 = por %p55, %p56
    %p58 = scmp.ne.s32.totalorder %s47, %s50
    %p59 = scmp.eq.s32.totalorder %s16, 1
    %p60 = por %p58, %p59
    %p61 = scmp.ne.s32.totalorder %s50, %s51
    %p62 = scmp.eq.s32.totalorder %s16, 0
    %p63 = por %p61, %p62
    %p64 = scmp.ne.s32.totalorder %s50, %s51
    %p65 = scmp.eq.s32.totalorder %s17, 1
    %p66 = por %p64, %p65
    %p68 = scmp.ne.s32.totalorder %s51, %s67
    %p69 = scmp.eq.s32.totalorder %s17, 0
    %p70 = por %p68, %p69
    %s72 = sadd.s32 %s71, 1
    %p75 = scmp.eq.s32.totalorder %s11, 1
    %p76 = scmp.ne.s32.totalorder %s71, %s73
    %p77 = scmp.eq.s32.totalorder %s11, 0
    %p78 = por %p76, %p77
    %p79 = scmp.ne.s32.totalorder %s71, %s73
    %p80 = scmp.eq.s32.totalorder %s16, 1
    %p81 = por %p79, %p80
    %p82 = scmp.ne.s32.totalorder %s73, %s74
    %p83 = scmp.eq.s32.totalorder %s16, 0
    %p84 = por %p82, %p83
    %p85 = scmp.ne.s32.totalorder %s73, %s74
    %p86 = scmp.eq.s32.totalorder %s17, 1
    %p87 = por %p85, %p86
    %p89 = scmp.ne.s32.totalorder %s74, %s88
    %p90 = scmp.eq.s32.totalorder %s17, 0
    %p91 = por %p89, %p90
    %s93 = sadd.s32 %s92, 1
    %p96 = scmp.eq.s32.totalorder %s11, 1
    %p97 = scmp.ne.s32.totalorder %s92, %s94
    %p98 = scmp.eq.s32.totalorder %s11, 0
    %p99 = por %p97, %p98
    %p100 = scmp.ne.s32.totalorder %s92, %s94
    %p101 = scmp.eq.s32.totalorder %s16, 1
    %p102 = por %p100, %p101
    %p103 = scmp.ne.s32.totalorder %s94, %s95
    %p104 = scmp.eq.s32.totalorder %s16, 0
    %p105 = por %p103, %p104
    %p106 = scmp.ne.s32.totalorder %s94, %s95
    %p107 = scmp.eq.s32.totalorder %s17, 1
    %p108 = por %p106, %p107
    %p110 = scmp.ne.s32.totalorder %s95, %s109
    %p111 = scmp.eq.s32.totalorder %s17, 0
    %p112 = por %p110, %p111
    %s114 = sadd.s32 %s113, 1
    %p117 = scmp.eq.s32.totalorder %s11, 1
    %p118 = scmp.ne.s32.totalorder %s113, %s115
    %p119 = scmp.eq.s32.totalorder %s11, 0
    %p120 = por %p118, %p119
    %p121 = scmp.ne.s32.totalorder %s113, %s115
    %p122 = scmp.eq.s32.totalorder %s16, 1
    %p123 = por %p121, %p122
    %p124 = scmp.ne.s32.totalorder %s115, %s116
    %p125 = scmp.eq.s32.totalorder %s16, 0
    %p126 = por %p124, %p125
    %p127 = scmp.ne.s32.totalorder %s115, %s116
    %p128 = scmp.eq.s32.totalorder %s17, 1
    %p129 = por %p127, %p128
    %p131 = scmp.ne.s32.totalorder %s116, %s130
    %p132 = scmp.eq.s32.totalorder %s17, 0
    %p133 = por %p131, %p132
    %s134 = ssub.s32 %s11, %s18
    %p135 = scmp.eq.s32.totalorder %s134, 0
    %s137 = sadd.s32 %s136, 1
    %s138 = scalar_select %p135, %s136, %s137
    %p141 = pneg %p135
    %p142 = scmp.eq.s32.totalorder %s11, 1
    %p143 = por %p141, %p142
    %p144 = scmp.ne.s32.totalorder %s136, %s139
    %p145 = scmp.eq.s32.totalorder %s11, 0
    %p146 = por %p144, %p145
    %p147 = scmp.ne.s32.totalorder %s136, %s139
    %p148 = scmp.eq.s32.totalorder %s16, 1
    %p149 = por %p147, %p148
    %p150 = scmp.ne.s32.totalorder %s139, %s140
    %p151 = scmp.eq.s32.totalorder %s16, 0
    %p152 = por %p150, %p151
    %p153 = scmp.ne.s32.totalorder %s139, %s140
    %p154 = scmp.eq.s32.totalorder %s17, 1
    %p155 = por %p153, %p154
    %p157 = scmp.ne.s32.totalorder %s140, %s156
    %p158 = scmp.eq.s32.totalorder %s17, 0
    %p159 = por %p157, %p158
    %p160 = scmp.le.s32.totalorder 1, %s11
    %p161 = scmp.lt.s32.totalorder %s11, 3
    %p162 = pnand %p160, %p161
    %p163 = pneg %p162
    // Predicated region
    $region9: #{tpu_custom_call.1} parent=5 // pred_check
      _
    $region10: #{tpu_custom_call.1} parent=5 // pred_check_branch
      %165 = sbr.rel (%p162) target = $region12
    $region11: #{tpu_custom_call.1} parent=5 // pred_region
      %s166 = ssub.s32 %s11, 1
      // Predicated region
      $region13: #{tpu_custom_call.1} parent=11 // pred_check
        %p167 = pneg %p84
      $region14: #{tpu_custom_call.1} parent=11 // pred_check_branch
        %169 = sbr.rel (%p167) target = $region16
      $region15: #{tpu_custom_call.1} parent=11 // pred_region
        _
      $region16: #{tpu_custom_call.1} parent=11 // pred_fallthru
        _
      // Predicated region
      $region17: #{tpu_custom_call.1} parent=11 // pred_check
        %p170 = pneg %p105
      $region18: #{tpu_custom_call.1} parent=11 // pred_check_branch
        %172 = sbr.rel (%p170) target = $region20
      $region19: #{tpu_custom_call.1} parent=11 // pred_region
        _
      $region20: #{tpu_custom_call.1} parent=11 // pred_fallthru
        _
      // Predicated region
      $region21: #{tpu_custom_call.1} parent=11 // pred_check
        %p173 = pneg %p126
      $region22: #{tpu_custom_call.1} parent=11 // pred_check_branch
        %175 = sbr.rel (%p173) target = $region24
      $region23: #{tpu_custom_call.1} parent=11 // pred_region
        _
      $region24: #{tpu_custom_call.1} parent=11 // pred_fallthru
        _
    $region12: #{tpu_custom_call.1} parent=5 // pred_fallthru
      _
    %p176 = scmp.lt.s32.totalorder %s11, 2
    // Predicated region
    $region25: #{tpu_custom_call.1} parent=5 // pred_check
      %p177 = pneg %p176
    $region26: #{tpu_custom_call.1} parent=5 // pred_check_branch
      %179 = sbr.rel (%p177) target = $region28
    $region27: #{tpu_custom_call.1} parent=5 // pred_region
      // Predicated region
      $region29: #{tpu_custom_call.1} parent=27 // pred_check
        %p180 = pneg %p31
      $region30: #{tpu_custom_call.1} parent=27 // pred_check_branch
        %182 = sbr.rel (%p180) target = $region32
      $region31: #{tpu_custom_call.1} parent=27 // pred_region
        %p183 = scmp.lt.s32.totalorder %s11, 1
        %s184 = scalar_select %p183, %s11, 1
        %s185 = smul.addr %s184, 32
        %s186 = smul.addr %s185, 4
        %s187 = scalar_lea.vmem %s0, %s186
      $region32: #{tpu_custom_call.1} parent=27 // pred_fallthru
        _
      // Predicated region
      $region33: #{tpu_custom_call.1} parent=27 // pred_check
        %p188 = pneg %p57
      $region34: #{tpu_custom_call.1} parent=27 // pred_check_branch
        %190 = sbr.rel (%p188) target = $region36
      $region35: #{tpu_custom_call.1} parent=27 // pred_region
        %p191 = scmp.lt.s32.totalorder %s11, 1
        %s192 = scalar_select %p191, %s11, 1
        %s193 = smul.addr %s192, 32
        %s194 = smul.addr %s193, 4
        %s195 = scalar_lea.vmem %s1, %s194
      $region36: #{tpu_custom_call.1} parent=27 // pred_fallthru
        _
    $region28: #{tpu_custom_call.1} parent=5 // pred_fallthru
      _
    %p196 = scmp.le.s32.totalorder 1, %s11
    %p197 = scmp.lt.s32.totalorder %s11, 3
    %p198 = pnand %p196, %p197
    %p199 = pneg %p198
    // Predicated region
    $region37: #{tpu_custom_call.1} parent=5 // pred_check
      _
    $region38: #{tpu_custom_call.1} parent=5 // pred_check_branch
      %201 = sbr.rel (%p198) target = $region40
    $region39: #{tpu_custom_call.1} parent=5 // pred_region
      %s202 = ssub.s32 %s11, 1
      %p203 = scmp.lt.s32.totalorder %s16, 1
      %s204 = scalar_select %p203, %s16, 1
      %s205 = smul.addr %s204, 32
      %s206 = smul.addr %s205, 4
      %s207 = scalar_lea.vmem %s0, %s206
      %p208 = pneg %p37
      %p209 = pneg %p34
      %p210 = scmp.lt.s32.totalorder %s16, 1
      %s211 = scalar_select %p210, %s16, 1
      %s212 = smul.addr %s211, 32
      %s213 = smul.addr %s212, 4
      %s214 = scalar_lea.vmem %s1, %s213
      %p215 = pneg %p63
      %p216 = pneg %p60
      %p217 = pneg %p84
      %p218 = pneg %p81
      %p219 = pneg %p105
      %p220 = pneg %p102
      %p221 = pneg %p126
      %p222 = pneg %p123
      %p223 = pneg %p152
      %p224 = pneg %p149
      %p225 = scmp.lt.s32.totalorder %s16, 1
      %s226 = scalar_select %p225, %s16, 1
      %s227 = smul.addr %s226, 32
      %s228 = smul.addr %s227, 8
      %s229 = scalar_lea.vmem %s5, %s228
      %p230 = scmp.lt.s32.totalorder %s16, 1
      %s231 = scalar_select %p230, %s16, 1
      %s232 = smul.addr %s231, 32
      %s233 = smul.addr %s232, 4
      %s234 = scalar_lea.vmem %s0, %s233
      %p235 = scmp.lt.s32.totalorder %s16, 1
      %s236 = scalar_select %p235, %s16, 1
      %s237 = smul.addr %s236, 32
      %s238 = smul.addr %s237, 4
      %s239 = scalar_lea.vmem %s1, %s238
      %p240 = scmp.lt.s32.totalorder %s16, 1
      %s241 = scalar_select %p240, %s16, 1
      %s242 = smul.addr %s241, 32
      %s243 = smul.addr %s242, 8
      %s244 = scalar_lea.vmem %s5, %s243
      %vm246 = vcmask 44032
      %247 = vst.msk [vmem:[#allocation2] sm:$0xf] %vm246, 0
      %248 = vst.msk [vmem:[#allocation2 + $0x4] sm:$0xf] %vm246, 0
      %vm249 = vcmask 41984
      %250 = vst.msk [vmem:[#allocation2 + $0x8] sm:$0x3] %vm249, 0
      %251 = vst.msk [vmem:[#allocation2 + $0xc] sm:$0xf] %vm246, 0
      %252 = vst.msk [vmem:[#allocation2 + $0x10] sm:$0xf] %vm246, 0
      %253 = vst.msk [vmem:[#allocation2 + $0x14] sm:$0x3] %vm249, 0
      %s254 = scalar_lea.vmem [#allocation2], 216
      %255 = vst.msk [vmem:[%s254] sm:$0xf] %vm246, 0
      %256 = vst.msk [vmem:[%s254 + $0x4] sm:$0xf] %vm246, 0
      %257 = vst.msk [vmem:[%s254 + $0x8] sm:$0x3] %vm249, 0
      %258 = vst.msk [vmem:[%s254 + $0xc] sm:$0xf] %vm246, 0
      %259 = vst.msk [vmem:[%s254 + $0x10] sm:$0xf] %vm246, 0
      %260 = vst.msk [vmem:[%s254 + $0x14] sm:$0x3] %vm249, 0
      %s261 = scalar_lea.vmem [#allocation2], 24
      %vm262 = vcmask 40960
      %263 = vst.msk [vmem:[%s261] sm:$0x1] %vm262, 0
      %264 = vst.msk [vmem:[%s261 + $0xc] sm:$0x1] %vm262, 0
      %265 = vst.msk [vmem:[%s261 + $0x18] sm:$0x1] %vm262, 0
      %266 = vst.msk [vmem:[%s261 + $0x24] sm:$0x1] %vm262, 0
      %267 = vst.msk [vmem:[%s261 + $0x30] sm:$0x1] %vm262, 0
      %268 = vst.msk [vmem:[%s261 + $0x3c] sm:$0x1] %vm262, 0
      %269 = vst.msk [vmem:[%s261 + $0x48] sm:$0x1] %vm262, 0
      %270 = vst.msk [vmem:[%s261 + $0x54] sm:$0x1] %vm262, 0
      %271 = vst.msk [vmem:[%s261 + $0x60] sm:$0x1] %vm262, 0
      %272 = vst.msk [vmem:[%s261 + $0x6c] sm:$0x1] %vm262, 0
      %273 = vst.msk [vmem:[%s261 + $0x78] sm:$0x1] %vm262, 0
      %274 = vst.msk [vmem:[%s261 + $0x84] sm:$0x1] %vm262, 0
      %275 = vst.msk [vmem:[%s261 + $0x90] sm:$0x1] %vm262, 0
      %276 = vst.msk [vmem:[%s261 + $0x9c] sm:$0x1] %vm262, 0
      %277 = vst.msk [vmem:[%s261 + $0xa8] sm:$0x1] %vm262, 0
      %278 = vst.msk [vmem:[%s261 + $0xb4] sm:$0x1] %vm262, 0
      %vm279 = vcmask 41985
      %280 = vst.msk [vmem:[%s261 + $0x8] sm:$0x2] %vm279, 0
      %281 = vst.msk [vmem:[%s261 + $0x14] sm:$0x2] %vm279, 0
      %282 = vst.msk [vmem:[%s261 + $0x20] sm:$0x2] %vm279, 0
      %283 = vst.msk [vmem:[%s261 + $0x2c] sm:$0x2] %vm279, 0
      %284 = vst.msk [vmem:[%s261 + $0x38] sm:$0x2] %vm279, 0
      %285 = vst.msk [vmem:[%s261 + $0x44] sm:$0x2] %vm279, 0
      %286 = vst.msk [vmem:[%s261 + $0x50] sm:$0x2] %vm279, 0
      %287 = vst.msk [vmem:[%s261 + $0x5c] sm:$0x2] %vm279, 0
      %288 = vst.msk [vmem:[%s261 + $0x68] sm:$0x2] %vm279, 0
      %289 = vst.msk [vmem:[%s261 + $0x74] sm:$0x2] %vm279, 0
      %290 = vst.msk [vmem:[%s261 + $0x80] sm:$0x2] %vm279, 0
      %291 = vst.msk [vmem:[%s261 + $0x8c] sm:$0x2] %vm279, 0
      %292 = vst.msk [vmem:[%s261 + $0x98] sm:$0x2] %vm279, 0
      %293 = vst.msk [vmem:[%s261 + $0xa4] sm:$0x2] %vm279, 0
      %294 = vst.msk [vmem:[%s261 + $0xb0] sm:$0x2] %vm279, 0
      %295 = vst.msk [vmem:[%s261 + $0xbc] sm:$0x2] %vm279, 0
      %v296 = vld [vmem:[%s234] sm:$0xf]
      %v297 = vld [vmem:[%s234 + $0x4] sm:$0xf]
      %v298 = vld [vmem:[%s234 + $0x8] sm:$0xf]
      %v299 = vld [vmem:[%s234 + $0xc] sm:$0xf]
      %v300 = vld [vmem:[%s234 + $0x10] sm:$0xf]
      %v301 = vld [vmem:[%s234 + $0x14] sm:$0xf]
      %v302 = vld [vmem:[%s234 + $0x18] sm:$0xf]
      %v303 = vld [vmem:[%s234 + $0x1c] sm:$0xf]
      %v304 = vld [vmem:[%s234 + $0x20] sm:$0xf]
      %v305 = vld [vmem:[%s234 + $0x24] sm:$0xf]
      %v306 = vld [vmem:[%s234 + $0x28] sm:$0xf]
      %v307 = vld [vmem:[%s234 + $0x2c] sm:$0xf]
      %v308 = vld [vmem:[%s234 + $0x30] sm:$0xf]
      %v309 = vld [vmem:[%s234 + $0x34] sm:$0xf]
      %v310 = vld [vmem:[%s234 + $0x38] sm:$0xf]
      %v311 = vld [vmem:[%s234 + $0x3c] sm:$0xf]
      %v312 = vld [vmem:[%s234 + $0x40] sm:$0xf]
      %v313 = vld [vmem:[%s234 + $0x44] sm:$0xf]
      %v314 = vld [vmem:[%s234 + $0x48] sm:$0xf]
      %v315 = vld [vmem:[%s234 + $0x4c] sm:$0xf]
      %v316 = vld [vmem:[%s234 + $0x50] sm:$0xf]
      %v317 = vld [vmem:[%s234 + $0x54] sm:$0xf]
      %v318 = vld [vmem:[%s234 + $0x58] sm:$0xf]
      %v319 = vld [vmem:[%s234 + $0x5c] sm:$0xf]
      %v320 = vld [vmem:[%s234 + $0x60] sm:$0xf]
      %v321 = vld [vmem:[%s234 + $0x64] sm:$0xf]
      %v322 = vld [vmem:[%s234 + $0x68] sm:$0xf]
      %v323 = vld [vmem:[%s234 + $0x6c] sm:$0xf]
      %v324 = vld [vmem:[%s234 + $0x70] sm:$0xf]
      %v325 = vld [vmem:[%s234 + $0x74] sm:$0xf]
      %v326 = vld [vmem:[%s234 + $0x78] sm:$0xf]
      %v327 = vld [vmem:[%s234 + $0x7c] sm:$0xf]
      %vm360 = vcmask 1040384
      %vm361 = vcmask 1044484
      %vm362 = vmor %vm360, %vm361
      %v363 = vrot.slane %v296, 7
      %v364 = vrot.slane %v363, 4
      %v365 = vrot.slane %v297, 7
      %v366 = vsel %vm362, %v364, %v365
      %v367 = vrot.slane %v365, 4
      %v368 = vrot.slane %v298, 7
      %v369 = vrot.slane %v368, 4
      %v370 = vrot.slane %v299, 7
      %v371 = vsel %vm362, %v369, %v370
      %v372 = vrot.slane %v370, 4
      %v373 = vrot.slane %v300, 7
      %v374 = vrot.slane %v373, 4
      %v375 = vrot.slane %v301, 7
      %v376 = vsel %vm362, %v374, %v375
      %v377 = vrot.slane %v375, 4
      %v378 = vrot.slane %v302, 7
      %v379 = vrot.slane %v378, 4
      %v380 = vrot.slane %v303, 7
      %v381 = vsel %vm362, %v379, %v380
      %v382 = vrot.slane %v380, 4
      %v383 = vrot.slane %v304, 7
      %v384 = vrot.slane %v383, 4
      %v385 = vrot.slane %v305, 7
      %v386 = vsel %vm362, %v384, %v385
      %v387 = vrot.slane %v385, 4
      %v388 = vrot.slane %v306, 7
      %v389 = vrot.slane %v388, 4
      %v390 = vrot.slane %v307, 7
      %v391 = vsel %vm362, %v389, %v390
      %v392 = vrot.slane %v390, 4
      %v393 = vrot.slane %v308, 7
      %v394 = vrot.slane %v393, 4
      %v395 = vrot.slane %v309, 7
      %v396 = vsel %vm362, %v394, %v395
      %v397 = vrot.slane %v395, 4
      %v398 = vrot.slane %v310, 7
      %v399 = vrot.slane %v398, 4
      %v400 = vrot.slane %v311, 7
      %v401 = vsel %vm362, %v399, %v400
      %v402 = vrot.slane %v400, 4
      %v403 = vrot.slane %v312, 7
      %v404 = vrot.slane %v403, 4
      %v405 = vrot.slane %v313, 7
      %v406 = vsel %vm362, %v404, %v405
      %v407 = vrot.slane %v405, 4
      %v408 = vrot.slane %v314, 7
      %v409 = vrot.slane %v408, 4
      %v410 = vrot.slane %v315, 7
      %v411 = vsel %vm362, %v409, %v410
      %v412 = vrot.slane %v410, 4
      %v413 = vrot.slane %v316, 7
      %v414 = vrot.slane %v413, 4
      %v415 = vrot.slane %v317, 7
      %v416 = vsel %vm362, %v414, %v415
      %v417 = vrot.slane %v415, 4
      %v418 = vrot.slane %v318, 7
      %v419 = vrot.slane %v418, 4
      %v420 = vrot.slane %v319, 7
      %v421 = vsel %vm362, %v419, %v420
      %v422 = vrot.slane %v420, 4
      %v423 = vrot.slane %v320, 7
      %v424 = vrot.slane %v423, 4
      %v425 = vrot.slane %v321, 7
      %v426 = vsel %vm362, %v424, %v425
      %v427 = vrot.slane %v425, 4
      %v428 = vrot.slane %v322, 7
      %v429 = vrot.slane %v428, 4
      %v430 = vrot.slane %v323, 7
      %v431 = vsel %vm362, %v429, %v430
      %v432 = vrot.slane %v430, 4
      %v433 = vrot.slane %v324, 7
      %v434 = vrot.slane %v433, 4
      %v435 = vrot.slane %v325, 7
      %v436 = vsel %vm362, %v434, %v435
      %v437 = vrot.slane %v435, 4
      %v438 = vrot.slane %v326, 7
      %v439 = vrot.slane %v438, 4
      %v440 = vrot.slane %v327, 7
      %v441 = vsel %vm362, %v439, %v440
      %v442 = vrot.slane %v440, 4
      %vm491 = vcmask 44033
      %492 = vst.msk [vmem:[%s261] sm:$0xe] %vm491, %v363
      %493 = vst.msk [vmem:[%s261 + $0x4] sm:$0xf] %vm246, %v366
      %494 = vst.msk [vmem:[%s261 + $0x8] sm:$0x1] %vm262, %v367
      %495 = vst.msk [vmem:[%s261 + $0xc] sm:$0xe] %vm491, %v368
      %496 = vst.msk [vmem:[%s261 + $0x10] sm:$0xf] %vm246, %v371
      %497 = vst.msk [vmem:[%s261 + $0x14] sm:$0x1] %vm262, %v372
      %498 = vst.msk [vmem:[%s261 + $0x18] sm:$0xe] %vm491, %v373
      %499 = vst.msk [vmem:[%s261 + $0x1c] sm:$0xf] %vm246, %v376
      %500 = vst.msk [vmem:[%s261 + $0x20] sm:$0x1] %vm262, %v377
      %501 = vst.msk [vmem:[%s261 + $0x24] sm:$0xe] %vm491, %v378
      %502 = vst.msk [vmem:[%s261 + $0x28] sm:$0xf] %vm246, %v381
      %503 = vst.msk [vmem:[%s261 + $0x2c] sm:$0x1] %vm262, %v382
      %504 = vst.msk [vmem:[%s261 + $0x30] sm:$0xe] %vm491, %v383
      %505 = vst.msk [vmem:[%s261 + $0x34] sm:$0xf] %vm246, %v386
      %506 = vst.msk [vmem:[%s261 + $0x38] sm:$0x1] %vm262, %v387
      %507 = vst.msk [vmem:[%s261 + $0x3c] sm:$0xe] %vm491, %v388
      %508 = vst.msk [vmem:[%s261 + $0x40] sm:$0xf] %vm246, %v391
      %509 = vst.msk [vmem:[%s261 + $0x44] sm:$0x1] %vm262, %v392
      %510 = vst.msk [vmem:[%s261 + $0x48] sm:$0xe] %vm491, %v393
      %511 = vst.msk [vmem:[%s261 + $0x4c] sm:$0xf] %vm246, %v396
      %512 = vst.msk [vmem:[%s261 + $0x50] sm:$0x1] %vm262, %v397
      %513 = vst.msk [vmem:[%s261 + $0x54] sm:$0xe] %vm491, %v398
      %514 = vst.msk [vmem:[%s261 + $0x58] sm:$0xf] %vm246, %v401
      %515 = vst.msk [vmem:[%s261 + $0x5c] sm:$0x1] %vm262, %v402
      %516 = vst.msk [vmem:[%s261 + $0x60] sm:$0xe] %vm491, %v403
      %517 = vst.msk [vmem:[%s261 + $0x64] sm:$0xf] %vm246, %v406
      %518 = vst.msk [vmem:[%s261 + $0x68] sm:$0x1] %vm262, %v407
      %519 = vst.msk [vmem:[%s261 + $0x6c] sm:$0xe] %vm491, %v408
      %520 = vst.msk [vmem:[%s261 + $0x70] sm:$0xf] %vm246, %v411
      %521 = vst.msk [vmem:[%s261 + $0x74] sm:$0x1] %vm262, %v412
      %522 = vst.msk [vmem:[%s261 + $0x78] sm:$0xe] %vm491, %v413
      %523 = vst.msk [vmem:[%s261 + $0x7c] sm:$0xf] %vm246, %v416
      %524 = vst.msk [vmem:[%s261 + $0x80] sm:$0x1] %vm262, %v417
      %525 = vst.msk [vmem:[%s261 + $0x84] sm:$0xe] %vm491, %v418
      %526 = vst.msk [vmem:[%s261 + $0x88] sm:$0xf] %vm246, %v421
      %527 = vst.msk [vmem:[%s261 + $0x8c] sm:$0x1] %vm262, %v422
      %528 = vst.msk [vmem:[%s261 + $0x90] sm:$0xe] %vm491, %v423
      %529 = vst.msk [vmem:[%s261 + $0x94] sm:$0xf] %vm246, %v426
      %530 = vst.msk [vmem:[%s261 + $0x98] sm:$0x1] %vm262, %v427
      %531 = vst.msk [vmem:[%s261 + $0x9c] sm:$0xe] %vm491, %v428
      %532 = vst.msk [vmem:[%s261 + $0xa0] sm:$0xf] %vm246, %v431
      %533 = vst.msk [vmem:[%s261 + $0xa4] sm:$0x1] %vm262, %v432
      %534 = vst.msk [vmem:[%s261 + $0xa8] sm:$0xe] %vm491, %v433
      %535 = vst.msk [vmem:[%s261 + $0xac] sm:$0xf] %vm246, %v436
      %536 = vst.msk [vmem:[%s261 + $0xb0] sm:$0x1] %vm262, %v437
      %537 = vst.msk [vmem:[%s261 + $0xb4] sm:$0xe] %vm491, %v438
      %538 = vst.msk [vmem:[%s261 + $0xb8] sm:$0xf] %vm246, %v441
      %539 = vst.msk [vmem:[%s261 + $0xbc] sm:$0x1] %vm262, %v442
      %v540 = vld [vmem:[#allocation2] sm:$0xf]
      %v541 = vld [vmem:[#allocation2 + $0x4] sm:$0xf]
      %v542 = vld [vmem:[#allocation2 + $0xc] sm:$0xf]
      %v543 = vld [vmem:[#allocation2 + $0x10] sm:$0xf]
      %v544 = vld [vmem:[#allocation2 + $0x18] sm:$0xf]
      %v545 = vld [vmem:[#allocation2 + $0x1c] sm:$0xf]
      %v546 = vld [vmem:[#allocation2 + $0x24] sm:$0xf]
      %v547 = vld [vmem:[#allocation2 + $0x28] sm:$0xf]
      %v548 = vld [vmem:[#allocation2 + $0x30] sm:$0xf]
      %v549 = vld [vmem:[#allocation2 + $0x34] sm:$0xf]
      %v550 = vld [vmem:[#allocation2 + $0x3c] sm:$0xf]
      %v551 = vld [vmem:[#allocation2 + $0x40] sm:$0xf]
      %v552 = vld [vmem:[#allocation2 + $0x48] sm:$0xf]
      %v553 = vld [vmem:[#allocation2 + $0x4c] sm:$0xf]
      %v554 = vld [vmem:[#allocation2 + $0x54] sm:$0xf]
      %v555 = vld [vmem:[#allocation2 + $0x58] sm:$0xf]
      %v556 = vld [vmem:[#allocation2 + $0x60] sm:$0xf]
      %v557 = vld [vmem:[#allocation2 + $0x64] sm:$0xf]
      %v558 = vld [vmem:[#allocation2 + $0x6c] sm:$0xf]
      %v559 = vld [vmem:[#allocation2 + $0x70] sm:$0xf]
      %v560 = vld [vmem:[#allocation2 + $0x78] sm:$0xf]
      %v561 = vld [vmem:[#allocation2 + $0x7c] sm:$0xf]
      %v562 = vld [vmem:[#allocation2 + $0x84] sm:$0xf]
      %v563 = vld [vmem:[#allocation2 + $0x88] sm:$0xf]
      %v564 = vld [vmem:[#allocation2 + $0x90] sm:$0xf]
      %v565 = vld [vmem:[#allocation2 + $0x94] sm:$0xf]
      %v566 = vld [vmem:[#allocation2 + $0x9c] sm:$0xf]
      %v567 = vld [vmem:[#allocation2 + $0xa0] sm:$0xf]
      %v568 = vld [vmem:[#allocation2 + $0xa8] sm:$0xf]
      %v569 = vld [vmem:[#allocation2 + $0xac] sm:$0xf]
      %v570 = vld [vmem:[#allocation2 + $0xb4] sm:$0xf]
      %v571 = vld [vmem:[#allocation2 + $0xb8] sm:$0xf]
      %v572 = vld [vmem:[#allocation2 + $0xc0] sm:$0xf]
      %v573 = vld [vmem:[#allocation2 + $0xc4] sm:$0xf]
      %v574 = vld [vmem:[#allocation2 + $0xcc] sm:$0xf]
      %v575 = vld [vmem:[#allocation2 + $0xd0] sm:$0xf]
      %v576 = vld [vmem:[#allocation2 + $0xd8] sm:$0xf]
      %v577 = vld [vmem:[#allocation2 + $0xdc] sm:$0xf]
      %v578 = vld [vmem:[#allocation2 + $0xe4] sm:$0xf]
      %v579 = vld [vmem:[#allocation2 + $0xe8] sm:$0xf]
      %v580 = vld [vmem:[%s2] sm:$0x7]
      %s581 = scalar_lea.vmem %s2, 12
      %v582 = vld [vmem:[%s581] sm:$0x7]
      %v615 = vunpack.c.l.b16 %v544
      %v616 = vunpack.c.l.b16 %v545
      %v617 = vunpack.c.l.b16 %v546
      %v618 = vunpack.c.l.b16 %v547
      %v619 = vunpack.c.l.b16 %v548
      %v620 = vunpack.c.l.b16 %v549
      %v621 = vunpack.c.l.b16 %v550
      %v622 = vunpack.c.l.b16 %v551
      %v623 = vunpack.c.l.b16 %v552
      %v624 = vunpack.c.l.b16 %v553
      %v625 = vunpack.c.l.b16 %v554
      %v626 = vunpack.c.l.b16 %v555
      %v627 = vunpack.c.l.b16 %v556
      %v628 = vunpack.c.l.b16 %v557
      %v629 = vunpack.c.l.b16 %v558
      %v630 = vunpack.c.l.b16 %v559
      %v631 = vunpack.c.l.b16 %v560
      %v632 = vunpack.c.l.b16 %v561
      %v633 = vunpack.c.l.b16 %v562
      %v634 = vunpack.c.l.b16 %v563
      %v635 = vunpack.c.l.b16 %v564
      %v636 = vunpack.c.l.b16 %v565
      %v637 = vunpack.c.l.b16 %v566
      %v638 = vunpack.c.l.b16 %v567
      %v639 = vunpack.c.l.b16 %v568
      %v640 = vunpack.c.l.b16 %v569
      %v641 = vunpack.c.l.b16 %v570
      %v642 = vunpack.c.l.b16 %v571
      %v643 = vunpack.c.l.b16 %v572
      %v644 = vunpack.c.l.b16 %v573
      %v645 = vunpack.c.l.b16 %v574
      %v646 = vunpack.c.l.b16 %v575
      %v647 = vpack.c.b16 %v616, %v615
      %v648 = vpack.c.b16 %v618, %v617
      %v649 = vpack.c.b16 %v620, %v619
      %v650 = vpack.c.b16 %v622, %v621
      %v651 = vpack.c.b16 %v624, %v623
      %v652 = vpack.c.b16 %v626, %v625
      %v653 = vpack.c.b16 %v628, %v627
      %v654 = vpack.c.b16 %v630, %v629
      %v655 = vpack.c.b16 %v632, %v631
      %v656 = vpack.c.b16 %v634, %v633
      %v657 = vpack.c.b16 %v636, %v635
      %v658 = vpack.c.b16 %v638, %v637
      %v659 = vpack.c.b16 %v640, %v639
      %v660 = vpack.c.b16 %v642, %v641
      %v661 = vpack.c.b16 %v644, %v643
      %v662 = vpack.c.b16 %v646, %v645
      %vm663 = vcmask 48128
      %v665 = vsel %vm663, %v647, 0
      %v668 = vsel %vm663, %v648, 0
      %v671 = vsel %vm663, %v649, 0
      %v674 = vsel %vm663, %v650, 0
      %v677 = vsel %vm663, %v651, 0
      %v680 = vsel %vm663, %v652, 0
      %v683 = vsel %vm663, %v653, 0
      %v686 = vsel %vm663, %v654, 0
      %v689 = vsel %vm663, %v655, 0
      %v692 = vsel %vm663, %v656, 0
      %v695 = vsel %vm663, %v657, 0
      %v698 = vsel %vm663, %v658, 0
      %v701 = vsel %vm663, %v659, 0
      %v704 = vsel %vm663, %v660, 0
      %v707 = vsel %vm663, %v661, 0
      %v710 = vsel %vm663, %v662, 0
      %vm712 = vcmask 1042432
      %v714 = vsel %vm712, %v582, 0
      %716 = vmatprep.subr.bf16.mxu0 0
      %717 = vmatpush1.bf16.msra.mxu0 %v714
      %718 = vmatprep.subr.bf16.mxu0 0
      %719 = vmatpush1.bf16.msra.mxu0 0
      %720 = vmatprep.subr.bf16.mxu0 0
      %721 = vmatpush1.bf16.msra.mxu0 0
      %722 = vmatprep.subr.bf16.mxu0 0
      %723 = vmatpush1.bf16.msra.mxu0 0
      %724 = vmatprep.subr.bf16.mxu0 0
      %725 = vmatpush1.bf16.msra.mxu0 0
      %726 = vmatprep.subr.bf16.mxu0 0
      %727 = vmatpush1.bf16.msra.mxu0 0
      %728 = vmatprep.subr.bf16.mxu0 0
      %729 = vmatpush1.bf16.msra.mxu0 0
      %730 = vmatprep.subr.bf16.mxu0 0
      %731 = vmatpush1.bf16.msra.mxu0 0
      %732 = vmatprep.subr.bf16.mxu0 0
      %733 = vmatpush1.bf16.msra.mxu0 0
      %734 = vmatprep.subr.bf16.mxu0 0
      %735 = vmatpush1.bf16.msra.mxu0 0
      %736 = vmatprep.subr.bf16.mxu0 0
      %737 = vmatpush1.bf16.msra.mxu0 0
      %738 = vmatprep.subr.bf16.mxu0 0
      %739 = vmatpush1.bf16.msra.mxu0 0
      %740 = vmatprep.subr.bf16.mxu0 0
      %741 = vmatpush1.bf16.msra.mxu0 0
      %742 = vmatprep.subr.bf16.mxu0 0
      %743 = vmatpush1.bf16.msra.mxu0 0
      %744 = vmatprep.subr.bf16.mxu0 0
      %745 = vmatpush1.bf16.msra.mxu0 0
      %746 = vmatprep.subr.bf16.mxu0 0
      %747 = vmatpush1.bf16.msra.mxu0 0
      %748 = vmatprep.mubr.bf16.mxu0 0
      %749 = vmatmul.mubr.bf16.gmra.mrb[0].mxu0 %v665
      %v750 = vpop.f32.mrb[0].mxu0
      %v751 = vadd.f32 0.0, %v750
      %v752 = vpop.f32.mrb[0].mxu0
      %v753 = vpop.f32.mrb[0].mxu0
      %v754 = vadd.f32 0.0, %v753
      %v755 = vpop.f32.mrb[0].mxu0
      %756 = vmatprep.mubr.bf16.mxu0 0
      %757 = vmatmul.mubr.bf16.gmra.mrb[0].mxu0 %v668
      %v758 = vpop.f32.mrb[0].mxu0
      %v759 = vadd.f32 0.0, %v758
      %v760 = vpop.f32.mrb[0].mxu0
      %v761 = vpop.f32.mrb[0].mxu0
      %v762 = vadd.f32 0.0, %v761
      %v763 = vpop.f32.mrb[0].mxu0
      %764 = vmatprep.mubr.bf16.mxu0 0
      %765 = vmatmul.mubr.bf16.gmra.mrb[0].mxu0 %v671
      %v766 = vpop.f32.mrb[0].mxu0
      %v767 = vadd.f32 0.0, %v766
      %v768 = vpop.f32.mrb[0].mxu0
      %v769 = vpop.f32.mrb[0].mxu0
      %v770 = vadd.f32 0.0, %v769
      %v771 = vpop.f32.mrb[0].mxu0
      %772 = vmatprep.mubr.bf16.mxu0 0
      %773 = vmatmul.mubr.bf16.gmra.mrb[0].mxu0 %v674
      %v774 = vpop.f32.mrb[0].mxu0
      %v775 = vadd.f32 0.0, %v774
      %v776 = vpop.f32.mrb[0].mxu0
      %v777 = vpop.f32.mrb[0].mxu0
      %v778 = vadd.f32 0.0, %v777
      %v779 = vpop.f32.mrb[0].mxu0
      %780 = vmatprep.mubr.bf16.mxu0 0
      %781 = vmatmul.mubr.bf16.gmra.mrb[0].mxu0 %v677
      %v782 = vpop.f32.mrb[0].mxu0
      %v783 = vadd.f32 0.0, %v782
      %v784 = vpop.f32.mrb[0].mxu0
      %v785 = vpop.f32.mrb[0].mxu0
      %v786 = vadd.f32 0.0, %v785
      %v787 = vpop.f32.mrb[0].mxu0
      %788 = vmatprep.mubr.bf16.mxu0 0
      %789 = vmatmul.mubr.bf16.gmra.mrb[0].mxu0 %v680
      %v790 = vpop.f32.mrb[0].mxu0
      %v791 = vadd.f32 0.0, %v790
      %v792 = vpop.f32.mrb[0].mxu0
      %v793 = vpop.f32.mrb[0].mxu0
      %v794 = vadd.f32 0.0, %v793
      %v795 = vpop.f32.mrb[0].mxu0
      %796 = vmatprep.mubr.bf16.mxu0 0
      %797 = vmatmul.mubr.bf16.gmra.mrb[0].mxu0 %v683
      %v798 = vpop.f32.mrb[0].mxu0
      %v799 = vadd.f32 0.0, %v798
      %v800 = vpop.f32.mrb[0].mxu0
      %v801 = vpop.f32.mrb[0].mxu0
      %v802 = vadd.f32 0.0, %v801
      %v803 = vpop.f32.mrb[0].mxu0
      %804 = vmatprep.mubr.bf16.mxu0 0
      %805 = vmatmul.mubr.bf16.gmra.mrb[0].mxu0 %v686
      %v806 = vpop.f32.mrb[0].mxu0
      %v807 = vadd.f32 0.0, %v806
      %v808 = vpop.f32.mrb[0].mxu0
      %v809 = vpop.f32.mrb[0].mxu0
      %v810 = vadd.f32 0.0, %v809
      %v811 = vpop.f32.mrb[0].mxu0
      %812 = vmatprep.mubr.bf16.mxu0 0
      %813 = vmatmul.mubr.bf16.gmra.mrb[0].mxu0 %v689
      %v814 = vpop.f32.mrb[0].mxu0
      %v815 = vadd.f32 0.0, %v814
      %v816 = vpop.f32.mrb[0].mxu0
      %v817 = vpop.f32.mrb[0].mxu0
      %v818 = vadd.f32 0.0, %v817
      %v819 = vpop.f32.mrb[0].mxu0
      %820 = vmatprep.mubr.bf16.mxu0 0
      %821 = vmatmul.mubr.bf16.gmra.mrb[0].mxu0 %v692
      %v822 = vpop.f32.mrb[0].mxu0
      %v823 = vadd.f32 0.0, %v822
      %v824 = vpop.f32.mrb[0].mxu0
      %v825 = vpop.f32.mrb[0].mxu0
      %v826 = vadd.f32 0.0, %v825
      %v827 = vpop.f32.mrb[0].mxu0
      %828 = vmatprep.mubr.bf16.mxu0 0
      %829 = vmatmul.mubr.bf16.gmra.mrb[0].mxu0 %v695
      %v830 = vpop.f32.mrb[0].mxu0
      %v831 = vadd.f32 0.0, %v830
      %v832 = vpop.f32.mrb[0].mxu0
      %v833 = vpop.f32.mrb[0].mxu0
      %v834 = vadd.f32 0.0, %v833
      %v835 = vpop.f32.mrb[0].mxu0
      %836 = vmatprep.mubr.bf16.mxu0 0
      %837 = vmatmul.mubr.bf16.gmra.mrb[0].mxu0 %v698
      %v838 = vpop.f32.mrb[0].mxu0
      %v839 = vadd.f32 0.0, %v838
      %v840 = vpop.f32.mrb[0].mxu0
      %v841 = vpop.f32.mrb[0].mxu0
      %v842 = vadd.f32 0.0, %v841
      %v843 = vpop.f32.mrb[0].mxu0
      %844 = vmatprep.mubr.bf16.mxu0 0
      %845 = vmatmul.mubr.bf16.gmra.mrb[0].mxu0 %v701
      %v846 = vpop.f32.mrb[0].mxu0
      %v847 = vadd.f32 0.0, %v846
      %v848 = vpop.f32.mrb[0].mxu0
      %v849 = vpop.f32.mrb[0].mxu0
      %v850 = vadd.f32 0.0, %v849
      %v851 = vpop.f32.mrb[0].mxu0
      %852 = vmatprep.mubr.bf16.mxu0 0
      %853 = vmatmul.mubr.bf16.gmra.mrb[0].mxu0 %v704
      %v854 = vpop.f32.mrb[0].mxu0
      %v855 = vadd.f32 0.0, %v854
      %v856 = vpop.f32.mrb[0].mxu0
      %v857 = vpop.f32.mrb[0].mxu0
      %v858 = vadd.f32 0.0, %v857
      %v859 = vpop.f32.mrb[0].mxu0
      %860 = vmatprep.mubr.bf16.mxu0 0
      %861 = vmatmul.mubr.bf16.gmra.mrb[0].mxu0 %v707
      %v862 = vpop.f32.mrb[0].mxu0
      %v863 = vadd.f32 0.0, %v862
      %v864 = vpop.f32.mrb[0].mxu0
      %v865 = vpop.f32.mrb[0].mxu0
      %v866 = vadd.f32 0.0, %v865
      %v867 = vpop.f32.mrb[0].mxu0
      %868 = vmatprep.mubr.bf16.mxu0 0
      %869 = vmatmul.mubr.bf16.gmra.mrb[0].mxu0 %v710
      %v870 = vpop.f32.mrb[0].mxu0
      %v871 = vadd.f32 0.0, %v870
      %v872 = vpop.f32.mrb[0].mxu0
      %v873 = vpop.f32.mrb[0].mxu0
      %v874 = vadd.f32 0.0, %v873
      %v875 = vpop.f32.mrb[0].mxu0
      %876 = vdwg.mxu0
      %v881 = vunpack.c.l.b16 %v540
      %v882 = vunpack.c.l.b16 %v541
      %v883 = vunpack.c.l.b16 %v542
      %v884 = vunpack.c.l.b16 %v543
      %v885 = vpack.c.b16 %v882, %v881
      %v886 = vpack.c.b16 %v884, %v883
      %v888 = vsel %vm663, %v885, 0
      %v891 = vsel %vm663, %v886, 0
      %v894 = vsel %vm712, %v580, 0
      %896 = vmatprep.subr.bf16.mxu0 0
      %897 = vmatpush1.bf16.msra.mxu0 %v894
      %898 = vmatprep.subr.bf16.mxu0 0
      %899 = vmatpush1.bf16.msra.mxu0 0
      %900 = vmatprep.subr.bf16.mxu0 0
      %901 = vmatpush1.bf16.msra.mxu0 0
      %902 = vmatprep.subr.bf16.mxu0 0
      %903 = vmatpush1.bf16.msra.mxu0 0
      %904 = vmatprep.subr.bf16.mxu0 0
      %905 = vmatpush1.bf16.msra.mxu0 0
      %906 = vmatprep.subr.bf16.mxu0 0
      %907 = vmatpush1.bf16.msra.mxu0 0
      %908 = vmatprep.subr.bf16.mxu0 0
      %909 = vmatpush1.bf16.msra.mxu0 0
      %910 = vmatprep.subr.bf16.mxu0 0
      %911 = vmatpush1.bf16.msra.mxu0 0
      %912 = vmatprep.subr.bf16.mxu0 0
      %913 = vmatpush1.bf16.msra.mxu0 0
      %914 = vmatprep.subr.bf16.mxu0 0
      %915 = vmatpush1.bf16.msra.mxu0 0
      %916 = vmatprep.subr.bf16.mxu0 0
      %917 = vmatpush1.bf16.msra.mxu0 0
      %918 = vmatprep.subr.bf16.mxu0 0
      %919 = vmatpush1.bf16.msra.mxu0 0
      %920 = vmatprep.subr.bf16.mxu0 0
      %921 = vmatpush1.bf16.msra.mxu0 0
      %922 = vmatprep.subr.bf16.mxu0 0
      %923 = vmatpush1.bf16.msra.mxu0 0
      %924 = vmatprep.subr.bf16.mxu0 0
      %925 = vmatpush1.bf16.msra.mxu0 0
      %926 = vmatprep.subr.bf16.mxu0 0
      %927 = vmatpush1.bf16.msra.mxu0 0
      %928 = vmatprep.mubr.bf16.mxu0 0
      %929 = vmatmul.mubr.bf16.gmra.mrb[0].mxu0 %v888
      %v930 = vpop.f32.mrb[0].mxu0
      %v931 = vadd.f32 %v751, %v930
      %v932 = vpop.f32.mrb[0].mxu0
      %v933 = vpop.f32.mrb[0].mxu0
      %v934 = vadd.f32 %v754, %v933
      %v935 = vpop.f32.mrb[0].mxu0
      %936 = vmatprep.mubr.bf16.mxu0 0
      %937 = vmatmul.mubr.bf16.gmra.mrb[0].mxu0 %v891
      %v938 = vpop.f32.mrb[0].mxu0
      %v939 = vadd.f32 %v759, %v938
      %v940 = vpop.f32.mrb[0].mxu0
      %v941 = vpop.f32.mrb[0].mxu0
      %v942 = vadd.f32 %v762, %v941
      %v943 = vpop.f32.mrb[0].mxu0
      %944 = vmatprep.mubr.bf16.mxu0 0
      %945 = vmatmul.mubr.bf16.gmra.mrb[0].mxu0 %v665
      %v946 = vpop.f32.mrb[0].mxu0
      %v947 = vadd.f32 %v767, %v946
      %v948 = vpop.f32.mrb[0].mxu0
      %v949 = vpop.f32.mrb[0].mxu0
      %v950 = vadd.f32 %v770, %v949
      %v951 = vpop.f32.mrb[0].mxu0
      %952 = vmatprep.mubr.bf16.mxu0 0
      %953 = vmatmul.mubr.bf16.gmra.mrb[0].mxu0 %v668
      %v954 = vpop.f32.mrb[0].mxu0
      %v955 = vadd.f32 %v775, %v954
      %v956 = vpop.f32.mrb[0].mxu0
      %v957 = vpop.f32.mrb[0].mxu0
      %v958 = vadd.f32 %v778, %v957
      %v959 = vpop.f32.mrb[0].mxu0
      %960 = vmatprep.mubr.bf16.mxu0 0
      %961 = vmatmul.mubr.bf16.gmra.mrb[0].mxu0 %v671
      %v962 = vpop.f32.mrb[0].mxu0
      %v963 = vadd.f32 %v783, %v962
      %v964 = vpop.f32.mrb[0].mxu0
      %v965 = vpop.f32.mrb[0].mxu0
      %v966 = vadd.f32 %v786, %v965
      %v967 = vpop.f32.mrb[0].mxu0
      %968 = vmatprep.mubr.bf16.mxu0 0
      %969 = vmatmul.mubr.bf16.gmra.mrb[0].mxu0 %v674
      %v970 = vpop.f32.mrb[0].mxu0
      %v971 = vadd.f32 %v791, %v970
      %v972 = vpop.f32.mrb[0].mxu0
      %v973 = vpop.f32.mrb[0].mxu0
      %v974 = vadd.f32 %v794, %v973
      %v975 = vpop.f32.mrb[0].mxu0
      %976 = vmatprep.mubr.bf16.mxu0 0
      %977 = vmatmul.mubr.bf16.gmra.mrb[0].mxu0 %v677
      %v978 = vpop.f32.mrb[0].mxu0
      %v979 = vadd.f32 %v799, %v978
      %v980 = vpop.f32.mrb[0].mxu0
      %v981 = vpop.f32.mrb[0].mxu0
      %v982 = vadd.f32 %v802, %v981
      %v983 = vpop.f32.mrb[0].mxu0
      %984 = vmatprep.mubr.bf16.mxu0 0
      %985 = vmatmul.mubr.bf16.gmra.mrb[0].mxu0 %v680
      %v986 = vpop.f32.mrb[0].mxu0
      %v987 = vadd.f32 %v807, %v986
      %v988 = vpop.f32.mrb[0].mxu0
      %v989 = vpop.f32.mrb[0].mxu0
      %v990 = vadd.f32 %v810, %v989
      %v991 = vpop.f32.mrb[0].mxu0
      %992 = vmatprep.mubr.bf16.mxu0 0
      %993 = vmatmul.mubr.bf16.gmra.mrb[0].mxu0 %v683
      %v994 = vpop.f32.mrb[0].mxu0
      %v995 = vadd.f32 %v815, %v994
      %v996 = vpop.f32.mrb[0].mxu0
      %v997 = vpop.f32.mrb[0].mxu0
      %v998 = vadd.f32 %v818, %v997
      %v999 = vpop.f32.mrb[0].mxu0
      %1000 = vmatprep.mubr.bf16.mxu0 0
      %1001 = vmatmul.mubr.bf16.gmra.mrb[0].mxu0 %v686
      %v1002 = vpop.f32.mrb[0].mxu0
      %v1003 = vadd.f32 %v823, %v1002
      %v1004 = vpop.f32.mrb[0].mxu0
      %v1005 = vpop.f32.mrb[0].mxu0
      %v1006 = vadd.f32 %v826, %v1005
      %v1007 = vpop.f32.mrb[0].mxu0
      %1008 = vmatprep.mubr.bf16.mxu0 0
      %1009 = vmatmul.mubr.bf16.gmra.mrb[0].mxu0 %v689
      %v1010 = vpop.f32.mrb[0].mxu0
      %v1011 = vadd.f32 %v831, %v1010
      %v1012 = vpop.f32.mrb[0].mxu0
      %v1013 = vpop.f32.mrb[0].mxu0
      %v1014 = vadd.f32 %v834, %v1013
      %v1015 = vpop.f32.mrb[0].mxu0
      %1016 = vmatprep.mubr.bf16.mxu0 0
      %1017 = vmatmul.mubr.bf16.gmra.mrb[0].mxu0 %v692
      %v1018 = vpop.f32.mrb[0].mxu0
      %v1019 = vadd.f32 %v839, %v1018
      %v1020 = vpop.f32.mrb[0].mxu0
      %v1021 = vpop.f32.mrb[0].mxu0
      %v1022 = vadd.f32 %v842, %v1021
      %v1023 = vpop.f32.mrb[0].mxu0
      %1024 = vmatprep.mubr.bf16.mxu0 0
      %1025 = vmatmul.mubr.bf16.gmra.mrb[0].mxu0 %v695
      %v1026 = vpop.f32.mrb[0].mxu0
      %v1027 = vadd.f32 %v847, %v1026
      %v1028 = vpop.f32.mrb[0].mxu0
      %v1029 = vpop.f32.mrb[0].mxu0
      %v1030 = vadd.f32 %v850, %v1029
      %v1031 = vpop.f32.mrb[0].mxu0
      %1032 = vmatprep.mubr.bf16.mxu0 0
      %1033 = vmatmul.mubr.bf16.gmra.mrb[0].mxu0 %v698
      %v1034 = vpop.f32.mrb[0].mxu0
      %v1035 = vadd.f32 %v855, %v1034
      %v1036 = vpop.f32.mrb[0].mxu0
      %v1037 = vpop.f32.mrb[0].mxu0
      %v1038 = vadd.f32 %v858, %v1037
      %v1039 = vpop.f32.mrb[0].mxu0
      %1040 = vmatprep.mubr.bf16.mxu0 0
      %1041 = vmatmul.mubr.bf16.gmra.mrb[0].mxu0 %v701
      %v1042 = vpop.f32.mrb[0].mxu0
      %v1043 = vadd.f32 %v863, %v1042
      %v1044 = vpop.f32.mrb[0].mxu0
      %v1045 = vpop.f32.mrb[0].mxu0
      %v1046 = vadd.f32 %v866, %v1045
      %v1047 = vpop.f32.mrb[0].mxu0
      %1048 = vmatprep.mubr.bf16.mxu0 0
      %1049 = vmatmul.mubr.bf16.gmra.mrb[0].mxu0 %v704
      %v1050 = vpop.f32.mrb[0].mxu0
      %v1051 = vadd.f32 %v871, %v1050
      %v1052 = vpop.f32.mrb[0].mxu0
      %v1053 = vpop.f32.mrb[0].mxu0
      %v1054 = vadd.f32 %v874, %v1053
      %v1055 = vpop.f32.mrb[0].mxu0
      %1056 = vdwg.mxu0
      %s1057 = scalar_lea.vmem %s2, 24
      %v1058 = vld [vmem:[%s1057] sm:$0x7]
      %v1063 = vunpack.c.l.b16 %v576
      %v1064 = vunpack.c.l.b16 %v577
      %v1065 = vunpack.c.l.b16 %v578
      %v1066 = vunpack.c.l.b16 %v579
      %v1067 = vpack.c.b16 %v1064, %v1063
      %v1068 = vpack.c.b16 %v1066, %v1065
      %v1070 = vsel %vm663, %v1067, 0
      %v1073 = vsel %vm663, %v1068, 0
      %v1076 = vsel %vm712, %v1058, 0
      %1078 = vmatprep.subr.bf16.mxu0 0
      %1079 = vmatpush1.bf16.msra.mxu0 %v1076
      %1080 = vmatprep.subr.bf16.mxu0 0
      %1081 = vmatpush1.bf16.msra.mxu0 0
      %1082 = vmatprep.subr.bf16.mxu0 0
      %1083 = vmatpush1.bf16.msra.mxu0 0
      %1084 = vmatprep.subr.bf16.mxu0 0
      %1085 = vmatpush1.bf16.msra.mxu0 0
      %1086 = vmatprep.subr.bf16.mxu0 0
      %1087 = vmatpush1.bf16.msra.mxu0 0
      %1088 = vmatprep.subr.bf16.mxu0 0
      %1089 = vmatpush1.bf16.msra.mxu0 0
      %1090 = vmatprep.subr.bf16.mxu0 0
      %1091 = vmatpush1.bf16.msra.mxu0 0
      %1092 = vmatprep.subr.bf16.mxu0 0
      %1093 = vmatpush1.bf16.msra.mxu0 0
      %1094 = vmatprep.subr.bf16.mxu0 0
      %1095 = vmatpush1.bf16.msra.mxu0 0
      %1096 = vmatprep.subr.bf16.mxu0 0
      %1097 = vmatpush1.bf16.msra.mxu0 0
      %1098 = vmatprep.subr.bf16.mxu0 0
      %1099 = vmatpush1.bf16.msra.mxu0 0
      %1100 = vmatprep.subr.bf16.mxu0 0
      %1101 = vmatpush1.bf16.msra.mxu0 0
      %1102 = vmatprep.subr.bf16.mxu0 0
      %1103 = vmatpush1.bf16.msra.mxu0 0
      %1104 = vmatprep.subr.bf16.mxu0 0
      %1105 = vmatpush1.bf16.msra.mxu0 0
      %1106 = vmatprep.subr.bf16.mxu0 0
      %1107 = vmatpush1.bf16.msra.mxu0 0
      %1108 = vmatprep.subr.bf16.mxu0 0
      %1109 = vmatpush1.bf16.msra.mxu0 0
      %1110 = vmatprep.mubr.bf16.mxu0 0
      %1111 = vmatmul.mubr.bf16.gmra.mrb[0].mxu0 %v671
      %v1112 = vpop.f32.mrb[0].mxu0
      %v1113 = vadd.f32 0.0, %v1112
      %v1114 = vpop.f32.mrb[0].mxu0
      %v1115 = vpop.f32.mrb[0].mxu0
      %v1116 = vadd.f32 0.0, %v1115
      %v1117 = vpop.f32.mrb[0].mxu0
      %1118 = vmatprep.mubr.bf16.mxu0 0
      %1119 = vmatmul.mubr.bf16.gmra.mrb[0].mxu0 %v674
      %v1120 = vpop.f32.mrb[0].mxu0
      %v1121 = vadd.f32 0.0, %v1120
      %v1122 = vpop.f32.mrb[0].mxu0
      %v1123 = vpop.f32.mrb[0].mxu0
      %v1124 = vadd.f32 0.0, %v1123
      %v1125 = vpop.f32.mrb[0].mxu0
      %1126 = vmatprep.mubr.bf16.mxu0 0
      %1127 = vmatmul.mubr.bf16.gmra.mrb[0].mxu0 %v677
      %v1128 = vpop.f32.mrb[0].mxu0
      %v1129 = vadd.f32 0.0, %v1128
      %v1130 = vpop.f32.mrb[0].mxu0
      %v1131 = vpop.f32.mrb[0].mxu0
      %v1132 = vadd.f32 0.0, %v1131
      %v1133 = vpop.f32.mrb[0].mxu0
      %1134 = vmatprep.mubr.bf16.mxu0 0
      %1135 = vmatmul.mubr.bf16.gmra.mrb[0].mxu0 %v680
      %v1136 = vpop.f32.mrb[0].mxu0
      %v1137 = vadd.f32 0.0, %v1136
      %v1138 = vpop.f32.mrb[0].mxu0
      %v1139 = vpop.f32.mrb[0].mxu0
      %v1140 = vadd.f32 0.0, %v1139
      %v1141 = vpop.f32.mrb[0].mxu0
      %1142 = vmatprep.mubr.bf16.mxu0 0
      %1143 = vmatmul.mubr.bf16.gmra.mrb[0].mxu0 %v683
      %v1144 = vpop.f32.mrb[0].mxu0
      %v1145 = vadd.f32 0.0, %v1144
      %v1146 = vpop.f32.mrb[0].mxu0
      %v1147 = vpop.f32.mrb[0].mxu0
      %v1148 = vadd.f32 0.0, %v1147
      %v1149 = vpop.f32.mrb[0].mxu0
      %1150 = vmatprep.mubr.bf16.mxu0 0
      %1151 = vmatmul.mubr.bf16.gmra.mrb[0].mxu0 %v686
      %v1152 = vpop.f32.mrb[0].mxu0
      %v1153 = vadd.f32 0.0, %v1152
      %v1154 = vpop.f32.mrb[0].mxu0
      %v1155 = vpop.f32.mrb[0].mxu0
      %v1156 = vadd.f32 0.0, %v1155
      %v1157 = vpop.f32.mrb[0].mxu0
      %1158 = vmatprep.mubr.bf16.mxu0 0
      %1159 = vmatmul.mubr.bf16.gmra.mrb[0].mxu0 %v689
      %v1160 = vpop.f32.mrb[0].mxu0
      %v1161 = vadd.f32 0.0, %v1160
      %v1162 = vpop.f32.mrb[0].mxu0
      %v1163 = vpop.f32.mrb[0].mxu0
      %v1164 = vadd.f32 0.0, %v1163
      %v1165 = vpop.f32.mrb[0].mxu0
      %1166 = vmatprep.mubr.bf16.mxu0 0
      %1167 = vmatmul.mubr.bf16.gmra.mrb[0].mxu0 %v692
      %v1168 = vpop.f32.mrb[0].mxu0
      %v1169 = vadd.f32 0.0, %v1168
      %v1170 = vpop.f32.mrb[0].mxu0
      %v1171 = vpop.f32.mrb[0].mxu0
      %v1172 = vadd.f32 0.0, %v1171
      %v1173 = vpop.f32.mrb[0].mxu0
      %1174 = vmatprep.mubr.bf16.mxu0 0
      %1175 = vmatmul.mubr.bf16.gmra.mrb[0].mxu0 %v695
      %v1176 = vpop.f32.mrb[0].mxu0
      %v1177 = vadd.f32 0.0, %v1176
      %v1178 = vpop.f32.mrb[0].mxu0
      %v1179 = vpop.f32.mrb[0].mxu0
      %v1180 = vadd.f32 0.0, %v1179
      %v1181 = vpop.f32.mrb[0].mxu0
      %1182 = vmatprep.mubr.bf16.mxu0 0
      %1183 = vmatmul.mubr.bf16.gmra.mrb[0].mxu0 %v698
      %v1184 = vpop.f32.mrb[0].mxu0
      %v1185 = vadd.f32 0.0, %v1184
      %v1186 = vpop.f32.mrb[0].mxu0
      %v1187 = vpop.f32.mrb[0].mxu0
      %v1188 = vadd.f32 0.0, %v1187
      %v1189 = vpop.f32.mrb[0].mxu0
      %1190 = vmatprep.mubr.bf16.mxu0 0
      %1191 = vmatmul.mubr.bf16.gmra.mrb[0].mxu0 %v701
      %v1192 = vpop.f32.mrb[0].mxu0
      %v1193 = vadd.f32 0.0, %v1192
      %v1194 = vpop.f32.mrb[0].mxu0
      %v1195 = vpop.f32.mrb[0].mxu0
      %v1196 = vadd.f32 0.0, %v1195
      %v1197 = vpop.f32.mrb[0].mxu0
      %1198 = vmatprep.mubr.bf16.mxu0 0
      %1199 = vmatmul.mubr.bf16.gmra.mrb[0].mxu0 %v704
      %v1200 = vpop.f32.mrb[0].mxu0
      %v1201 = vadd.f32 0.0, %v1200
      %v1202 = vpop.f32.mrb[0].mxu0
      %v1203 = vpop.f32.mrb[0].mxu0
      %v1204 = vadd.f32 0.0, %v1203
      %v1205 = vpop.f32.mrb[0].mxu0
      %1206 = vmatprep.mubr.bf16.mxu0 0
      %1207 = vmatmul.mubr.bf16.gmra.mrb[0].mxu0 %v707
      %v1208 = vpop.f32.mrb[0].mxu0
      %v1209 = vadd.f32 0.0, %v1208
      %v1210 = vpop.f32.mrb[0].mxu0
      %v1211 = vpop.f32.mrb[0].mxu0
      %v1212 = vadd.f32 0.0, %v1211
      %v1213 = vpop.f32.mrb[0].mxu0
      %1214 = vmatprep.mubr.bf16.mxu0 0
      %1215 = vmatmul.mubr.bf16.gmra.mrb[0].mxu0 %v710
      %v1216 = vpop.f32.mrb[0].mxu0
      %v1217 = vadd.f32 0.0, %v1216
      %v1218 = vpop.f32.mrb[0].mxu0
      %v1219 = vpop.f32.mrb[0].mxu0
      %v1220 = vadd.f32 0.0, %v1219
      %v1221 = vpop.f32.mrb[0].mxu0
      %1222 = vmatprep.mubr.bf16.mxu0 0
      %1223 = vmatmul.mubr.bf16.gmra.mrb[0].mxu0 %v1070
      %v1224 = vpop.f32.mrb[0].mxu0
      %v1225 = vadd.f32 0.0, %v1224
      %v1226 = vpop.f32.mrb[0].mxu0
      %v1227 = vpop.f32.mrb[0].mxu0
      %v1228 = vadd.f32 0.0, %v1227
      %v1229 = vpop.f32.mrb[0].mxu0
      %1230 = vmatprep.mubr.bf16.mxu0 0
      %1231 = vmatmul.mubr.bf16.gmra.mrb[0].mxu0 %v1073
      %v1232 = vpop.f32.mrb[0].mxu0
      %v1233 = vadd.f32 0.0, %v1232
      %v1234 = vpop.f32.mrb[0].mxu0
      %v1235 = vpop.f32.mrb[0].mxu0
      %v1236 = vadd.f32 0.0, %v1235
      %v1237 = vpop.f32.mrb[0].mxu0
      %1238 = vdwg.mxu0
      %v1239 = vadd.f32 %v931, %v1113
      %v1240 = vadd.f32 %v934, %v1116
      %v1241 = vadd.f32 %v939, %v1121
      %v1242 = vadd.f32 %v942, %v1124
      %v1243 = vadd.f32 %v947, %v1129
      %v1244 = vadd.f32 %v950, %v1132
      %v1245 = vadd.f32 %v955, %v1137
      %v1246 = vadd.f32 %v958, %v1140
      %v1247 = vadd.f32 %v963, %v1145
      %v1248 = vadd.f32 %v966, %v1148
      %v1249 = vadd.f32 %v971, %v1153
      %v1250 = vadd.f32 %v974, %v1156
      %v1251 = vadd.f32 %v979, %v1161
      %v1252 = vadd.f32 %v982, %v1164
      %v1253 = vadd.f32 %v987, %v1169
      %v1254 = vadd.f32 %v990, %v1172
      %v1255 = vadd.f32 %v995, %v1177
      %v1256 = vadd.f32 %v998, %v1180
      %v1257 = vadd.f32 %v1003, %v1185
      %v1258 = vadd.f32 %v1006, %v1188
      %v1259 = vadd.f32 %v1011, %v1193
      %v1260 = vadd.f32 %v1014, %v1196
      %v1261 = vadd.f32 %v1019, %v1201
      %v1262 = vadd.f32 %v1022, %v1204
      %v1263 = vadd.f32 %v1027, %v1209
      %v1264 = vadd.f32 %v1030, %v1212
      %v1265 = vadd.f32 %v1035, %v1217
      %v1266 = vadd.f32 %v1038, %v1220
      %v1267 = vadd.f32 %v1043, %v1225
      %v1268 = vadd.f32 %v1046, %v1228
      %v1269 = vadd.f32 %v1051, %v1233
      %v1270 = vadd.f32 %v1054, %v1236
      %v1271 = vld [vmem:[#allocation2] sm:$0xe]
      %v1272 = vld [vmem:[#allocation2 + $0x4] sm:$0xf]
      %v1273 = vld [vmem:[#allocation2 + $0x8] sm:$0x1]
      %v1274 = vld [vmem:[#allocation2 + $0xc] sm:$0xe]
      %v1275 = vld [vmem:[#allocation2 + $0x10] sm:$0xf]
      %v1276 = vld [vmem:[#allocation2 + $0x14] sm:$0x1]
      %v1277 = vld [vmem:[#allocation2 + $0x18] sm:$0xe]
      %v1278 = vld [vmem:[#allocation2 + $0x1c] sm:$0xf]
      %v1279 = vld [vmem:[#allocation2 + $0x20] sm:$0x1]
      %v1280 = vld [vmem:[#allocation2 + $0x24] sm:$0xe]
      %v1281 = vld [vmem:[#allocation2 + $0x28] sm:$0xf]
      %v1282 = vld [vmem:[#allocation2 + $0x2c] sm:$0x1]
      %v1283 = vld [vmem:[#allocation2 + $0x30] sm:$0xe]
      %v1284 = vld [vmem:[#allocation2 + $0x34] sm:$0xf]
      %v1285 = vld [vmem:[#allocation2 + $0x38] sm:$0x1]
      %v1286 = vld [vmem:[#allocation2 + $0x3c] sm:$0xe]
      %v1287 = vld [vmem:[#allocation2 + $0x40] sm:$0xf]
      %v1288 = vld [vmem:[#allocation2 + $0x44] sm:$0x1]
      %v1289 = vld [vmem:[#allocation2 + $0x48] sm:$0xe]
      %v1290 = vld [vmem:[#allocation2 + $0x4c] sm:$0xf]
      %v1291 = vld [vmem:[#allocation2 + $0x50] sm:$0x1]
      %v1292 = vld [vmem:[#allocation2 + $0x54] sm:$0xe]
      %v1293 = vld [vmem:[#allocation2 + $0x58] sm:$0xf]
      %v1294 = vld [vmem:[#allocation2 + $0x5c] sm:$0x1]
      %v1295 = vld [vmem:[#allocation2 + $0x60] sm:$0xe]
      %v1296 = vld [vmem:[#allocation2 + $0x64] sm:$0xf]
      %v1297 = vld [vmem:[#allocation2 + $0x68] sm:$0x1]
      %v1298 = vld [vmem:[#allocation2 + $0x6c] sm:$0xe]
      %v1299 = vld [vmem:[#allocation2 + $0x70] sm:$0xf]
      %v1300 = vld [vmem:[#allocation2 + $0x74] sm:$0x1]
      %v1301 = vld [vmem:[#allocation2 + $0x78] sm:$0xe]
      %v1302 = vld [vmem:[#allocation2 + $0x7c] sm:$0xf]
      %v1303 = vld [vmem:[#allocation2 + $0x80] sm:$0x1]
      %v1304 = vld [vmem:[#allocation2 + $0x84] sm:$0xe]
      %v1305 = vld [vmem:[#allocation2 + $0x88] sm:$0xf]
      %v1306 = vld [vmem:[#allocation2 + $0x8c] sm:$0x1]
      %v1307 = vld [vmem:[#allocation2 + $0x90] sm:$0xe]
      %v1308 = vld [vmem:[#allocation2 + $0x94] sm:$0xf]
      %v1309 = vld [vmem:[#allocation2 + $0x98] sm:$0x1]
      %v1310 = vld [vmem:[#allocation2 + $0x9c] sm:$0xe]
      %v1311 = vld [vmem:[#allocation2 + $0xa0] sm:$0xf]
      %v1312 = vld [vmem:[#allocation2 + $0xa4] sm:$0x1]
      %v1313 = vld [vmem:[#allocation2 + $0xa8] sm:$0xe]
      %v1314 = vld [vmem:[#allocation2 + $0xac] sm:$0xf]
      %v1315 = vld [vmem:[#allocation2 + $0xb0] sm:$0x1]
      %v1316 = vld [vmem:[#allocation2 + $0xb4] sm:$0xe]
      %v1317 = vld [vmem:[#allocation2 + $0xb8] sm:$0xf]
      %v1318 = vld [vmem:[#allocation2 + $0xbc] sm:$0x1]
      %v1319 = vld [vmem:[#allocation2 + $0xc0] sm:$0xe]
      %v1320 = vld [vmem:[#allocation2 + $0xc4] sm:$0xf]
      %v1321 = vld [vmem:[#allocation2 + $0xc8] sm:$0x1]
      %v1322 = vld [vmem:[#allocation2 + $0xcc] sm:$0xe]
      %v1323 = vld [vmem:[#allocation2 + $0xd0] sm:$0xf]
      %v1324 = vld [vmem:[#allocation2 + $0xd4] sm:$0x1]
      %v1325 = vld [vmem:[#allocation2 + $0xd8] sm:$0xe]
      %v1326 = vld [vmem:[#allocation2 + $0xdc] sm:$0xf]
      %v1327 = vld [vmem:[#allocation2 + $0xe0] sm:$0x1]
      %v1328 = vld [vmem:[#allocation2 + $0xe4] sm:$0xe]
      %v1329 = vld [vmem:[#allocation2 + $0xe8] sm:$0xf]
      %v1330 = vld [vmem:[#allocation2 + $0xec] sm:$0x1]
      %vm1391 = vcmask 1042432
      %vm1392 = vcmask 1046532
      %vm1393 = vmor %vm1391, %vm1392
      %v1394 = vrot.slane %v1271, 5
      %v1395 = vrot.slane %v1394, 4
      %v1396 = vrot.slane %v1272, 5
      %v1397 = vsel %vm1393, %v1395, %v1396
      %v1398 = vrot.slane %v1396, 4
      %v1399 = vrot.slane %v1273, 5
      %v1400 = vsel %vm1393, %v1398, %v1399
      %v1401 = vrot.slane %v1274, 5
      %v1402 = vrot.slane %v1401, 4
      %v1403 = vrot.slane %v1275, 5
      %v1404 = vsel %vm1393, %v1402, %v1403
      %v1405 = vrot.slane %v1403, 4
      %v1406 = vrot.slane %v1276, 5
      %v1407 = vsel %vm1393, %v1405, %v1406
      %v1408 = vrot.slane %v1277, 5
      %v1409 = vrot.slane %v1408, 4
      %v1410 = vrot.slane %v1278, 5
      %v1411 = vsel %vm1393, %v1409, %v1410
      %v1412 = vrot.slane %v1410, 4
      %v1413 = vrot.slane %v1279, 5
      %v1414 = vsel %vm1393, %v1412, %v1413
      %v1415 = vrot.slane %v1280, 5
      %v1416 = vrot.slane %v1415, 4
      %v1417 = vrot.slane %v1281, 5
      %v1418 = vsel %vm1393, %v1416, %v1417
      %v1419 = vrot.slane %v1417, 4
      %v1420 = vrot.slane %v1282, 5
      %v1421 = vsel %vm1393, %v1419, %v1420
      %v1422 = vrot.slane %v1283, 5
      %v1423 = vrot.slane %v1422, 4
      %v1424 = vrot.slane %v1284, 5
      %v1425 = vsel %vm1393, %v1423, %v1424
      %v1426 = vrot.slane %v1424, 4
      %v1427 = vrot.slane %v1285, 5
      %v1428 = vsel %vm1393, %v1426, %v1427
      %v1429 = vrot.slane %v1286, 5
      %v1430 = vrot.slane %v1429, 4
      %v1431 = vrot.slane %v1287, 5
      %v1432 = vsel %vm1393, %v1430, %v1431
      %v1433 = vrot.slane %v1431, 4
      %v1434 = vrot.slane %v1288, 5
      %v1435 = vsel %vm1393, %v1433, %v1434
      %v1436 = vrot.slane %v1289, 5
      %v1437 = vrot.slane %v1436, 4
      %v1438 = vrot.slane %v1290, 5
      %v1439 = vsel %vm1393, %v1437, %v1438
      %v1440 = vrot.slane %v1438, 4
      %v1441 = vrot.slane %v1291, 5
      %v1442 = vsel %vm1393, %v1440, %v1441
      %v1443 = vrot.slane %v1292, 5
      %v1444 = vrot.slane %v1443, 4
      %v1445 = vrot.slane %v1293, 5
      %v1446 = vsel %vm1393, %v1444, %v1445
      %v1447 = vrot.slane %v1445, 4
      %v1448 = vrot.slane %v1294, 5
      %v1449 = vsel %vm1393, %v1447, %v1448
      %v1450 = vrot.slane %v1295, 5
      %v1451 = vrot.slane %v1450, 4
      %v1452 = vrot.slane %v1296, 5
      %v1453 = vsel %vm1393, %v1451, %v1452
      %v1454 = vrot.slane %v1452, 4
      %v1455 = vrot.slane %v1297, 5
      %v1456 = vsel %vm1393, %v1454, %v1455
      %v1457 = vrot.slane %v1298, 5
      %v1458 = vrot.slane %v1457, 4
      %v1459 = vrot.slane %v1299, 5
      %v1460 = vsel %vm1393, %v1458, %v1459
      %v1461 = vrot.slane %v1459, 4
      %v1462 = vrot.slane %v1300, 5
      %v1463 = vsel %vm1393, %v1461, %v1462
      %v1464 = vrot.slane %v1301, 5
      %v1465 = vrot.slane %v1464, 4
      %v1466 = vrot.slane %v1302, 5
      %v1467 = vsel %vm1393, %v1465, %v1466
      %v1468 = vrot.slane %v1466, 4
      %v1469 = vrot.slane %v1303, 5
      %v1470 = vsel %vm1393, %v1468, %v1469
      %v1471 = vrot.slane %v1304, 5
      %v1472 = vrot.slane %v1471, 4
      %v1473 = vrot.slane %v1305, 5
      %v1474 = vsel %vm1393, %v1472, %v1473
      %v1475 = vrot.slane %v1473, 4
      %v1476 = vrot.slane %v1306, 5
      %v1477 = vsel %vm1393, %v1475, %v1476
      %v1478 = vrot.slane %v1307, 5
      %v1479 = vrot.slane %v1478, 4
      %v1480 = vrot.slane %v1308, 5
      %v1481 = vsel %vm1393, %v1479, %v1480
      %v1482 = vrot.slane %v1480, 4
      %v1483 = vrot.slane %v1309, 5
      %v1484 = vsel %vm1393, %v1482, %v1483
      %v1485 = vrot.slane %v1310, 5
      %v1486 = vrot.slane %v1485, 4
      %v1487 = vrot.slane %v1311, 5
      %v1488 = vsel %vm1393, %v1486, %v1487
      %v1489 = vrot.slane %v1487, 4
      %v1490 = vrot.slane %v1312, 5
      %v1491 = vsel %vm1393, %v1489, %v1490
      %v1492 = vrot.slane %v1313, 5
      %v1493 = vrot.slane %v1492, 4
      %v1494 = vrot.slane %v1314, 5
      %v1495 = vsel %vm1393, %v1493, %v1494
      %v1496 = vrot.slane %v1494, 4
      %v1497 = vrot.slane %v1315, 5
      %v1498 = vsel %vm1393, %v1496, %v1497
      %v1499 = vrot.slane %v1316, 5
      %v1500 = vrot.slane %v1499, 4
      %v1501 = vrot.slane %v1317, 5
      %v1502 = vsel %vm1393, %v1500, %v1501
      %v1503 = vrot.slane %v1501, 4
      %v1504 = vrot.slane %v1318, 5
      %v1505 = vsel %vm1393, %v1503, %v1504
      %v1506 = vrot.slane %v1319, 5
      %v1507 = vrot.slane %v1506, 4
      %v1508 = vrot.slane %v1320, 5
      %v1509 = vsel %vm1393, %v1507, %v1508
      %v1510 = vrot.slane %v1508, 4
      %v1511 = vrot.slane %v1321, 5
      %v1512 = vsel %vm1393, %v1510, %v1511
      %v1513 = vrot.slane %v1322, 5
      %v1514 = vrot.slane %v1513, 4
      %v1515 = vrot.slane %v1323, 5
      %v1516 = vsel %vm1393, %v1514, %v1515
      %v1517 = vrot.slane %v1515, 4
      %v1518 = vrot.slane %v1324, 5
      %v1519 = vsel %vm1393, %v1517, %v1518
      %v1520 = vrot.slane %v1325, 5
      %v1521 = vrot.slane %v1520, 4
      %v1522 = vrot.slane %v1326, 5
      %v1523 = vsel %vm1393, %v1521, %v1522
      %v1524 = vrot.slane %v1522, 4
      %v1525 = vrot.slane %v1327, 5
      %v1526 = vsel %vm1393, %v1524, %v1525
      %v1527 = vrot.slane %v1328, 5
      %v1528 = vrot.slane %v1527, 4
      %v1529 = vrot.slane %v1329, 5
      %v1530 = vsel %vm1393, %v1528, %v1529
      %v1531 = vrot.slane %v1529, 4
      %v1532 = vrot.slane %v1330, 5
      %v1533 = vsel %vm1393, %v1531, %v1532
      %s1534 = scalar_lea.vmem %s2, 4
      %v1535 = vld [vmem:[%s1534] sm:$0x7]
      %v1536 = vunpack.c.l.b16 %v1397
      %v1537 = vunpack.c.l.b16 %v1400
      %v1538 = vunpack.c.l.b16 %v1404
      %v1539 = vunpack.c.l.b16 %v1407
      %v1540 = vunpack.c.l.b16 %v1411
      %v1541 = vunpack.c.l.b16 %v1414
      %v1542 = vunpack.c.l.b16 %v1418
      %v1543 = vunpack.c.l.b16 %v1421
      %v1544 = vunpack.c.l.b16 %v1425
      %v1545 = vunpack.c.l.b16 %v1428
      %v1546 = vunpack.c.l.b16 %v1432
      %v1547 = vunpack.c.l.b16 %v1435
      %v1548 = vunpack.c.l.b16 %v1439
      %v1549 = vunpack.c.l.b16 %v1442
      %v1550 = vunpack.c.l.b16 %v1446
      %v1551 = vunpack.c.l.b16 %v1449
      %v1552 = vunpack.c.l.b16 %v1453
      %v1553 = vunpack.c.l.b16 %v1456
      %v1554 = vunpack.c.l.b16 %v1460
      %v1555 = vunpack.c.l.b16 %v1463
      %v1556 = vunpack.c.l.b16 %v1467
      %v1557 = vunpack.c.l.b16 %v1470
      %v1558 = vunpack.c.l.b16 %v1474
      %v1559 = vunpack.c.l.b16 %v1477
      %v1560 = vunpack.c.l.b16 %v1481
      %v1561 = vunpack.c.l.b16 %v1484
      %v1562 = vunpack.c.l.b16 %v1488
      %v1563 = vunpack.c.l.b16 %v1491
      %v1564 = vunpack.c.l.b16 %v1495
      %v1565 = vunpack.c.l.b16 %v1498
      %v1566 = vunpack.c.l.b16 %v1502
      %v1567 = vunpack.c.l.b16 %v1505
      %v1568 = vpack.c.b16 %v1537, %v1536
      %v1569 = vpack.c.b16 %v1539, %v1538
      %v1570 = vpack.c.b16 %v1541, %v1540
      %v1571 = vpack.c.b16 %v1543, %v1542
      %v1572 = vpack.c.b16 %v1545, %v1544
      %v1573 = vpack.c.b16 %v1547, %v1546
      %v1574 = vpack.c.b16 %v1549, %v1548
      %v1575 = vpack.c.b16 %v1551, %v1550
      %v1576 = vpack.c.b16 %v1553, %v1552
      %v1577 = vpack.c.b16 %v1555, %v1554
      %v1578 = vpack.c.b16 %v1557, %v1556
      %v1579 = vpack.c.b16 %v1559, %v1558
      %v1580 = vpack.c.b16 %v1561, %v1560
      %v1581 = vpack.c.b16 %v1563, %v1562
      %v1582 = vpack.c.b16 %v1565, %v1564
      %v1583 = vpack.c.b16 %v1567, %v1566
      %v1585 = vsel %vm663, %v1568, 0
      %v1588 = vsel %vm663, %v1569, 0
      %v1591 = vsel %vm663, %v1570, 0
      %v1594 = vsel %vm663, %v1571, 0
      %v1597 = vsel %vm663, %v1572, 0
      %v1600 = vsel %vm663, %v1573, 0
      %v1603 = vsel %vm663, %v1574, 0
      %v1606 = vsel %vm663, %v1575, 0
      %v1609 = vsel %vm663, %v1576, 0
      %v1612 = vsel %vm663, %v1577, 0
      %v1615 = vsel %vm663, %v1578, 0
      %v1618 = vsel %vm663, %v1579, 0
      %v1621 = vsel %vm663, %v1580, 0
      %v1624 = vsel %vm663, %v1581, 0
      %v1627 = vsel %vm663, %v1582, 0
      %v1630 = vsel %vm663, %v1583, 0
      %v1633 = vsel %vm712, %v1535, 0
      %1635 = vmatprep.subr.bf16.mxu0 0
      %1636 = vmatpush1.bf16.msra.mxu0 %v1633
      %1637 = vmatprep.subr.bf16.mxu0 0
      %1638 = vmatpush1.bf16.msra.mxu0 0
      %1639 = vmatprep.subr.bf16.mxu0 0
      %1640 = vmatpush1.bf16.msra.mxu0 0
      %1641 = vmatprep.subr.bf16.mxu0 0
      %1642 = vmatpush1.bf16.msra.mxu0 0
      %1643 = vmatprep.subr.bf16.mxu0 0
      %1644 = vmatpush1.bf16.msra.mxu0 0
      %1645 = vmatprep.subr.bf16.mxu0 0
      %1646 = vmatpush1.bf16.msra.mxu0 0
      %1647 = vmatprep.subr.bf16.mxu0 0
      %1648 = vmatpush1.bf16.msra.mxu0 0
      %1649 = vmatprep.subr.bf16.mxu0 0
      %1650 = vmatpush1.bf16.msra.mxu0 0
      %1651 = vmatprep.subr.bf16.mxu0 0
      %1652 = vmatpush1.bf16.msra.mxu0 0
      %1653 = vmatprep.subr.bf16.mxu0 0
      %1654 = vmatpush1.bf16.msra.mxu0 0
      %1655 = vmatprep.subr.bf16.mxu0 0
      %1656 = vmatpush1.bf16.msra.mxu0 0
      %1657 = vmatprep.subr.bf16.mxu0 0
      %1658 = vmatpush1.bf16.msra.mxu0 0
      %1659 = vmatprep.subr.bf16.mxu0 0
      %1660 = vmatpush1.bf16.msra.mxu0 0
      %1661 = vmatprep.subr.bf16.mxu0 0
      %1662 = vmatpush1.bf16.msra.mxu0 0
      %1663 = vmatprep.subr.bf16.mxu0 0
      %1664 = vmatpush1.bf16.msra.mxu0 0
      %1665 = vmatprep.subr.bf16.mxu0 0
      %1666 = vmatpush1.bf16.msra.mxu0 0
      %1667 = vmatprep.mubr.bf16.mxu0 0
      %1668 = vmatmul.mubr.bf16.gmra.mrb[0].mxu0 %v1585
      %v1669 = vpop.f32.mrb[0].mxu0
      %v1670 = vadd.f32 0.0, %v1669
      %v1671 = vpop.f32.mrb[0].mxu0
      %v1672 = vpop.f32.mrb[0].mxu0
      %v1673 = vadd.f32 0.0, %v1672
      %v1674 = vpop.f32.mrb[0].mxu0
      %1675 = vmatprep.mubr.bf16.mxu0 0
      %1676 = vmatmul.mubr.bf16.gmra.mrb[0].mxu0 %v1588
      %v1677 = vpop.f32.mrb[0].mxu0
      %v1678 = vadd.f32 0.0, %v1677
      %v1679 = vpop.f32.mrb[0].mxu0
      %v1680 = vpop.f32.mrb[0].mxu0
      %v1681 = vadd.f32 0.0, %v1680
      %v1682 = vpop.f32.mrb[0].mxu0
      %1683 = vmatprep.mubr.bf16.mxu0 0
      %1684 = vmatmul.mubr.bf16.gmra.mrb[0].mxu0 %v1591
      %v1685 = vpop.f32.mrb[0].mxu0
      %v1686 = vadd.f32 0.0, %v1685
      %v1687 = vpop.f32.mrb[0].mxu0
      %v1688 = vpop.f32.mrb[0].mxu0
      %v1689 = vadd.f32 0.0, %v1688
      %v1690 = vpop.f32.mrb[0].mxu0
      %1691 = vmatprep.mubr.bf16.mxu0 0
      %1692 = vmatmul.mubr.bf16.gmra.mrb[0].mxu0 %v1594
      %v1693 = vpop.f32.mrb[0].mxu0
      %v1694 = vadd.f32 0.0, %v1693
      %v1695 = vpop.f32.mrb[0].mxu0
      %v1696 = vpop.f32.mrb[0].mxu0
      %v1697 = vadd.f32 0.0, %v1696
      %v1698 = vpop.f32.mrb[0].mxu0
      %1699 = vmatprep.mubr.bf16.mxu0 0
      %1700 = vmatmul.mubr.bf16.gmra.mrb[0].mxu0 %v1597
      %v1701 = vpop.f32.mrb[0].mxu0
      %v1702 = vadd.f32 0.0, %v1701
      %v1703 = vpop.f32.mrb[0].mxu0
      %v1704 = vpop.f32.mrb[0].mxu0
      %v1705 = vadd.f32 0.0, %v1704
      %v1706 = vpop.f32.mrb[0].mxu0
      %1707 = vmatprep.mubr.bf16.mxu0 0
      %1708 = vmatmul.mubr.bf16.gmra.mrb[0].mxu0 %v1600
      %v1709 = vpop.f32.mrb[0].mxu0
      %v1710 = vadd.f32 0.0, %v1709
      %v1711 = vpop.f32.mrb[0].mxu0
      %v1712 = vpop.f32.mrb[0].mxu0
      %v1713 = vadd.f32 0.0, %v1712
      %v1714 = vpop.f32.mrb[0].mxu0
      %1715 = vmatprep.mubr.bf16.mxu0 0
      %1716 = vmatmul.mubr.bf16.gmra.mrb[0].mxu0 %v1603
      %v1717 = vpop.f32.mrb[0].mxu0
      %v1718 = vadd.f32 0.0, %v1717
      %v1719 = vpop.f32.mrb[0].mxu0
      %v1720 = vpop.f32.mrb[0].mxu0
      %v1721 = vadd.f32 0.0, %v1720
      %v1722 = vpop.f32.mrb[0].mxu0
      %1723 = vmatprep.mubr.bf16.mxu0 0
      %1724 = vmatmul.mubr.bf16.gmra.mrb[0].mxu0 %v1606
      %v1725 = vpop.f32.mrb[0].mxu0
      %v1726 = vadd.f32 0.0, %v1725
      %v1727 = vpop.f32.mrb[0].mxu0
      %v1728 = vpop.f32.mrb[0].mxu0
      %v1729 = vadd.f32 0.0, %v1728
      %v1730 = vpop.f32.mrb[0].mxu0
      %1731 = vmatprep.mubr.bf16.mxu0 0
      %1732 = vmatmul.mubr.bf16.gmra.mrb[0].mxu0 %v1609
      %v1733 = vpop.f32.mrb[0].mxu0
      %v1734 = vadd.f32 0.0, %v1733
      %v1735 = vpop.f32.mrb[0].mxu0
      %v1736 = vpop.f32.mrb[0].mxu0
      %v1737 = vadd.f32 0.0, %v1736
      %v1738 = vpop.f32.mrb[0].mxu0
      %1739 = vmatprep.mubr.bf16.mxu0 0
      %1740 = vmatmul.mubr.bf16.gmra.mrb[0].mxu0 %v1612
      %v1741 = vpop.f32.mrb[0].mxu0
      %v1742 = vadd.f32 0.0, %v1741
      %v1743 = vpop.f32.mrb[0].mxu0
      %v1744 = vpop.f32.mrb[0].mxu0
      %v1745 = vadd.f32 0.0, %v1744
      %v1746 = vpop.f32.mrb[0].mxu0
      %1747 = vmatprep.mubr.bf16.mxu0 0
      %1748 = vmatmul.mubr.bf16.gmra.mrb[0].mxu0 %v1615
      %v1749 = vpop.f32.mrb[0].mxu0
      %v1750 = vadd.f32 0.0, %v1749
      %v1751 = vpop.f32.mrb[0].mxu0
      %v1752 = vpop.f32.mrb[0].mxu0
      %v1753 = vadd.f32 0.0, %v1752
      %v1754 = vpop.f32.mrb[0].mxu0
      %1755 = vmatprep.mubr.bf16.mxu0 0
      %1756 = vmatmul.mubr.bf16.gmra.mrb[0].mxu0 %v1618
      %v1757 = vpop.f32.mrb[0].mxu0
      %v1758 = vadd.f32 0.0, %v1757
      %v1759 = vpop.f32.mrb[0].mxu0
      %v1760 = vpop.f32.mrb[0].mxu0
      %v1761 = vadd.f32 0.0, %v1760
      %v1762 = vpop.f32.mrb[0].mxu0
      %1763 = vmatprep.mubr.bf16.mxu0 0
      %1764 = vmatmul.mubr.bf16.gmra.mrb[0].mxu0 %v1621
      %v1765 = vpop.f32.mrb[0].mxu0
      %v1766 = vadd.f32 0.0, %v1765
      %v1767 = vpop.f32.mrb[0].mxu0
      %v1768 = vpop.f32.mrb[0].mxu0
      %v1769 = vadd.f32 0.0, %v1768
      %v1770 = vpop.f32.mrb[0].mxu0
      %1771 = vmatprep.mubr.bf16.mxu0 0
      %1772 = vmatmul.mubr.bf16.gmra.mrb[0].mxu0 %v1624
      %v1773 = vpop.f32.mrb[0].mxu0
      %v1774 = vadd.f32 0.0, %v1773
      %v1775 = vpop.f32.mrb[0].mxu0
      %v1776 = vpop.f32.mrb[0].mxu0
      %v1777 = vadd.f32 0.0, %v1776
      %v1778 = vpop.f32.mrb[0].mxu0
      %1779 = vmatprep.mubr.bf16.mxu0 0
      %1780 = vmatmul.mubr.bf16.gmra.mrb[0].mxu0 %v1627
      %v1781 = vpop.f32.mrb[0].mxu0
      %v1782 = vadd.f32 0.0, %v1781
      %v1783 = vpop.f32.mrb[0].mxu0
      %v1784 = vpop.f32.mrb[0].mxu0
      %v1785 = vadd.f32 0.0, %v1784
      %v1786 = vpop.f32.mrb[0].mxu0
      %1787 = vmatprep.mubr.bf16.mxu0 0
      %1788 = vmatmul.mubr.bf16.gmra.mrb[0].mxu0 %v1630
      %v1789 = vpop.f32.mrb[0].mxu0
      %v1790 = vadd.f32 0.0, %v1789
      %v1791 = vpop.f32.mrb[0].mxu0
      %v1792 = vpop.f32.mrb[0].mxu0
      %v1793 = vadd.f32 0.0, %v1792
      %v1794 = vpop.f32.mrb[0].mxu0
      %1795 = vdwg.mxu0
      %v1796 = vadd.f32 %v1239, %v1670
      %v1797 = vadd.f32 %v1240, %v1673
      %v1798 = vadd.f32 %v1241, %v1678
      %v1799 = vadd.f32 %v1242, %v1681
      %v1800 = vadd.f32 %v1243, %v1686
      %v1801 = vadd.f32 %v1244, %v1689
      %v1802 = vadd.f32 %v1245, %v1694
      %v1803 = vadd.f32 %v1246, %v1697
      %v1804 = vadd.f32 %v1247, %v1702
      %v1805 = vadd.f32 %v1248, %v1705
      %v1806 = vadd.f32 %v1249, %v1710
      %v1807 = vadd.f32 %v1250, %v1713
      %v1808 = vadd.f32 %v1251, %v1718
      %v1809 = vadd.f32 %v1252, %v1721
      %v1810 = vadd.f32 %v1253, %v1726
      %v1811 = vadd.f32 %v1254, %v1729
      %v1812 = vadd.f32 %v1255, %v1734
      %v1813 = vadd.f32 %v1256, %v1737
      %v1814 = vadd.f32 %v1257, %v1742
      %v1815 = vadd.f32 %v1258, %v1745
      %v1816 = vadd.f32 %v1259, %v1750
      %v1817 = vadd.f32 %v1260, %v1753
      %v1818 = vadd.f32 %v1261, %v1758
      %v1819 = vadd.f32 %v1262, %v1761
      %v1820 = vadd.f32 %v1263, %v1766
      %v1821 = vadd.f32 %v1264, %v1769
      %v1822 = vadd.f32 %v1265, %v1774
      %v1823 = vadd.f32 %v1266, %v1777
      %v1824 = vadd.f32 %v1267, %v1782
      %v1825 = vadd.f32 %v1268, %v1785
      %v1826 = vadd.f32 %v1269, %v1790
      %v1827 = vadd.f32 %v1270, %v1793
      %s1828 = scalar_lea.vmem %s2, 16
      %v1829 = vld [vmem:[%s1828] sm:$0x7]
      %v1830 = vunpack.c.l.b16 %v1509
      %v1831 = vunpack.c.l.b16 %v1512
      %v1832 = vunpack.c.l.b16 %v1516
      %v1833 = vunpack.c.l.b16 %v1519
      %v1834 = vpack.c.b16 %v1831, %v1830
      %v1835 = vpack.c.b16 %v1833, %v1832
      %v1837 = vsel %vm663, %v1834, 0
      %v1840 = vsel %vm663, %v1835, 0
      %v1843 = vsel %vm712, %v1829, 0
      %1845 = vmatprep.subr.bf16.mxu0 0
      %1846 = vmatpush1.bf16.msra.mxu0 %v1843
      %1847 = vmatprep.subr.bf16.mxu0 0
      %1848 = vmatpush1.bf16.msra.mxu0 0
      %1849 = vmatprep.subr.bf16.mxu0 0
      %1850 = vmatpush1.bf16.msra.mxu0 0
      %1851 = vmatprep.subr.bf16.mxu0 0
      %1852 = vmatpush1.bf16.msra.mxu0 0
      %1853 = vmatprep.subr.bf16.mxu0 0
      %1854 = vmatpush1.bf16.msra.mxu0 0
      %1855 = vmatprep.subr.bf16.mxu0 0
      %1856 = vmatpush1.bf16.msra.mxu0 0
      %1857 = vmatprep.subr.bf16.mxu0 0
      %1858 = vmatpush1.bf16.msra.mxu0 0
      %1859 = vmatprep.subr.bf16.mxu0 0
      %1860 = vmatpush1.bf16.msra.mxu0 0
      %1861 = vmatprep.subr.bf16.mxu0 0
      %1862 = vmatpush1.bf16.msra.mxu0 0
      %1863 = vmatprep.subr.bf16.mxu0 0
      %1864 = vmatpush1.bf16.msra.mxu0 0
      %1865 = vmatprep.subr.bf16.mxu0 0
      %1866 = vmatpush1.bf16.msra.mxu0 0
      %1867 = vmatprep.subr.bf16.mxu0 0
      %1868 = vmatpush1.bf16.msra.mxu0 0
      %1869 = vmatprep.subr.bf16.mxu0 0
      %1870 = vmatpush1.bf16.msra.mxu0 0
      %1871 = vmatprep.subr.bf16.mxu0 0
      %1872 = vmatpush1.bf16.msra.mxu0 0
      %1873 = vmatprep.subr.bf16.mxu0 0
      %1874 = vmatpush1.bf16.msra.mxu0 0
      %1875 = vmatprep.subr.bf16.mxu0 0
      %1876 = vmatpush1.bf16.msra.mxu0 0
      %1877 = vmatprep.mubr.bf16.mxu0 0
      %1878 = vmatmul.mubr.bf16.gmra.mrb[0].mxu0 %v1591
      %v1879 = vpop.f32.mrb[0].mxu0
      %v1880 = vadd.f32 0.0, %v1879
      %v1881 = vpop.f32.mrb[0].mxu0
      %v1882 = vpop.f32.mrb[0].mxu0
      %v1883 = vadd.f32 0.0, %v1882
      %v1884 = vpop.f32.mrb[0].mxu0
      %1885 = vmatprep.mubr.bf16.mxu0 0
      %1886 = vmatmul.mubr.bf16.gmra.mrb[0].mxu0 %v1594
      %v1887 = vpop.f32.mrb[0].mxu0
      %v1888 = vadd.f32 0.0, %v1887
      %v1889 = vpop.f32.mrb[0].mxu0
      %v1890 = vpop.f32.mrb[0].mxu0
      %v1891 = vadd.f32 0.0, %v1890
      %v1892 = vpop.f32.mrb[0].mxu0
      %1893 = vmatprep.mubr.bf16.mxu0 0
      %1894 = vmatmul.mubr.bf16.gmra.mrb[0].mxu0 %v1597
      %v1895 = vpop.f32.mrb[0].mxu0
      %v1896 = vadd.f32 0.0, %v1895
      %v1897 = vpop.f32.mrb[0].mxu0
      %v1898 = vpop.f32.mrb[0].mxu0
      %v1899 = vadd.f32 0.0, %v1898
      %v1900 = vpop.f32.mrb[0].mxu0
      %1901 = vmatprep.mubr.bf16.mxu0 0
      %1902 = vmatmul.mubr.bf16.gmra.mrb[0].mxu0 %v1600
      %v1903 = vpop.f32.mrb[0].mxu0
      %v1904 = vadd.f32 0.0, %v1903
      %v1905 = vpop.f32.mrb[0].mxu0
      %v1906 = vpop.f32.mrb[0].mxu0
      %v1907 = vadd.f32 0.0, %v1906
      %v1908 = vpop.f32.mrb[0].mxu0
      %1909 = vmatprep.mubr.bf16.mxu0 0
      %1910 = vmatmul.mubr.bf16.gmra.mrb[0].mxu0 %v1603
      %v1911 = vpop.f32.mrb[0].mxu0
      %v1912 = vadd.f32 0.0, %v1911
      %v1913 = vpop.f32.mrb[0].mxu0
      %v1914 = vpop.f32.mrb[0].mxu0
      %v1915 = vadd.f32 0.0, %v1914
      %v1916 = vpop.f32.mrb[0].mxu0
      %1917 = vmatprep.mubr.bf16.mxu0 0
      %1918 = vmatmul.mubr.bf16.gmra.mrb[0].mxu0 %v1606
      %v1919 = vpop.f32.mrb[0].mxu0
      %v1920 = vadd.f32 0.0, %v1919
      %v1921 = vpop.f32.mrb[0].mxu0
      %v1922 = vpop.f32.mrb[0].mxu0
      %v1923 = vadd.f32 0.0, %v1922
      %v1924 = vpop.f32.mrb[0].mxu0
      %1925 = vmatprep.mubr.bf16.mxu0 0
      %1926 = vmatmul.mubr.bf16.gmra.mrb[0].mxu0 %v1609
      %v1927 = vpop.f32.mrb[0].mxu0
      %v1928 = vadd.f32 0.0, %v1927
      %v1929 = vpop.f32.mrb[0].mxu0
      %v1930 = vpop.f32.mrb[0].mxu0
      %v1931 = vadd.f32 0.0, %v1930
      %v1932 = vpop.f32.mrb[0].mxu0
      %1933 = vmatprep.mubr.bf16.mxu0 0
      %1934 = vmatmul.mubr.bf16.gmra.mrb[0].mxu0 %v1612
      %v1935 = vpop.f32.mrb[0].mxu0
      %v1936 = vadd.f32 0.0, %v1935
      %v1937 = vpop.f32.mrb[0].mxu0
      %v1938 = vpop.f32.mrb[0].mxu0
      %v1939 = vadd.f32 0.0, %v1938
      %v1940 = vpop.f32.mrb[0].mxu0
      %1941 = vmatprep.mubr.bf16.mxu0 0
      %1942 = vmatmul.mubr.bf16.gmra.mrb[0].mxu0 %v1615
      %v1943 = vpop.f32.mrb[0].mxu0
      %v1944 = vadd.f32 0.0, %v1943
      %v1945 = vpop.f32.mrb[0].mxu0
      %v1946 = vpop.f32.mrb[0].mxu0
      %v1947 = vadd.f32 0.0, %v1946
      %v1948 = vpop.f32.mrb[0].mxu0
      %1949 = vmatprep.mubr.bf16.mxu0 0
      %1950 = vmatmul.mubr.bf16.gmra.mrb[0].mxu0 %v1618
      %v1951 = vpop.f32.mrb[0].mxu0
      %v1952 = vadd.f32 0.0, %v1951
      %v1953 = vpop.f32.mrb[0].mxu0
      %v1954 = vpop.f32.mrb[0].mxu0
      %v1955 = vadd.f32 0.0, %v1954
      %v1956 = vpop.f32.mrb[0].mxu0
      %1957 = vmatprep.mubr.bf16.mxu0 0
      %1958 = vmatmul.mubr.bf16.gmra.mrb[0].mxu0 %v1621
      %v1959 = vpop.f32.mrb[0].mxu0
      %v1960 = vadd.f32 0.0, %v1959
      %v1961 = vpop.f32.mrb[0].mxu0
      %v1962 = vpop.f32.mrb[0].mxu0
      %v1963 = vadd.f32 0.0, %v1962
      %v1964 = vpop.f32.mrb[0].mxu0
      %1965 = vmatprep.mubr.bf16.mxu0 0
      %1966 = vmatmul.mubr.bf16.gmra.mrb[0].mxu0 %v1624
      %v1967 = vpop.f32.mrb[0].mxu0
      %v1968 = vadd.f32 0.0, %v1967
      %v1969 = vpop.f32.mrb[0].mxu0
      %v1970 = vpop.f32.mrb[0].mxu0
      %v1971 = vadd.f32 0.0, %v1970
      %v1972 = vpop.f32.mrb[0].mxu0
      %1973 = vmatprep.mubr.bf16.mxu0 0
      %1974 = vmatmul.mubr.bf16.gmra.mrb[0].mxu0 %v1627
      %v1975 = vpop.f32.mrb[0].mxu0
      %v1976 = vadd.f32 0.0, %v1975
      %v1977 = vpop.f32.mrb[0].mxu0
      %v1978 = vpop.f32.mrb[0].mxu0
      %v1979 = vadd.f32 0.0, %v1978
      %v1980 = vpop.f32.mrb[0].mxu0
      %1981 = vmatprep.mubr.bf16.mxu0 0
      %1982 = vmatmul.mubr.bf16.gmra.mrb[0].mxu0 %v1630
      %v1983 = vpop.f32.mrb[0].mxu0
      %v1984 = vadd.f32 0.0, %v1983
      %v1985 = vpop.f32.mrb[0].mxu0
      %v1986 = vpop.f32.mrb[0].mxu0
      %v1987 = vadd.f32 0.0, %v1986
      %v1988 = vpop.f32.mrb[0].mxu0
      %1989 = vmatprep.mubr.bf16.mxu0 0
      %1990 = vmatmul.mubr.bf16.gmra.mrb[0].mxu0 %v1837
      %v1991 = vpop.f32.mrb[0].mxu0
      %v1992 = vadd.f32 0.0, %v1991
      %v1993 = vpop.f32.mrb[0].mxu0
      %v1994 = vpop.f32.mrb[0].mxu0
      %v1995 = vadd.f32 0.0, %v1994
      %v1996 = vpop.f32.mrb[0].mxu0
      %1997 = vmatprep.mubr.bf16.mxu0 0
      %1998 = vmatmul.mubr.bf16.gmra.mrb[0].mxu0 %v1840
      %v1999 = vpop.f32.mrb[0].mxu0
      %v2000 = vadd.f32 0.0, %v1999
      %v2001 = vpop.f32.mrb[0].mxu0
      %v2002 = vpop.f32.mrb[0].mxu0
      %v2003 = vadd.f32 0.0, %v2002
      %v2004 = vpop.f32.mrb[0].mxu0
      %2005 = vdwg.mxu0
      %v2006 = vadd.f32 %v1796, %v1880
      %v2007 = vadd.f32 %v1797, %v1883
      %v2008 = vadd.f32 %v1798, %v1888
      %v2009 = vadd.f32 %v1799, %v1891
      %v2010 = vadd.f32 %v1800, %v1896
      %v2011 = vadd.f32 %v1801, %v1899
      %v2012 = vadd.f32 %v1802, %v1904
      %v2013 = vadd.f32 %v1803, %v1907
      %v2014 = vadd.f32 %v1804, %v1912
      %v2015 = vadd.f32 %v1805, %v1915
      %v2016 = vadd.f32 %v1806, %v1920
      %v2017 = vadd.f32 %v1807, %v1923
      %v2018 = vadd.f32 %v1808, %v1928
      %v2019 = vadd.f32 %v1809, %v1931
      %v2020 = vadd.f32 %v1810, %v1936
      %v2021 = vadd.f32 %v1811, %v1939
      %v2022 = vadd.f32 %v1812, %v1944
      %v2023 = vadd.f32 %v1813, %v1947
      %v2024 = vadd.f32 %v1814, %v1952
      %v2025 = vadd.f32 %v1815, %v1955
      %v2026 = vadd.f32 %v1816, %v1960
      %v2027 = vadd.f32 %v1817, %v1963
      %v2028 = vadd.f32 %v1818, %v1968
      %v2029 = vadd.f32 %v1819, %v1971
      %v2030 = vadd.f32 %v1820, %v1976
      %v2031 = vadd.f32 %v1821, %v1979
      %v2032 = vadd.f32 %v1822, %v1984
      %v2033 = vadd.f32 %v1823, %v1987
      %v2034 = vadd.f32 %v1824, %v1992
      %v2035 = vadd.f32 %v1825, %v1995
      %v2036 = vadd.f32 %v1826, %v2000
      %v2037 = vadd.f32 %v1827, %v2003
      %s2038 = scalar_lea.vmem %s2, 28
      %v2039 = vld [vmem:[%s2038] sm:$0x7]
      %v2040 = vunpack.c.l.b16 %v1523
      %v2041 = vunpack.c.l.b16 %v1526
      %v2042 = vunpack.c.l.b16 %v1530
      %v2043 = vunpack.c.l.b16 %v1533
      %v2044 = vpack.c.b16 %v2041, %v2040
      %v2045 = vpack.c.b16 %v2043, %v2042
      %v2047 = vsel %vm663, %v2044, 0
      %v2050 = vsel %vm663, %v2045, 0
      %v2053 = vsel %vm712, %v2039, 0
      %2055 = vmatprep.subr.bf16.mxu0 0
      %2056 = vmatpush1.bf16.msra.mxu0 %v2053
      %2057 = vmatprep.subr.bf16.mxu0 0
      %2058 = vmatpush1.bf16.msra.mxu0 0
      %2059 = vmatprep.subr.bf16.mxu0 0
      %2060 = vmatpush1.bf16.msra.mxu0 0
      %2061 = vmatprep.subr.bf16.mxu0 0
      %2062 = vmatpush1.bf16.msra.mxu0 0
      %2063 = vmatprep.subr.bf16.mxu0 0
      %2064 = vmatpush1.bf16.msra.mxu0 0
      %2065 = vmatprep.subr.bf16.mxu0 0
      %2066 = vmatpush1.bf16.msra.mxu0 0
      %2067 = vmatprep.subr.bf16.mxu0 0
      %2068 = vmatpush1.bf16.msra.mxu0 0
      %2069 = vmatprep.subr.bf16.mxu0 0
      %2070 = vmatpush1.bf16.msra.mxu0 0
      %2071 = vmatprep.subr.bf16.mxu0 0
      %2072 = vmatpush1.bf16.msra.mxu0 0
      %2073 = vmatprep.subr.bf16.mxu0 0
      %2074 = vmatpush1.bf16.msra.mxu0 0
      %2075 = vmatprep.subr.bf16.mxu0 0
      %2076 = vmatpush1.bf16.msra.mxu0 0
      %2077 = vmatprep.subr.bf16.mxu0 0
      %2078 = vmatpush1.bf16.msra.mxu0 0
      %2079 = vmatprep.subr.bf16.mxu0 0
      %2080 = vmatpush1.bf16.msra.mxu0 0
      %2081 = vmatprep.subr.bf16.mxu0 0
      %2082 = vmatpush1.bf16.msra.mxu0 0
      %2083 = vmatprep.subr.bf16.mxu0 0
      %2084 = vmatpush1.bf16.msra.mxu0 0
      %2085 = vmatprep.subr.bf16.mxu0 0
      %2086 = vmatpush1.bf16.msra.mxu0 0
      %2087 = vmatprep.mubr.bf16.mxu0 0
      %2088 = vmatmul.mubr.bf16.gmra.mrb[0].mxu0 %v1597
      %v2089 = vpop.f32.mrb[0].mxu0
      %v2090 = vadd.f32 0.0, %v2089
      %v2091 = vpop.f32.mrb[0].mxu0
      %v2092 = vpop.f32.mrb[0].mxu0
      %v2093 = vadd.f32 0.0, %v2092
      %v2094 = vpop.f32.mrb[0].mxu0
      %2095 = vmatprep.mubr.bf16.mxu0 0
      %2096 = vmatmul.mubr.bf16.gmra.mrb[0].mxu0 %v1600
      %v2097 = vpop.f32.mrb[0].mxu0
      %v2098 = vadd.f32 0.0, %v2097
      %v2099 = vpop.f32.mrb[0].mxu0
      %v2100 = vpop.f32.mrb[0].mxu0
      %v2101 = vadd.f32 0.0, %v2100
      %v2102 = vpop.f32.mrb[0].mxu0
      %2103 = vmatprep.mubr.bf16.mxu0 0
      %2104 = vmatmul.mubr.bf16.gmra.mrb[0].mxu0 %v1603
      %v2105 = vpop.f32.mrb[0].mxu0
      %v2106 = vadd.f32 0.0, %v2105
      %v2107 = vpop.f32.mrb[0].mxu0
      %v2108 = vpop.f32.mrb[0].mxu0
      %v2109 = vadd.f32 0.0, %v2108
      %v2110 = vpop.f32.mrb[0].mxu0
      %2111 = vmatprep.mubr.bf16.mxu0 0
      %2112 = vmatmul.mubr.bf16.gmra.mrb[0].mxu0 %v1606
      %v2113 = vpop.f32.mrb[0].mxu0
      %v2114 = vadd.f32 0.0, %v2113
      %v2115 = vpop.f32.mrb[0].mxu0
      %v2116 = vpop.f32.mrb[0].mxu0
      %v2117 = vadd.f32 0.0, %v2116
      %v2118 = vpop.f32.mrb[0].mxu0
      %2119 = vmatprep.mubr.bf16.mxu0 0
      %2120 = vmatmul.mubr.bf16.gmra.mrb[0].mxu0 %v1609
      %v2121 = vpop.f32.mrb[0].mxu0
      %v2122 = vadd.f32 0.0, %v2121
      %v2123 = vpop.f32.mrb[0].mxu0
      %v2124 = vpop.f32.mrb[0].mxu0
      %v2125 = vadd.f32 0.0, %v2124
      %v2126 = vpop.f32.mrb[0].mxu0
      %2127 = vmatprep.mubr.bf16.mxu0 0
      %2128 = vmatmul.mubr.bf16.gmra.mrb[0].mxu0 %v1612
      %v2129 = vpop.f32.mrb[0].mxu0
      %v2130 = vadd.f32 0.0, %v2129
      %v2131 = vpop.f32.mrb[0].mxu0
      %v2132 = vpop.f32.mrb[0].mxu0
      %v2133 = vadd.f32 0.0, %v2132
      %v2134 = vpop.f32.mrb[0].mxu0
      %2135 = vmatprep.mubr.bf16.mxu0 0
      %2136 = vmatmul.mubr.bf16.gmra.mrb[0].mxu0 %v1615
      %v2137 = vpop.f32.mrb[0].mxu0
      %v2138 = vadd.f32 0.0, %v2137
      %v2139 = vpop.f32.mrb[0].mxu0
      %v2140 = vpop.f32.mrb[0].mxu0
      %v2141 = vadd.f32 0.0, %v2140
      %v2142 = vpop.f32.mrb[0].mxu0
      %2143 = vmatprep.mubr.bf16.mxu0 0
      %2144 = vmatmul.mubr.bf16.gmra.mrb[0].mxu0 %v1618
      %v2145 = vpop.f32.mrb[0].mxu0
      %v2146 = vadd.f32 0.0, %v2145
      %v2147 = vpop.f32.mrb[0].mxu0
      %v2148 = vpop.f32.mrb[0].mxu0
      %v2149 = vadd.f32 0.0, %v2148
      %v2150 = vpop.f32.mrb[0].mxu0
      %2151 = vmatprep.mubr.bf16.mxu0 0
      %2152 = vmatmul.mubr.bf16.gmra.mrb[0].mxu0 %v1621
      %v2153 = vpop.f32.mrb[0].mxu0
      %v2154 = vadd.f32 0.0, %v2153
      %v2155 = vpop.f32.mrb[0].mxu0
      %v2156 = vpop.f32.mrb[0].mxu0
      %v2157 = vadd.f32 0.0, %v2156
      %v2158 = vpop.f32.mrb[0].mxu0
      %2159 = vmatprep.mubr.bf16.mxu0 0
      %2160 = vmatmul.mubr.bf16.gmra.mrb[0].mxu0 %v1624
      %v2161 = vpop.f32.mrb[0].mxu0
      %v2162 = vadd.f32 0.0, %v2161
      %v2163 = vpop.f32.mrb[0].mxu0
      %v2164 = vpop.f32.mrb[0].mxu0
      %v2165 = vadd.f32 0.0, %v2164
      %v2166 = vpop.f32.mrb[0].mxu0
      %2167 = vmatprep.mubr.bf16.mxu0 0
      %2168 = vmatmul.mubr.bf16.gmra.mrb[0].mxu0 %v1627
      %v2169 = vpop.f32.mrb[0].mxu0
      %v2170 = vadd.f32 0.0, %v2169
      %v2171 = vpop.f32.mrb[0].mxu0
      %v2172 = vpop.f32.mrb[0].mxu0
      %v2173 = vadd.f32 0.0, %v2172
      %v2174 = vpop.f32.mrb[0].mxu0
      %2175 = vmatprep.mubr.bf16.mxu0 0
      %2176 = vmatmul.mubr.bf16.gmra.mrb[0].mxu0 %v1630
      %v2177 = vpop.f32.mrb[0].mxu0
      %v2178 = vadd.f32 0.0, %v2177
      %v2179 = vpop.f32.mrb[0].mxu0
      %v2180 = vpop.f32.mrb[0].mxu0
      %v2181 = vadd.f32 0.0, %v2180
      %v2182 = vpop.f32.mrb[0].mxu0
      %2183 = vmatprep.mubr.bf16.mxu0 0
      %2184 = vmatmul.mubr.bf16.gmra.mrb[0].mxu0 %v1837
      %v2185 = vpop.f32.mrb[0].mxu0
      %v2186 = vadd.f32 0.0, %v2185
      %v2187 = vpop.f32.mrb[0].mxu0
      %v2188 = vpop.f32.mrb[0].mxu0
      %v2189 = vadd.f32 0.0, %v2188
      %v2190 = vpop.f32.mrb[0].mxu0
      %2191 = vmatprep.mubr.bf16.mxu0 0
      %2192 = vmatmul.mubr.bf16.gmra.mrb[0].mxu0 %v1840
      %v2193 = vpop.f32.mrb[0].mxu0
      %v2194 = vadd.f32 0.0, %v2193
      %v2195 = vpop.f32.mrb[0].mxu0
      %v2196 = vpop.f32.mrb[0].mxu0
      %v2197 = vadd.f32 0.0, %v2196
      %v2198 = vpop.f32.mrb[0].mxu0
      %2199 = vmatprep.mubr.bf16.mxu0 0
      %2200 = vmatmul.mubr.bf16.gmra.mrb[0].mxu0 %v2047
      %v2201 = vpop.f32.mrb[0].mxu0
      %v2202 = vadd.f32 0.0, %v2201
      %v2203 = vpop.f32.mrb[0].mxu0
      %v2204 = vpop.f32.mrb[0].mxu0
      %v2205 = vadd.f32 0.0, %v2204
      %v2206 = vpop.f32.mrb[0].mxu0
      %2207 = vmatprep.mubr.bf16.mxu0 0
      %2208 = vmatmul.mubr.bf16.gmra.mrb[0].mxu0 %v2050
      %v2209 = vpop.f32.mrb[0].mxu0
      %v2210 = vadd.f32 0.0, %v2209
      %v2211 = vpop.f32.mrb[0].mxu0
      %v2212 = vpop.f32.mrb[0].mxu0
      %v2213 = vadd.f32 0.0, %v2212
      %v2214 = vpop.f32.mrb[0].mxu0
      %2215 = vdwg.mxu0
      %v2216 = vadd.f32 %v2006, %v2090
      %v2217 = vadd.f32 %v2007, %v2093
      %v2218 = vadd.f32 %v2008, %v2098
      %v2219 = vadd.f32 %v2009, %v2101
      %v2220 = vadd.f32 %v2010, %v2106
      %v2221 = vadd.f32 %v2011, %v2109
      %v2222 = vadd.f32 %v2012, %v2114
      %v2223 = vadd.f32 %v2013, %v2117
      %v2224 = vadd.f32 %v2014, %v2122
      %v2225 = vadd.f32 %v2015, %v2125
      %v2226 = vadd.f32 %v2016, %v2130
      %v2227 = vadd.f32 %v2017, %v2133
      %v2228 = vadd.f32 %v2018, %v2138
      %v2229 = vadd.f32 %v2019, %v2141
      %v2230 = vadd.f32 %v2020, %v2146
      %v2231 = vadd.f32 %v2021, %v2149
      %v2232 = vadd.f32 %v2022, %v2154
      %v2233 = vadd.f32 %v2023, %v2157
      %v2234 = vadd.f32 %v2024, %v2162
      %v2235 = vadd.f32 %v2025, %v2165
      %v2236 = vadd.f32 %v2026, %v2170
      %v2237 = vadd.f32 %v2027, %v2173
      %v2238 = vadd.f32 %v2028, %v2178
      %v2239 = vadd.f32 %v2029, %v2181
      %v2240 = vadd.f32 %v2030, %v2186
      %v2241 = vadd.f32 %v2031, %v2189
      %v2242 = vadd.f32 %v2032, %v2194
      %v2243 = vadd.f32 %v2033, %v2197
      %v2244 = vadd.f32 %v2034, %v2202
      %v2245 = vadd.f32 %v2035, %v2205
      %v2246 = vadd.f32 %v2036, %v2210
      %v2247 = vadd.f32 %v2037, %v2213
      %v2248 = vld [vmem:[#allocation2] sm:$0xc]
      %v2249 = vld [vmem:[#allocation2 + $0x8] sm:$0x3]
      %v2250 = vld [vmem:[#allocation2 + $0xc] sm:$0xc]
      %v2251 = vld [vmem:[#allocation2 + $0x14] sm:$0x3]
      %v2252 = vld [vmem:[#allocation2 + $0x18] sm:$0xc]
      %v2253 = vld [vmem:[#allocation2 + $0x20] sm:$0x3]
      %v2254 = vld [vmem:[#allocation2 + $0x24] sm:$0xc]
      %v2255 = vld [vmem:[#allocation2 + $0x2c] sm:$0x3]
      %v2256 = vld [vmem:[#allocation2 + $0x30] sm:$0xc]
      %v2257 = vld [vmem:[#allocation2 + $0x38] sm:$0x3]
      %v2258 = vld [vmem:[#allocation2 + $0x3c] sm:$0xc]
      %v2259 = vld [vmem:[#allocation2 + $0x44] sm:$0x3]
      %v2260 = vld [vmem:[#allocation2 + $0x48] sm:$0xc]
      %v2261 = vld [vmem:[#allocation2 + $0x50] sm:$0x3]
      %v2262 = vld [vmem:[#allocation2 + $0x54] sm:$0xc]
      %v2263 = vld [vmem:[#allocation2 + $0x5c] sm:$0x3]
      %v2264 = vld [vmem:[#allocation2 + $0x60] sm:$0xc]
      %v2265 = vld [vmem:[#allocation2 + $0x68] sm:$0x3]
      %v2266 = vld [vmem:[#allocation2 + $0x6c] sm:$0xc]
      %v2267 = vld [vmem:[#allocation2 + $0x74] sm:$0x3]
      %v2268 = vld [vmem:[#allocation2 + $0x78] sm:$0xc]
      %v2269 = vld [vmem:[#allocation2 + $0x80] sm:$0x3]
      %v2270 = vld [vmem:[#allocation2 + $0x84] sm:$0xc]
      %v2271 = vld [vmem:[#allocation2 + $0x8c] sm:$0x3]
      %v2272 = vld [vmem:[#allocation2 + $0x90] sm:$0xc]
      %v2273 = vld [vmem:[#allocation2 + $0x98] sm:$0x3]
      %v2274 = vld [vmem:[#allocation2 + $0x9c] sm:$0xc]
      %v2275 = vld [vmem:[#allocation2 + $0xa4] sm:$0x3]
      %v2276 = vld [vmem:[#allocation2 + $0xa8] sm:$0xc]
      %v2277 = vld [vmem:[#allocation2 + $0xb0] sm:$0x3]
      %v2278 = vld [vmem:[#allocation2 + $0xb4] sm:$0xc]
      %v2279 = vld [vmem:[#allocation2 + $0xbc] sm:$0x3]
      %v2280 = vld [vmem:[#allocation2 + $0xc0] sm:$0xc]
      %v2281 = vld [vmem:[#allocation2 + $0xc8] sm:$0x3]
      %v2282 = vld [vmem:[#allocation2 + $0xcc] sm:$0xc]
      %v2283 = vld [vmem:[#allocation2 + $0xd4] sm:$0x3]
      %v2284 = vld [vmem:[#allocation2 + $0xd8] sm:$0xc]
      %v2285 = vld [vmem:[#allocation2 + $0xe0] sm:$0x3]
      %v2286 = vld [vmem:[#allocation2 + $0xe4] sm:$0xc]
      %v2287 = vld [vmem:[#allocation2 + $0xec] sm:$0x3]
      %vm2328 = vcmask 1041408
      %vm2329 = vcmask 1045508
      %vm2330 = vmor %vm2328, %vm2329
      %v2331 = vrot.slane %v2248, 6
      %v2332 = vrot.slane %v2331, 4
      %v2333 = vrot.slane %v1272, 6
      %v2334 = vsel %vm2330, %v2332, %v2333
      %v2335 = vrot.slane %v2333, 4
      %v2336 = vrot.slane %v2249, 6
      %v2337 = vsel %vm2330, %v2335, %v2336
      %v2338 = vrot.slane %v2250, 6
      %v2339 = vrot.slane %v2338, 4
      %v2340 = vrot.slane %v1275, 6
      %v2341 = vsel %vm2330, %v2339, %v2340
      %v2342 = vrot.slane %v2340, 4
      %v2343 = vrot.slane %v2251, 6
      %v2344 = vsel %vm2330, %v2342, %v2343
      %v2345 = vrot.slane %v2252, 6
      %v2346 = vrot.slane %v2345, 4
      %v2347 = vrot.slane %v1278, 6
      %v2348 = vsel %vm2330, %v2346, %v2347
      %v2349 = vrot.slane %v2347, 4
      %v2350 = vrot.slane %v2253, 6
      %v2351 = vsel %vm2330, %v2349, %v2350
      %v2352 = vrot.slane %v2254, 6
      %v2353 = vrot.slane %v2352, 4
      %v2354 = vrot.slane %v1281, 6
      %v2355 = vsel %vm2330, %v2353, %v2354
      %v2356 = vrot.slane %v2354, 4
      %v2357 = vrot.slane %v2255, 6
      %v2358 = vsel %vm2330, %v2356, %v2357
      %v2359 = vrot.slane %v2256, 6
      %v2360 = vrot.slane %v2359, 4
      %v2361 = vrot.slane %v1284, 6
      %v2362 = vsel %vm2330, %v2360, %v2361
      %v2363 = vrot.slane %v2361, 4
      %v2364 = vrot.slane %v2257, 6
      %v2365 = vsel %vm2330, %v2363, %v2364
      %v2366 = vrot.slane %v2258, 6
      %v2367 = vrot.slane %v2366, 4
      %v2368 = vrot.slane %v1287, 6
      %v2369 = vsel %vm2330, %v2367, %v2368
      %v2370 = vrot.slane %v2368, 4
      %v2371 = vrot.slane %v2259, 6
      %v2372 = vsel %vm2330, %v2370, %v2371
      %v2373 = vrot.slane %v2260, 6
      %v2374 = vrot.slane %v2373, 4
      %v2375 = vrot.slane %v1290, 6
      %v2376 = vsel %vm2330, %v2374, %v2375
      %v2377 = vrot.slane %v2375, 4
      %v2378 = vrot.slane %v2261, 6
      %v2379 = vsel %vm2330, %v2377, %v2378
      %v2380 = vrot.slane %v2262, 6
      %v2381 = vrot.slane %v2380, 4
      %v2382 = vrot.slane %v1293, 6
      %v2383 = vsel %vm2330, %v2381, %v2382
      %v2384 = vrot.slane %v2382, 4
      %v2385 = vrot.slane %v2263, 6
      %v2386 = vsel %vm2330, %v2384, %v2385
      %v2387 = vrot.slane %v2264, 6
      %v2388 = vrot.slane %v2387, 4
      %v2389 = vrot.slane %v1296, 6
      %v2390 = vsel %vm2330, %v2388, %v2389
      %v2391 = vrot.slane %v2389, 4
      %v2392 = vrot.slane %v2265, 6
      %v2393 = vsel %vm2330, %v2391, %v2392
      %v2394 = vrot.slane %v2266, 6
      %v2395 = vrot.slane %v2394, 4
      %v2396 = vrot.slane %v1299, 6
      %v2397 = vsel %vm2330, %v2395, %v2396
      %v2398 = vrot.slane %v2396, 4
      %v2399 = vrot.slane %v2267, 6
      %v2400 = vsel %vm2330, %v2398, %v2399
      %v2401 = vrot.slane %v2268, 6
      %v2402 = vrot.slane %v2401, 4
      %v2403 = vrot.slane %v1302, 6
      %v2404 = vsel %vm2330, %v2402, %v2403
      %v2405 = vrot.slane %v2403, 4
      %v2406 = vrot.slane %v2269, 6
      %v2407 = vsel %vm2330, %v2405, %v2406
      %v2408 = vrot.slane %v2270, 6
      %v2409 = vrot.slane %v2408, 4
      %v2410 = vrot.slane %v1305, 6
      %v2411 = vsel %vm2330, %v2409, %v2410
      %v2412 = vrot.slane %v2410, 4
      %v2413 = vrot.slane %v2271, 6
      %v2414 = vsel %vm2330, %v2412, %v2413
      %v2415 = vrot.slane %v2272, 6
      %v2416 = vrot.slane %v2415, 4
      %v2417 = vrot.slane %v1308, 6
      %v2418 = vsel %vm2330, %v2416, %v2417
      %v2419 = vrot.slane %v2417, 4
      %v2420 = vrot.slane %v2273, 6
      %v2421 = vsel %vm2330, %v2419, %v2420
      %v2422 = vrot.slane %v2274, 6
      %v2423 = vrot.slane %v2422, 4
      %v2424 = vrot.slane %v1311, 6
      %v2425 = vsel %vm2330, %v2423, %v2424
      %v2426 = vrot.slane %v2424, 4
      %v2427 = vrot.slane %v2275, 6
      %v2428 = vsel %vm2330, %v2426, %v2427
      %v2429 = vrot.slane %v2276, 6
      %v2430 = vrot.slane %v2429, 4
      %v2431 = vrot.slane %v1314, 6
      %v2432 = vsel %vm2330, %v2430, %v2431
      %v2433 = vrot.slane %v2431, 4
      %v2434 = vrot.slane %v2277, 6
      %v2435 = vsel %vm2330, %v2433, %v2434
      %v2436 = vrot.slane %v2278, 6
      %v2437 = vrot.slane %v2436, 4
      %v2438 = vrot.slane %v1317, 6
      %v2439 = vsel %vm2330, %v2437, %v2438
      %v2440 = vrot.slane %v2438, 4
      %v2441 = vrot.slane %v2279, 6
      %v2442 = vsel %vm2330, %v2440, %v2441
      %v2443 = vrot.slane %v2280, 6
      %v2444 = vrot.slane %v2443, 4
      %v2445 = vrot.slane %v1320, 6
      %v2446 = vsel %vm2330, %v2444, %v2445
      %v2447 = vrot.slane %v2445, 4
      %v2448 = vrot.slane %v2281, 6
      %v2449 = vsel %vm2330, %v2447, %v2448
      %v2450 = vrot.slane %v2282, 6
      %v2451 = vrot.slane %v2450, 4
      %v2452 = vrot.slane %v1323, 6
      %v2453 = vsel %vm2330, %v2451, %v2452
      %v2454 = vrot.slane %v2452, 4
      %v2455 = vrot.slane %v2283, 6
      %v2456 = vsel %vm2330, %v2454, %v2455
      %v2457 = vrot.slane %v2284, 6
      %v2458 = vrot.slane %v2457, 4
      %v2459 = vrot.slane %v1326, 6
      %v2460 = vsel %vm2330, %v2458, %v2459
      %v2461 = vrot.slane %v2459, 4
      %v2462 = vrot.slane %v2285, 6
      %v2463 = vsel %vm2330, %v2461, %v2462
      %v2464 = vrot.slane %v2286, 6
      %v2465 = vrot.slane %v2464, 4
      %v2466 = vrot.slane %v1329, 6
      %v2467 = vsel %vm2330, %v2465, %v2466
      %v2468 = vrot.slane %v2466, 4
      %v2469 = vrot.slane %v2287, 6
      %v2470 = vsel %vm2330, %v2468, %v2469
      %s2471 = scalar_lea.vmem %s2, 8
      %v2472 = vld [vmem:[%s2471] sm:$0x7]
      %v2473 = vunpack.c.l.b16 %v2334
      %v2474 = vunpack.c.l.b16 %v2337
      %v2475 = vunpack.c.l.b16 %v2341
      %v2476 = vunpack.c.l.b16 %v2344
      %v2477 = vunpack.c.l.b16 %v2348
      %v2478 = vunpack.c.l.b16 %v2351
      %v2479 = vunpack.c.l.b16 %v2355
      %v2480 = vunpack.c.l.b16 %v2358
      %v2481 = vunpack.c.l.b16 %v2362
      %v2482 = vunpack.c.l.b16 %v2365
      %v2483 = vunpack.c.l.b16 %v2369
      %v2484 = vunpack.c.l.b16 %v2372
      %v2485 = vunpack.c.l.b16 %v2376
      %v2486 = vunpack.c.l.b16 %v2379
      %v2487 = vunpack.c.l.b16 %v2383
      %v2488 = vunpack.c.l.b16 %v2386
      %v2489 = vunpack.c.l.b16 %v2390
      %v2490 = vunpack.c.l.b16 %v2393
      %v2491 = vunpack.c.l.b16 %v2397
      %v2492 = vunpack.c.l.b16 %v2400
      %v2493 = vunpack.c.l.b16 %v2404
      %v2494 = vunpack.c.l.b16 %v2407
      %v2495 = vunpack.c.l.b16 %v2411
      %v2496 = vunpack.c.l.b16 %v2414
      %v2497 = vunpack.c.l.b16 %v2418
      %v2498 = vunpack.c.l.b16 %v2421
      %v2499 = vunpack.c.l.b16 %v2425
      %v2500 = vunpack.c.l.b16 %v2428
      %v2501 = vunpack.c.l.b16 %v2432
      %v2502 = vunpack.c.l.b16 %v2435
      %v2503 = vunpack.c.l.b16 %v2439
      %v2504 = vunpack.c.l.b16 %v2442
      %v2505 = vpack.c.b16 %v2474, %v2473
      %v2506 = vpack.c.b16 %v2476, %v2475
      %v2507 = vpack.c.b16 %v2478, %v2477
      %v2508 = vpack.c.b16 %v2480, %v2479
      %v2509 = vpack.c.b16 %v2482, %v2481
      %v2510 = vpack.c.b16 %v2484, %v2483
      %v2511 = vpack.c.b16 %v2486, %v2485
      %v2512 = vpack.c.b16 %v2488, %v2487
      %v2513 = vpack.c.b16 %v2490, %v2489
      %v2514 = vpack.c.b16 %v2492, %v2491
      %v2515 = vpack.c.b16 %v2494, %v2493
      %v2516 = vpack.c.b16 %v2496, %v2495
      %v2517 = vpack.c.b16 %v2498, %v2497
      %v2518 = vpack.c.b16 %v2500, %v2499
      %v2519 = vpack.c.b16 %v2502, %v2501
      %v2520 = vpack.c.b16 %v2504, %v2503
      %v2522 = vsel %vm663, %v2505, 0
      %v2525 = vsel %vm663, %v2506, 0
      %v2528 = vsel %vm663, %v2507, 0
      %v2531 = vsel %vm663, %v2508, 0
      %v2534 = vsel %vm663, %v2509, 0
      %v2537 = vsel %vm663, %v2510, 0
      %v2540 = vsel %vm663, %v2511, 0
      %v2543 = vsel %vm663, %v2512, 0
      %v2546 = vsel %vm663, %v2513, 0
      %v2549 = vsel %vm663, %v2514, 0
      %v2552 = vsel %vm663, %v2515, 0
      %v2555 = vsel %vm663, %v2516, 0
      %v2558 = vsel %vm663, %v2517, 0
      %v2561 = vsel %vm663, %v2518, 0
      %v2564 = vsel %vm663, %v2519, 0
      %v2567 = vsel %vm663, %v2520, 0
      %v2570 = vsel %vm712, %v2472, 0
      %2572 = vmatprep.subr.bf16.mxu0 0
      %2573 = vmatpush1.bf16.msra.mxu0 %v2570
      %2574 = vmatprep.subr.bf16.mxu0 0
      %2575 = vmatpush1.bf16.msra.mxu0 0
      %2576 = vmatprep.subr.bf16.mxu0 0
      %2577 = vmatpush1.bf16.msra.mxu0 0
      %2578 = vmatprep.subr.bf16.mxu0 0
      %2579 = vmatpush1.bf16.msra.mxu0 0
      %2580 = vmatprep.subr.bf16.mxu0 0
      %2581 = vmatpush1.bf16.msra.mxu0 0
      %2582 = vmatprep.subr.bf16.mxu0 0
      %2583 = vmatpush1.bf16.msra.mxu0 0
      %2584 = vmatprep.subr.bf16.mxu0 0
      %2585 = vmatpush1.bf16.msra.mxu0 0
      %2586 = vmatprep.subr.bf16.mxu0 0
      %2587 = vmatpush1.bf16.msra.mxu0 0
      %2588 = vmatprep.subr.bf16.mxu0 0
      %2589 = vmatpush1.bf16.msra.mxu0 0
      %2590 = vmatprep.subr.bf16.mxu0 0
      %2591 = vmatpush1.bf16.msra.mxu0 0
      %2592 = vmatprep.subr.bf16.mxu0 0
      %2593 = vmatpush1.bf16.msra.mxu0 0
      %2594 = vmatprep.subr.bf16.mxu0 0
      %2595 = vmatpush1.bf16.msra.mxu0 0
      %2596 = vmatprep.subr.bf16.mxu0 0
      %2597 = vmatpush1.bf16.msra.mxu0 0
      %2598 = vmatprep.subr.bf16.mxu0 0
      %2599 = vmatpush1.bf16.msra.mxu0 0
      %2600 = vmatprep.subr.bf16.mxu0 0
      %2601 = vmatpush1.bf16.msra.mxu0 0
      %2602 = vmatprep.subr.bf16.mxu0 0
      %2603 = vmatpush1.bf16.msra.mxu0 0
      %2604 = vmatprep.mubr.bf16.mxu0 0
      %2605 = vmatmul.mubr.bf16.gmra.mrb[0].mxu0 %v2522
      %v2606 = vpop.f32.mrb[0].mxu0
      %v2607 = vadd.f32 0.0, %v2606
      %v2608 = vpop.f32.mrb[0].mxu0
      %v2609 = vpop.f32.mrb[0].mxu0
      %v2610 = vadd.f32 0.0, %v2609
      %v2611 = vpop.f32.mrb[0].mxu0
      %2612 = vmatprep.mubr.bf16.mxu0 0
      %2613 = vmatmul.mubr.bf16.gmra.mrb[0].mxu0 %v2525
      %v2614 = vpop.f32.mrb[0].mxu0
      %v2615 = vadd.f32 0.0, %v2614
      %v2616 = vpop.f32.mrb[0].mxu0
      %v2617 = vpop.f32.mrb[0].mxu0
      %v2618 = vadd.f32 0.0, %v2617
      %v2619 = vpop.f32.mrb[0].mxu0
      %2620 = vmatprep.mubr.bf16.mxu0 0
      %2621 = vmatmul.mubr.bf16.gmra.mrb[0].mxu0 %v2528
      %v2622 = vpop.f32.mrb[0].mxu0
      %v2623 = vadd.f32 0.0, %v2622
      %v2624 = vpop.f32.mrb[0].mxu0
      %v2625 = vpop.f32.mrb[0].mxu0
      %v2626 = vadd.f32 0.0, %v2625
      %v2627 = vpop.f32.mrb[0].mxu0
      %2628 = vmatprep.mubr.bf16.mxu0 0
      %2629 = vmatmul.mubr.bf16.gmra.mrb[0].mxu0 %v2531
      %v2630 = vpop.f32.mrb[0].mxu0
      %v2631 = vadd.f32 0.0, %v2630
      %v2632 = vpop.f32.mrb[0].mxu0
      %v2633 = vpop.f32.mrb[0].mxu0
      %v2634 = vadd.f32 0.0, %v2633
      %v2635 = vpop.f32.mrb[0].mxu0
      %2636 = vmatprep.mubr.bf16.mxu0 0
      %2637 = vmatmul.mubr.bf16.gmra.mrb[0].mxu0 %v2534
      %v2638 = vpop.f32.mrb[0].mxu0
      %v2639 = vadd.f32 0.0, %v2638
      %v2640 = vpop.f32.mrb[0].mxu0
      %v2641 = vpop.f32.mrb[0].mxu0
      %v2642 = vadd.f32 0.0, %v2641
      %v2643 = vpop.f32.mrb[0].mxu0
      %2644 = vmatprep.mubr.bf16.mxu0 0
      %2645 = vmatmul.mubr.bf16.gmra.mrb[0].mxu0 %v2537
      %v2646 = vpop.f32.mrb[0].mxu0
      %v2647 = vadd.f32 0.0, %v2646
      %v2648 = vpop.f32.mrb[0].mxu0
      %v2649 = vpop.f32.mrb[0].mxu0
      %v2650 = vadd.f32 0.0, %v2649
      %v2651 = vpop.f32.mrb[0].mxu0
      %2652 = vmatprep.mubr.bf16.mxu0 0
      %2653 = vmatmul.mubr.bf16.gmra.mrb[0].mxu0 %v2540
      %v2654 = vpop.f32.mrb[0].mxu0
      %v2655 = vadd.f32 0.0, %v2654
      %v2656 = vpop.f32.mrb[0].mxu0
      %v2657 = vpop.f32.mrb[0].mxu0
      %v2658 = vadd.f32 0.0, %v2657
      %v2659 = vpop.f32.mrb[0].mxu0
      %2660 = vmatprep.mubr.bf16.mxu0 0
      %2661 = vmatmul.mubr.bf16.gmra.mrb[0].mxu0 %v2543
      %v2662 = vpop.f32.mrb[0].mxu0
      %v2663 = vadd.f32 0.0, %v2662
      %v2664 = vpop.f32.mrb[0].mxu0
      %v2665 = vpop.f32.mrb[0].mxu0
      %v2666 = vadd.f32 0.0, %v2665
      %v2667 = vpop.f32.mrb[0].mxu0
      %2668 = vmatprep.mubr.bf16.mxu0 0
      %2669 = vmatmul.mubr.bf16.gmra.mrb[0].mxu0 %v2546
      %v2670 = vpop.f32.mrb[0].mxu0
      %v2671 = vadd.f32 0.0, %v2670
      %v2672 = vpop.f32.mrb[0].mxu0
      %v2673 = vpop.f32.mrb[0].mxu0
      %v2674 = vadd.f32 0.0, %v2673
      %v2675 = vpop.f32.mrb[0].mxu0
      %2676 = vmatprep.mubr.bf16.mxu0 0
      %2677 = vmatmul.mubr.bf16.gmra.mrb[0].mxu0 %v2549
      %v2678 = vpop.f32.mrb[0].mxu0
      %v2679 = vadd.f32 0.0, %v2678
      %v2680 = vpop.f32.mrb[0].mxu0
      %v2681 = vpop.f32.mrb[0].mxu0
      %v2682 = vadd.f32 0.0, %v2681
      %v2683 = vpop.f32.mrb[0].mxu0
      %2684 = vmatprep.mubr.bf16.mxu0 0
      %2685 = vmatmul.mubr.bf16.gmra.mrb[0].mxu0 %v2552
      %v2686 = vpop.f32.mrb[0].mxu0
      %v2687 = vadd.f32 0.0, %v2686
      %v2688 = vpop.f32.mrb[0].mxu0
      %v2689 = vpop.f32.mrb[0].mxu0
      %v2690 = vadd.f32 0.0, %v2689
      %v2691 = vpop.f32.mrb[0].mxu0
      %2692 = vmatprep.mubr.bf16.mxu0 0
      %2693 = vmatmul.mubr.bf16.gmra.mrb[0].mxu0 %v2555
      %v2694 = vpop.f32.mrb[0].mxu0
      %v2695 = vadd.f32 0.0, %v2694
      %v2696 = vpop.f32.mrb[0].mxu0
      %v2697 = vpop.f32.mrb[0].mxu0
      %v2698 = vadd.f32 0.0, %v2697
      %v2699 = vpop.f32.mrb[0].mxu0
      %2700 = vmatprep.mubr.bf16.mxu0 0
      %2701 = vmatmul.mubr.bf16.gmra.mrb[0].mxu0 %v2558
      %v2702 = vpop.f32.mrb[0].mxu0
      %v2703 = vadd.f32 0.0, %v2702
      %v2704 = vpop.f32.mrb[0].mxu0
      %v2705 = vpop.f32.mrb[0].mxu0
      %v2706 = vadd.f32 0.0, %v2705
      %v2707 = vpop.f32.mrb[0].mxu0
      %2708 = vmatprep.mubr.bf16.mxu0 0
      %2709 = vmatmul.mubr.bf16.gmra.mrb[0].mxu0 %v2561
      %v2710 = vpop.f32.mrb[0].mxu0
      %v2711 = vadd.f32 0.0, %v2710
      %v2712 = vpop.f32.mrb[0].mxu0
      %v2713 = vpop.f32.mrb[0].mxu0
      %v2714 = vadd.f32 0.0, %v2713
      %v2715 = vpop.f32.mrb[0].mxu0
      %2716 = vmatprep.mubr.bf16.mxu0 0
      %2717 = vmatmul.mubr.bf16.gmra.mrb[0].mxu0 %v2564
      %v2718 = vpop.f32.mrb[0].mxu0
      %v2719 = vadd.f32 0.0, %v2718
      %v2720 = vpop.f32.mrb[0].mxu0
      %v2721 = vpop.f32.mrb[0].mxu0
      %v2722 = vadd.f32 0.0, %v2721
      %v2723 = vpop.f32.mrb[0].mxu0
      %2724 = vmatprep.mubr.bf16.mxu0 0
      %2725 = vmatmul.mubr.bf16.gmra.mrb[0].mxu0 %v2567
      %v2726 = vpop.f32.mrb[0].mxu0
      %v2727 = vadd.f32 0.0, %v2726
      %v2728 = vpop.f32.mrb[0].mxu0
      %v2729 = vpop.f32.mrb[0].mxu0
      %v2730 = vadd.f32 0.0, %v2729
      %v2731 = vpop.f32.mrb[0].mxu0
      %2732 = vdwg.mxu0
      %v2733 = vadd.f32 %v2216, %v2607
      %v2734 = vadd.f32 %v2217, %v2610
      %v2735 = vadd.f32 %v2218, %v2615
      %v2736 = vadd.f32 %v2219, %v2618
      %v2737 = vadd.f32 %v2220, %v2623
      %v2738 = vadd.f32 %v2221, %v2626
      %v2739 = vadd.f32 %v2222, %v2631
      %v2740 = vadd.f32 %v2223, %v2634
      %v2741 = vadd.f32 %v2224, %v2639
      %v2742 = vadd.f32 %v2225, %v2642
      %v2743 = vadd.f32 %v2226, %v2647
      %v2744 = vadd.f32 %v2227, %v2650
      %v2745 = vadd.f32 %v2228, %v2655
      %v2746 = vadd.f32 %v2229, %v2658
      %v2747 = vadd.f32 %v2230, %v2663
      %v2748 = vadd.f32 %v2231, %v2666
      %v2749 = vadd.f32 %v2232, %v2671
      %v2750 = vadd.f32 %v2233, %v2674
      %v2751 = vadd.f32 %v2234, %v2679
      %v2752 = vadd.f32 %v2235, %v2682
      %v2753 = vadd.f32 %v2236, %v2687
      %v2754 = vadd.f32 %v2237, %v2690
      %v2755 = vadd.f32 %v2238, %v2695
      %v2756 = vadd.f32 %v2239, %v2698
      %v2757 = vadd.f32 %v2240, %v2703
      %v2758 = vadd.f32 %v2241, %v2706
      %v2759 = vadd.f32 %v2242, %v2711
      %v2760 = vadd.f32 %v2243, %v2714
      %v2761 = vadd.f32 %v2244, %v2719
      %v2762 = vadd.f32 %v2245, %v2722
      %v2763 = vadd.f32 %v2246, %v2727
      %v2764 = vadd.f32 %v2247, %v2730
      %s2765 = scalar_lea.vmem %s2, 20
      %v2766 = vld [vmem:[%s2765] sm:$0x7]
      %v2767 = vunpack.c.l.b16 %v2446
      %v2768 = vunpack.c.l.b16 %v2449
      %v2769 = vunpack.c.l.b16 %v2453
      %v2770 = vunpack.c.l.b16 %v2456
      %v2771 = vpack.c.b16 %v2768, %v2767
      %v2772 = vpack.c.b16 %v2770, %v2769
      %v2774 = vsel %vm663, %v2771, 0
      %v2777 = vsel %vm663, %v2772, 0
      %v2780 = vsel %vm712, %v2766, 0
      %2782 = vmatprep.subr.bf16.mxu0 0
      %2783 = vmatpush1.bf16.msra.mxu0 %v2780
      %2784 = vmatprep.subr.bf16.mxu0 0
      %2785 = vmatpush1.bf16.msra.mxu0 0
      %2786 = vmatprep.subr.bf16.mxu0 0
      %2787 = vmatpush1.bf16.msra.mxu0 0
      %2788 = vmatprep.subr.bf16.mxu0 0
      %2789 = vmatpush1.bf16.msra.mxu0 0
      %2790 = vmatprep.subr.bf16.mxu0 0
      %2791 = vmatpush1.bf16.msra.mxu0 0
      %2792 = vmatprep.subr.bf16.mxu0 0
      %2793 = vmatpush1.bf16.msra.mxu0 0
      %2794 = vmatprep.subr.bf16.mxu0 0
      %2795 = vmatpush1.bf16.msra.mxu0 0
      %2796 = vmatprep.subr.bf16.mxu0 0
      %2797 = vmatpush1.bf16.msra.mxu0 0
      %2798 = vmatprep.subr.bf16.mxu0 0
      %2799 = vmatpush1.bf16.msra.mxu0 0
      %2800 = vmatprep.subr.bf16.mxu0 0
      %2801 = vmatpush1.bf16.msra.mxu0 0
      %2802 = vmatprep.subr.bf16.mxu0 0
      %2803 = vmatpush1.bf16.msra.mxu0 0
      %2804 = vmatprep.subr.bf16.mxu0 0
      %2805 = vmatpush1.bf16.msra.mxu0 0
      %2806 = vmatprep.subr.bf16.mxu0 0
      %2807 = vmatpush1.bf16.msra.mxu0 0
      %2808 = vmatprep.subr.bf16.mxu0 0
      %2809 = vmatpush1.bf16.msra.mxu0 0
      %2810 = vmatprep.subr.bf16.mxu0 0
      %2811 = vmatpush1.bf16.msra.mxu0 0
      %2812 = vmatprep.subr.bf16.mxu0 0
      %2813 = vmatpush1.bf16.msra.mxu0 0
      %2814 = vmatprep.mubr.bf16.mxu0 0
      %2815 = vmatmul.mubr.bf16.gmra.mrb[0].mxu0 %v2528
      %v2816 = vpop.f32.mrb[0].mxu0
      %v2817 = vadd.f32 0.0, %v2816
      %v2818 = vpop.f32.mrb[0].mxu0
      %v2819 = vpop.f32.mrb[0].mxu0
      %v2820 = vadd.f32 0.0, %v2819
      %v2821 = vpop.f32.mrb[0].mxu0
      %2822 = vmatprep.mubr.bf16.mxu0 0
      %2823 = vmatmul.mubr.bf16.gmra.mrb[0].mxu0 %v2531
      %v2824 = vpop.f32.mrb[0].mxu0
      %v2825 = vadd.f32 0.0, %v2824
      %v2826 = vpop.f32.mrb[0].mxu0
      %v2827 = vpop.f32.mrb[0].mxu0
      %v2828 = vadd.f32 0.0, %v2827
      %v2829 = vpop.f32.mrb[0].mxu0
      %2830 = vmatprep.mubr.bf16.mxu0 0
      %2831 = vmatmul.mubr.bf16.gmra.mrb[0].mxu0 %v2534
      %v2832 = vpop.f32.mrb[0].mxu0
      %v2833 = vadd.f32 0.0, %v2832
      %v2834 = vpop.f32.mrb[0].mxu0
      %v2835 = vpop.f32.mrb[0].mxu0
      %v2836 = vadd.f32 0.0, %v2835
      %v2837 = vpop.f32.mrb[0].mxu0
      %2838 = vmatprep.mubr.bf16.mxu0 0
      %2839 = vmatmul.mubr.bf16.gmra.mrb[0].mxu0 %v2537
      %v2840 = vpop.f32.mrb[0].mxu0
      %v2841 = vadd.f32 0.0, %v2840
      %v2842 = vpop.f32.mrb[0].mxu0
      %v2843 = vpop.f32.mrb[0].mxu0
      %v2844 = vadd.f32 0.0, %v2843
      %v2845 = vpop.f32.mrb[0].mxu0
      %2846 = vmatprep.mubr.bf16.mxu0 0
      %2847 = vmatmul.mubr.bf16.gmra.mrb[0].mxu0 %v2540
      %v2848 = vpop.f32.mrb[0].mxu0
      %v2849 = vadd.f32 0.0, %v2848
      %v2850 = vpop.f32.mrb[0].mxu0
      %v2851 = vpop.f32.mrb[0].mxu0
      %v2852 = vadd.f32 0.0, %v2851
      %v2853 = vpop.f32.mrb[0].mxu0
      %2854 = vmatprep.mubr.bf16.mxu0 0
      %2855 = vmatmul.mubr.bf16.gmra.mrb[0].mxu0 %v2543
      %v2856 = vpop.f32.mrb[0].mxu0
      %v2857 = vadd.f32 0.0, %v2856
      %v2858 = vpop.f32.mrb[0].mxu0
      %v2859 = vpop.f32.mrb[0].mxu0
      %v2860 = vadd.f32 0.0, %v2859
      %v2861 = vpop.f32.mrb[0].mxu0
      %2862 = vmatprep.mubr.bf16.mxu0 0
      %2863 = vmatmul.mubr.bf16.gmra.mrb[0].mxu0 %v2546
      %v2864 = vpop.f32.mrb[0].mxu0
      %v2865 = vadd.f32 0.0, %v2864
      %v2866 = vpop.f32.mrb[0].mxu0
      %v2867 = vpop.f32.mrb[0].mxu0
      %v2868 = vadd.f32 0.0, %v2867
      %v2869 = vpop.f32.mrb[0].mxu0
      %2870 = vmatprep.mubr.bf16.mxu0 0
      %2871 = vmatmul.mubr.bf16.gmra.mrb[0].mxu0 %v2549
      %v2872 = vpop.f32.mrb[0].mxu0
      %v2873 = vadd.f32 0.0, %v2872
      %v2874 = vpop.f32.mrb[0].mxu0
      %v2875 = vpop.f32.mrb[0].mxu0
      %v2876 = vadd.f32 0.0, %v2875
      %v2877 = vpop.f32.mrb[0].mxu0
      %2878 = vmatprep.mubr.bf16.mxu0 0
      %2879 = vmatmul.mubr.bf16.gmra.mrb[0].mxu0 %v2552
      %v2880 = vpop.f32.mrb[0].mxu0
      %v2881 = vadd.f32 0.0, %v2880
      %v2882 = vpop.f32.mrb[0].mxu0
      %v2883 = vpop.f32.mrb[0].mxu0
      %v2884 = vadd.f32 0.0, %v2883
      %v2885 = vpop.f32.mrb[0].mxu0
      %2886 = vmatprep.mubr.bf16.mxu0 0
      %2887 = vmatmul.mubr.bf16.gmra.mrb[0].mxu0 %v2555
      %v2888 = vpop.f32.mrb[0].mxu0
      %v2889 = vadd.f32 0.0, %v2888
      %v2890 = vpop.f32.mrb[0].mxu0
      %v2891 = vpop.f32.mrb[0].mxu0
      %v2892 = vadd.f32 0.0, %v2891
      %v2893 = vpop.f32.mrb[0].mxu0
      %2894 = vmatprep.mubr.bf16.mxu0 0
      %2895 = vmatmul.mubr.bf16.gmra.mrb[0].mxu0 %v2558
      %v2896 = vpop.f32.mrb[0].mxu0
      %v2897 = vadd.f32 0.0, %v2896
      %v2898 = vpop.f32.mrb[0].mxu0
      %v2899 = vpop.f32.mrb[0].mxu0
      %v2900 = vadd.f32 0.0, %v2899
      %v2901 = vpop.f32.mrb[0].mxu0
      %2902 = vmatprep.mubr.bf16.mxu0 0
      %2903 = vmatmul.mubr.bf16.gmra.mrb[0].mxu0 %v2561
      %v2904 = vpop.f32.mrb[0].mxu0
      %v2905 = vadd.f32 0.0, %v2904
      %v2906 = vpop.f32.mrb[0].mxu0
      %v2907 = vpop.f32.mrb[0].mxu0
      %v2908 = vadd.f32 0.0, %v2907
      %v2909 = vpop.f32.mrb[0].mxu0
      %2910 = vmatprep.mubr.bf16.mxu0 0
      %2911 = vmatmul.mubr.bf16.gmra.mrb[0].mxu0 %v2564
      %v2912 = vpop.f32.mrb[0].mxu0
      %v2913 = vadd.f32 0.0, %v2912
      %v2914 = vpop.f32.mrb[0].mxu0
      %v2915 = vpop.f32.mrb[0].mxu0
      %v2916 = vadd.f32 0.0, %v2915
      %v2917 = vpop.f32.mrb[0].mxu0
      %2918 = vmatprep.mubr.bf16.mxu0 0
      %2919 = vmatmul.mubr.bf16.gmra.mrb[0].mxu0 %v2567
      %v2920 = vpop.f32.mrb[0].mxu0
      %v2921 = vadd.f32 0.0, %v2920
      %v2922 = vpop.f32.mrb[0].mxu0
      %v2923 = vpop.f32.mrb[0].mxu0
      %v2924 = vadd.f32 0.0, %v2923
      %v2925 = vpop.f32.mrb[0].mxu0
      %2926 = vmatprep.mubr.bf16.mxu0 0
      %2927 = vmatmul.mubr.bf16.gmra.mrb[0].mxu0 %v2774
      %v2928 = vpop.f32.mrb[0].mxu0
      %v2929 = vadd.f32 0.0, %v2928
      %v2930 = vpop.f32.mrb[0].mxu0
      %v2931 = vpop.f32.mrb[0].mxu0
      %v2932 = vadd.f32 0.0, %v2931
      %v2933 = vpop.f32.mrb[0].mxu0
      %2934 = vmatprep.mubr.bf16.mxu0 0
      %2935 = vmatmul.mubr.bf16.gmra.mrb[0].mxu0 %v2777
      %v2936 = vpop.f32.mrb[0].mxu0
      %v2937 = vadd.f32 0.0, %v2936
      %v2938 = vpop.f32.mrb[0].mxu0
      %v2939 = vpop.f32.mrb[0].mxu0
      %v2940 = vadd.f32 0.0, %v2939
      %v2941 = vpop.f32.mrb[0].mxu0
      %2942 = vdwg.mxu0
      %v2943 = vadd.f32 %v2733, %v2817
      %v2944 = vadd.f32 %v2734, %v2820
      %v2945 = vadd.f32 %v2735, %v2825
      %v2946 = vadd.f32 %v2736, %v2828
      %v2947 = vadd.f32 %v2737, %v2833
      %v2948 = vadd.f32 %v2738, %v2836
      %v2949 = vadd.f32 %v2739, %v2841
      %v2950 = vadd.f32 %v2740, %v2844
      %v2951 = vadd.f32 %v2741, %v2849
      %v2952 = vadd.f32 %v2742, %v2852
      %v2953 = vadd.f32 %v2743, %v2857
      %v2954 = vadd.f32 %v2744, %v2860
      %v2955 = vadd.f32 %v2745, %v2865
      %v2956 = vadd.f32 %v2746, %v2868
      %v2957 = vadd.f32 %v2747, %v2873
      %v2958 = vadd.f32 %v2748, %v2876
      %v2959 = vadd.f32 %v2749, %v2881
      %v2960 = vadd.f32 %v2750, %v2884
      %v2961 = vadd.f32 %v2751, %v2889
      %v2962 = vadd.f32 %v2752, %v2892
      %v2963 = vadd.f32 %v2753, %v2897
      %v2964 = vadd.f32 %v2754, %v2900
      %v2965 = vadd.f32 %v2755, %v2905
      %v2966 = vadd.f32 %v2756, %v2908
      %v2967 = vadd.f32 %v2757, %v2913
      %v2968 = vadd.f32 %v2758, %v2916
      %v2969 = vadd.f32 %v2759, %v2921
      %v2970 = vadd.f32 %v2760, %v2924
      %v2971 = vadd.f32 %v2761, %v2929
      %v2972 = vadd.f32 %v2762, %v2932
      %v2973 = vadd.f32 %v2763, %v2937
      %v2974 = vadd.f32 %v2764, %v2940
      %s2975 = scalar_lea.vmem %s2, 32
      %v2976 = vld [vmem:[%s2975] sm:$0x7]
      %v2977 = vunpack.c.l.b16 %v2460
      %v2978 = vunpack.c.l.b16 %v2463
      %v2979 = vunpack.c.l.b16 %v2467
      %v2980 = vunpack.c.l.b16 %v2470
      %v2981 = vpack.c.b16 %v2978, %v2977
      %v2982 = vpack.c.b16 %v2980, %v2979
      %v2984 = vsel %vm663, %v2981, 0
      %v2987 = vsel %vm663, %v2982, 0
      %v2990 = vsel %vm712, %v2976, 0
      %2992 = vmatprep.subr.bf16.mxu0 0
      %2993 = vmatpush1.bf16.msra.mxu0 %v2990
      %2994 = vmatprep.subr.bf16.mxu0 0
      %2995 = vmatpush1.bf16.msra.mxu0 0
      %2996 = vmatprep.subr.bf16.mxu0 0
      %2997 = vmatpush1.bf16.msra.mxu0 0
      %2998 = vmatprep.subr.bf16.mxu0 0
      %2999 = vmatpush1.bf16.msra.mxu0 0
      %3000 = vmatprep.subr.bf16.mxu0 0
      %3001 = vmatpush1.bf16.msra.mxu0 0
      %3002 = vmatprep.subr.bf16.mxu0 0
      %3003 = vmatpush1.bf16.msra.mxu0 0
      %3004 = vmatprep.subr.bf16.mxu0 0
      %3005 = vmatpush1.bf16.msra.mxu0 0
      %3006 = vmatprep.subr.bf16.mxu0 0
      %3007 = vmatpush1.bf16.msra.mxu0 0
      %3008 = vmatprep.subr.bf16.mxu0 0
      %3009 = vmatpush1.bf16.msra.mxu0 0
      %3010 = vmatprep.subr.bf16.mxu0 0
      %3011 = vmatpush1.bf16.msra.mxu0 0
      %3012 = vmatprep.subr.bf16.mxu0 0
      %3013 = vmatpush1.bf16.msra.mxu0 0
      %3014 = vmatprep.subr.bf16.mxu0 0
      %3015 = vmatpush1.bf16.msra.mxu0 0
      %3016 = vmatprep.subr.bf16.mxu0 0
      %3017 = vmatpush1.bf16.msra.mxu0 0
      %3018 = vmatprep.subr.bf16.mxu0 0
      %3019 = vmatpush1.bf16.msra.mxu0 0
      %3020 = vmatprep.subr.bf16.mxu0 0
      %3021 = vmatpush1.bf16.msra.mxu0 0
      %3022 = vmatprep.subr.bf16.mxu0 0
      %3023 = vmatpush1.bf16.msra.mxu0 0
      %3024 = vmatprep.mubr.bf16.mxu0 0
      %3025 = vmatmul.mubr.bf16.gmra.mrb[0].mxu0 %v2534
      %v3026 = vpop.f32.mrb[0].mxu0
      %v3027 = vadd.f32 0.0, %v3026
      %v3028 = vpop.f32.mrb[0].mxu0
      %v3029 = vpop.f32.mrb[0].mxu0
      %v3030 = vadd.f32 0.0, %v3029
      %v3031 = vpop.f32.mrb[0].mxu0
      %3032 = vmatprep.mubr.bf16.mxu0 0
      %3033 = vmatmul.mubr.bf16.gmra.mrb[0].mxu0 %v2537
      %v3034 = vpop.f32.mrb[0].mxu0
      %v3035 = vadd.f32 0.0, %v3034
      %v3036 = vpop.f32.mrb[0].mxu0
      %v3037 = vpop.f32.mrb[0].mxu0
      %v3038 = vadd.f32 0.0, %v3037
      %v3039 = vpop.f32.mrb[0].mxu0
      %3040 = vmatprep.mubr.bf16.mxu0 0
      %3041 = vmatmul.mubr.bf16.gmra.mrb[0].mxu0 %v2540
      %v3042 = vpop.f32.mrb[0].mxu0
      %v3043 = vadd.f32 0.0, %v3042
      %v3044 = vpop.f32.mrb[0].mxu0
      %v3045 = vpop.f32.mrb[0].mxu0
      %v3046 = vadd.f32 0.0, %v3045
      %v3047 = vpop.f32.mrb[0].mxu0
      %3048 = vmatprep.mubr.bf16.mxu0 0
      %3049 = vmatmul.mubr.bf16.gmra.mrb[0].mxu0 %v2543
      %v3050 = vpop.f32.mrb[0].mxu0
      %v3051 = vadd.f32 0.0, %v3050
      %v3052 = vpop.f32.mrb[0].mxu0
      %v3053 = vpop.f32.mrb[0].mxu0
      %v3054 = vadd.f32 0.0, %v3053
      %v3055 = vpop.f32.mrb[0].mxu0
      %3056 = vmatprep.mubr.bf16.mxu0 0
      %3057 = vmatmul.mubr.bf16.gmra.mrb[0].mxu0 %v2546
      %v3058 = vpop.f32.mrb[0].mxu0
      %v3059 = vadd.f32 0.0, %v3058
      %v3060 = vpop.f32.mrb[0].mxu0
      %v3061 = vpop.f32.mrb[0].mxu0
      %v3062 = vadd.f32 0.0, %v3061
      %v3063 = vpop.f32.mrb[0].mxu0
      %3064 = vmatprep.mubr.bf16.mxu0 0
      %3065 = vmatmul.mubr.bf16.gmra.mrb[0].mxu0 %v2549
      %v3066 = vpop.f32.mrb[0].mxu0
      %v3067 = vadd.f32 0.0, %v3066
      %v3068 = vpop.f32.mrb[0].mxu0
      %v3069 = vpop.f32.mrb[0].mxu0
      %v3070 = vadd.f32 0.0, %v3069
      %v3071 = vpop.f32.mrb[0].mxu0
      %3072 = vmatprep.mubr.bf16.mxu0 0
      %3073 = vmatmul.mubr.bf16.gmra.mrb[0].mxu0 %v2552
      %v3074 = vpop.f32.mrb[0].mxu0
      %v3075 = vadd.f32 0.0, %v3074
      %v3076 = vpop.f32.mrb[0].mxu0
      %v3077 = vpop.f32.mrb[0].mxu0
      %v3078 = vadd.f32 0.0, %v3077
      %v3079 = vpop.f32.mrb[0].mxu0
      %3080 = vmatprep.mubr.bf16.mxu0 0
      %3081 = vmatmul.mubr.bf16.gmra.mrb[0].mxu0 %v2555
      %v3082 = vpop.f32.mrb[0].mxu0
      %v3083 = vadd.f32 0.0, %v3082
      %v3084 = vpop.f32.mrb[0].mxu0
      %v3085 = vpop.f32.mrb[0].mxu0
      %v3086 = vadd.f32 0.0, %v3085
      %v3087 = vpop.f32.mrb[0].mxu0
      %3088 = vmatprep.mubr.bf16.mxu0 0
      %3089 = vmatmul.mubr.bf16.gmra.mrb[0].mxu0 %v2558
      %v3090 = vpop.f32.mrb[0].mxu0
      %v3091 = vadd.f32 0.0, %v3090
      %v3092 = vpop.f32.mrb[0].mxu0
      %v3093 = vpop.f32.mrb[0].mxu0
      %v3094 = vadd.f32 0.0, %v3093
      %v3095 = vpop.f32.mrb[0].mxu0
      %3096 = vmatprep.mubr.bf16.mxu0 0
      %3097 = vmatmul.mubr.bf16.gmra.mrb[0].mxu0 %v2561
      %v3098 = vpop.f32.mrb[0].mxu0
      %v3099 = vadd.f32 0.0, %v3098
      %v3100 = vpop.f32.mrb[0].mxu0
      %v3101 = vpop.f32.mrb[0].mxu0
      %v3102 = vadd.f32 0.0, %v3101
      %v3103 = vpop.f32.mrb[0].mxu0
      %3104 = vmatprep.mubr.bf16.mxu0 0
      %3105 = vmatmul.mubr.bf16.gmra.mrb[0].mxu0 %v2564
      %v3106 = vpop.f32.mrb[0].mxu0
      %v3107 = vadd.f32 0.0, %v3106
      %v3108 = vpop.f32.mrb[0].mxu0
      %v3109 = vpop.f32.mrb[0].mxu0
      %v3110 = vadd.f32 0.0, %v3109
      %v3111 = vpop.f32.mrb[0].mxu0
      %3112 = vmatprep.mubr.bf16.mxu0 0
      %3113 = vmatmul.mubr.bf16.gmra.mrb[0].mxu0 %v2567
      %v3114 = vpop.f32.mrb[0].mxu0
      %v3115 = vadd.f32 0.0, %v3114
      %v3116 = vpop.f32.mrb[0].mxu0
      %v3117 = vpop.f32.mrb[0].mxu0
      %v3118 = vadd.f32 0.0, %v3117
      %v3119 = vpop.f32.mrb[0].mxu0
      %3120 = vmatprep.mubr.bf16.mxu0 0
      %3121 = vmatmul.mubr.bf16.gmra.mrb[0].mxu0 %v2774
      %v3122 = vpop.f32.mrb[0].mxu0
      %v3123 = vadd.f32 0.0, %v3122
      %v3124 = vpop.f32.mrb[0].mxu0
      %v3125 = vpop.f32.mrb[0].mxu0
      %v3126 = vadd.f32 0.0, %v3125
      %v3127 = vpop.f32.mrb[0].mxu0
      %3128 = vmatprep.mubr.bf16.mxu0 0
      %3129 = vmatmul.mubr.bf16.gmra.mrb[0].mxu0 %v2777
      %v3130 = vpop.f32.mrb[0].mxu0
      %v3131 = vadd.f32 0.0, %v3130
      %v3132 = vpop.f32.mrb[0].mxu0
      %v3133 = vpop.f32.mrb[0].mxu0
      %v3134 = vadd.f32 0.0, %v3133
      %v3135 = vpop.f32.mrb[0].mxu0
      %3136 = vmatprep.mubr.bf16.mxu0 0
      %3137 = vmatmul.mubr.bf16.gmra.mrb[0].mxu0 %v2984
      %v3138 = vpop.f32.mrb[0].mxu0
      %v3139 = vadd.f32 0.0, %v3138
      %v3140 = vpop.f32.mrb[0].mxu0
      %v3141 = vpop.f32.mrb[0].mxu0
      %v3142 = vadd.f32 0.0, %v3141
      %v3143 = vpop.f32.mrb[0].mxu0
      %3144 = vmatprep.mubr.bf16.mxu0 0
      %3145 = vmatmul.mubr.bf16.gmra.mrb[0].mxu0 %v2987
      %v3146 = vpop.f32.mrb[0].mxu0
      %v3147 = vadd.f32 0.0, %v3146
      %v3148 = vpop.f32.mrb[0].mxu0
      %v3149 = vpop.f32.mrb[0].mxu0
      %v3150 = vadd.f32 0.0, %v3149
      %v3151 = vpop.f32.mrb[0].mxu0
      %3152 = vdwg.mxu0
      %v3153 = vadd.f32 %v2943, %v3027
      %v3154 = vadd.f32 %v2944, %v3030
      %v3155 = vadd.f32 %v2945, %v3035
      %v3156 = vadd.f32 %v2946, %v3038
      %v3157 = vadd.f32 %v2947, %v3043
      %v3158 = vadd.f32 %v2948, %v3046
      %v3159 = vadd.f32 %v2949, %v3051
      %v3160 = vadd.f32 %v2950, %v3054
      %v3161 = vadd.f32 %v2951, %v3059
      %v3162 = vadd.f32 %v2952, %v3062
      %v3163 = vadd.f32 %v2953, %v3067
      %v3164 = vadd.f32 %v2954, %v3070
      %v3165 = vadd.f32 %v2955, %v3075
      %v3166 = vadd.f32 %v2956, %v3078
      %v3167 = vadd.f32 %v2957, %v3083
      %v3168 = vadd.f32 %v2958, %v3086
      %v3169 = vadd.f32 %v2959, %v3091
      %v3170 = vadd.f32 %v2960, %v3094
      %v3171 = vadd.f32 %v2961, %v3099
      %v3172 = vadd.f32 %v2962, %v3102
      %v3173 = vadd.f32 %v2963, %v3107
      %v3174 = vadd.f32 %v2964, %v3110
      %v3175 = vadd.f32 %v2965, %v3115
      %v3176 = vadd.f32 %v2966, %v3118
      %v3177 = vadd.f32 %v2967, %v3123
      %v3178 = vadd.f32 %v2968, %v3126
      %v3179 = vadd.f32 %v2969, %v3131
      %v3180 = vadd.f32 %v2970, %v3134
      %v3181 = vadd.f32 %v2971, %v3139
      %v3182 = vadd.f32 %v2972, %v3142
      %v3183 = vadd.f32 %v2973, %v3147
      %v3184 = vadd.f32 %v2974, %v3150
      %v3185 = vld [vmem:[%s239] sm:$0xf]
      %v3186 = vld [vmem:[%s239 + $0x4] sm:$0xf]
      %v3187 = vld [vmem:[%s239 + $0x8] sm:$0xf]
      %v3188 = vld [vmem:[%s239 + $0xc] sm:$0xf]
      %v3189 = vld [vmem:[%s239 + $0x10] sm:$0xf]
      %v3190 = vld [vmem:[%s239 + $0x14] sm:$0xf]
      %v3191 = vld [vmem:[%s239 + $0x18] sm:$0xf]
      %v3192 = vld [vmem:[%s239 + $0x1c] sm:$0xf]
      %v3193 = vld [vmem:[%s239 + $0x20] sm:$0xf]
      %v3194 = vld [vmem:[%s239 + $0x24] sm:$0xf]
      %v3195 = vld [vmem:[%s239 + $0x28] sm:$0xf]
      %v3196 = vld [vmem:[%s239 + $0x2c] sm:$0xf]
      %v3197 = vld [vmem:[%s239 + $0x30] sm:$0xf]
      %v3198 = vld [vmem:[%s239 + $0x34] sm:$0xf]
      %v3199 = vld [vmem:[%s239 + $0x38] sm:$0xf]
      %v3200 = vld [vmem:[%s239 + $0x3c] sm:$0xf]
      %v3201 = vld [vmem:[%s239 + $0x40] sm:$0xf]
      %v3202 = vld [vmem:[%s239 + $0x44] sm:$0xf]
      %v3203 = vld [vmem:[%s239 + $0x48] sm:$0xf]
      %v3204 = vld [vmem:[%s239 + $0x4c] sm:$0xf]
      %v3205 = vld [vmem:[%s239 + $0x50] sm:$0xf]
      %v3206 = vld [vmem:[%s239 + $0x54] sm:$0xf]
      %v3207 = vld [vmem:[%s239 + $0x58] sm:$0xf]
      %v3208 = vld [vmem:[%s239 + $0x5c] sm:$0xf]
      %v3209 = vld [vmem:[%s239 + $0x60] sm:$0xf]
      %v3210 = vld [vmem:[%s239 + $0x64] sm:$0xf]
      %v3211 = vld [vmem:[%s239 + $0x68] sm:$0xf]
      %v3212 = vld [vmem:[%s239 + $0x6c] sm:$0xf]
      %v3213 = vld [vmem:[%s239 + $0x70] sm:$0xf]
      %v3214 = vld [vmem:[%s239 + $0x74] sm:$0xf]
      %v3215 = vld [vmem:[%s239 + $0x78] sm:$0xf]
      %v3216 = vld [vmem:[%s239 + $0x7c] sm:$0xf]
      %v3217 = vld [vmem:[%s3] sm:$0x3]
      %v3250 = vunpack.c.l.b16 %v3185
      %v3251 = vunpack.c.l.b16 %v3186
      %v3252 = vunpack.c.l.b16 %v3187
      %v3253 = vunpack.c.l.b16 %v3188
      %v3254 = vunpack.c.l.b16 %v3189
      %v3255 = vunpack.c.l.b16 %v3190
      %v3256 = vunpack.c.l.b16 %v3191
      %v3257 = vunpack.c.l.b16 %v3192
      %v3258 = vunpack.c.l.b16 %v3193
      %v3259 = vunpack.c.l.b16 %v3194
      %v3260 = vunpack.c.l.b16 %v3195
      %v3261 = vunpack.c.l.b16 %v3196
      %v3262 = vunpack.c.l.b16 %v3197
      %v3263 = vunpack.c.l.b16 %v3198
      %v3264 = vunpack.c.l.b16 %v3199
      %v3265 = vunpack.c.l.b16 %v3200
      %v3266 = vunpack.c.l.b16 %v3201
      %v3267 = vunpack.c.l.b16 %v3202
      %v3268 = vunpack.c.l.b16 %v3203
      %v3269 = vunpack.c.l.b16 %v3204
      %v3270 = vunpack.c.l.b16 %v3205
      %v3271 = vunpack.c.l.b16 %v3206
      %v3272 = vunpack.c.l.b16 %v3207
      %v3273 = vunpack.c.l.b16 %v3208
      %v3274 = vunpack.c.l.b16 %v3209
      %v3275 = vunpack.c.l.b16 %v3210
      %v3276 = vunpack.c.l.b16 %v3211
      %v3277 = vunpack.c.l.b16 %v3212
      %v3278 = vunpack.c.l.b16 %v3213
      %v3279 = vunpack.c.l.b16 %v3214
      %v3280 = vunpack.c.l.b16 %v3215
      %v3281 = vunpack.c.l.b16 %v3216
      %v3282 = vpack.c.b16 %v3251, %v3250
      %v3283 = vpack.c.b16 %v3253, %v3252
      %v3284 = vpack.c.b16 %v3255, %v3254
      %v3285 = vpack.c.b16 %v3257, %v3256
      %v3286 = vpack.c.b16 %v3259, %v3258
      %v3287 = vpack.c.b16 %v3261, %v3260
      %v3288 = vpack.c.b16 %v3263, %v3262
      %v3289 = vpack.c.b16 %v3265, %v3264
      %v3290 = vpack.c.b16 %v3267, %v3266
      %v3291 = vpack.c.b16 %v3269, %v3268
      %v3292 = vpack.c.b16 %v3271, %v3270
      %v3293 = vpack.c.b16 %v3273, %v3272
      %v3294 = vpack.c.b16 %v3275, %v3274
      %v3295 = vpack.c.b16 %v3277, %v3276
      %v3296 = vpack.c.b16 %v3279, %v3278
      %v3297 = vpack.c.b16 %v3281, %v3280
      %vm3298 = vcmask 31744
      %v3300 = vsel %vm3298, %v3282, 0
      %v3303 = vsel %vm3298, %v3283, 0
      %v3306 = vsel %vm3298, %v3284, 0
      %v3309 = vsel %vm3298, %v3285, 0
      %v3312 = vsel %vm3298, %v3286, 0
      %v3315 = vsel %vm3298, %v3287, 0
      %v3318 = vsel %vm3298, %v3288, 0
      %v3321 = vsel %vm3298, %v3289, 0
      %v3324 = vsel %vm3298, %v3290, 0
      %v3327 = vsel %vm3298, %v3291, 0
      %v3330 = vsel %vm3298, %v3292, 0
      %v3333 = vsel %vm3298, %v3293, 0
      %v3336 = vsel %vm3298, %v3294, 0
      %v3339 = vsel %vm3298, %v3295, 0
      %v3342 = vsel %vm3298, %v3296, 0
      %v3345 = vsel %vm3298, %v3297, 0
      %vm3347 = vcmask 1041408
      %v3349 = vsel %vm3347, %v3217, 0
      %3351 = vmatprep.subr.bf16.mxu0 0
      %3352 = vmatpush1.bf16.msra.mxu0 %v3349
      %3353 = vmatprep.subr.bf16.mxu0 0
      %3354 = vmatpush1.bf16.msra.mxu0 0
      %3355 = vmatprep.subr.bf16.mxu0 0
      %3356 = vmatpush1.bf16.msra.mxu0 0
      %3357 = vmatprep.subr.bf16.mxu0 0
      %3358 = vmatpush1.bf16.msra.mxu0 0
      %3359 = vmatprep.subr.bf16.mxu0 0
      %3360 = vmatpush1.bf16.msra.mxu0 0
      %3361 = vmatprep.subr.bf16.mxu0 0
      %3362 = vmatpush1.bf16.msra.mxu0 0
      %3363 = vmatprep.subr.bf16.mxu0 0
      %3364 = vmatpush1.bf16.msra.mxu0 0
      %3365 = vmatprep.subr.bf16.mxu0 0
      %3366 = vmatpush1.bf16.msra.mxu0 0
      %3367 = vmatprep.subr.bf16.mxu0 0
      %3368 = vmatpush1.bf16.msra.mxu0 0
      %3369 = vmatprep.subr.bf16.mxu0 0
      %3370 = vmatpush1.bf16.msra.mxu0 0
      %3371 = vmatprep.subr.bf16.mxu0 0
      %3372 = vmatpush1.bf16.msra.mxu0 0
      %3373 = vmatprep.subr.bf16.mxu0 0
      %3374 = vmatpush1.bf16.msra.mxu0 0
      %3375 = vmatprep.subr.bf16.mxu0 0
      %3376 = vmatpush1.bf16.msra.mxu0 0
      %3377 = vmatprep.subr.bf16.mxu0 0
      %3378 = vmatpush1.bf16.msra.mxu0 0
      %3379 = vmatprep.subr.bf16.mxu0 0
      %3380 = vmatpush1.bf16.msra.mxu0 0
      %3381 = vmatprep.subr.bf16.mxu0 0
      %3382 = vmatpush1.bf16.msra.mxu0 0
      %3383 = vmatprep.mubr.bf16.mxu0 0
      %3384 = vmatmul.mubr.bf16.gmra.mrb[0].mxu0 %v3300
      %v3385 = vpop.f32.mrb[0].mxu0
      %v3386 = vadd.f32 0.0, %v3385
      %v3387 = vpop.f32.mrb[0].mxu0
      %v3388 = vpop.f32.mrb[0].mxu0
      %v3389 = vadd.f32 0.0, %v3388
      %v3390 = vpop.f32.mrb[0].mxu0
      %3391 = vmatprep.mubr.bf16.mxu0 0
      %3392 = vmatmul.mubr.bf16.gmra.mrb[0].mxu0 %v3303
      %v3393 = vpop.f32.mrb[0].mxu0
      %v3394 = vadd.f32 0.0, %v3393
      %v3395 = vpop.f32.mrb[0].mxu0
      %v3396 = vpop.f32.mrb[0].mxu0
      %v3397 = vadd.f32 0.0, %v3396
      %v3398 = vpop.f32.mrb[0].mxu0
      %3399 = vmatprep.mubr.bf16.mxu0 0
      %3400 = vmatmul.mubr.bf16.gmra.mrb[0].mxu0 %v3306
      %v3401 = vpop.f32.mrb[0].mxu0
      %v3402 = vadd.f32 0.0, %v3401
      %v3403 = vpop.f32.mrb[0].mxu0
      %v3404 = vpop.f32.mrb[0].mxu0
      %v3405 = vadd.f32 0.0, %v3404
      %v3406 = vpop.f32.mrb[0].mxu0
      %3407 = vmatprep.mubr.bf16.mxu0 0
      %3408 = vmatmul.mubr.bf16.gmra.mrb[0].mxu0 %v3309
      %v3409 = vpop.f32.mrb[0].mxu0
      %v3410 = vadd.f32 0.0, %v3409
      %v3411 = vpop.f32.mrb[0].mxu0
      %v3412 = vpop.f32.mrb[0].mxu0
      %v3413 = vadd.f32 0.0, %v3412
      %v3414 = vpop.f32.mrb[0].mxu0
      %3415 = vmatprep.mubr.bf16.mxu0 0
      %3416 = vmatmul.mubr.bf16.gmra.mrb[0].mxu0 %v3312
      %v3417 = vpop.f32.mrb[0].mxu0
      %v3418 = vadd.f32 0.0, %v3417
      %v3419 = vpop.f32.mrb[0].mxu0
      %v3420 = vpop.f32.mrb[0].mxu0
      %v3421 = vadd.f32 0.0, %v3420
      %v3422 = vpop.f32.mrb[0].mxu0
      %3423 = vmatprep.mubr.bf16.mxu0 0
      %3424 = vmatmul.mubr.bf16.gmra.mrb[0].mxu0 %v3315
      %v3425 = vpop.f32.mrb[0].mxu0
      %v3426 = vadd.f32 0.0, %v3425
      %v3427 = vpop.f32.mrb[0].mxu0
      %v3428 = vpop.f32.mrb[0].mxu0
      %v3429 = vadd.f32 0.0, %v3428
      %v3430 = vpop.f32.mrb[0].mxu0
      %3431 = vmatprep.mubr.bf16.mxu0 0
      %3432 = vmatmul.mubr.bf16.gmra.mrb[0].mxu0 %v3318
      %v3433 = vpop.f32.mrb[0].mxu0
      %v3434 = vadd.f32 0.0, %v3433
      %v3435 = vpop.f32.mrb[0].mxu0
      %v3436 = vpop.f32.mrb[0].mxu0
      %v3437 = vadd.f32 0.0, %v3436
      %v3438 = vpop.f32.mrb[0].mxu0
      %3439 = vmatprep.mubr.bf16.mxu0 0
      %3440 = vmatmul.mubr.bf16.gmra.mrb[0].mxu0 %v3321
      %v3441 = vpop.f32.mrb[0].mxu0
      %v3442 = vadd.f32 0.0, %v3441
      %v3443 = vpop.f32.mrb[0].mxu0
      %v3444 = vpop.f32.mrb[0].mxu0
      %v3445 = vadd.f32 0.0, %v3444
      %v3446 = vpop.f32.mrb[0].mxu0
      %3447 = vmatprep.mubr.bf16.mxu0 0
      %3448 = vmatmul.mubr.bf16.gmra.mrb[0].mxu0 %v3324
      %v3449 = vpop.f32.mrb[0].mxu0
      %v3450 = vadd.f32 0.0, %v3449
      %v3451 = vpop.f32.mrb[0].mxu0
      %v3452 = vpop.f32.mrb[0].mxu0
      %v3453 = vadd.f32 0.0, %v3452
      %v3454 = vpop.f32.mrb[0].mxu0
      %3455 = vmatprep.mubr.bf16.mxu0 0
      %3456 = vmatmul.mubr.bf16.gmra.mrb[0].mxu0 %v3327
      %v3457 = vpop.f32.mrb[0].mxu0
      %v3458 = vadd.f32 0.0, %v3457
      %v3459 = vpop.f32.mrb[0].mxu0
      %v3460 = vpop.f32.mrb[0].mxu0
      %v3461 = vadd.f32 0.0, %v3460
      %v3462 = vpop.f32.mrb[0].mxu0
      %3463 = vmatprep.mubr.bf16.mxu0 0
      %3464 = vmatmul.mubr.bf16.gmra.mrb[0].mxu0 %v3330
      %v3465 = vpop.f32.mrb[0].mxu0
      %v3466 = vadd.f32 0.0, %v3465
      %v3467 = vpop.f32.mrb[0].mxu0
      %v3468 = vpop.f32.mrb[0].mxu0
      %v3469 = vadd.f32 0.0, %v3468
      %v3470 = vpop.f32.mrb[0].mxu0
      %3471 = vmatprep.mubr.bf16.mxu0 0
      %3472 = vmatmul.mubr.bf16.gmra.mrb[0].mxu0 %v3333
      %v3473 = vpop.f32.mrb[0].mxu0
      %v3474 = vadd.f32 0.0, %v3473
      %v3475 = vpop.f32.mrb[0].mxu0
      %v3476 = vpop.f32.mrb[0].mxu0
      %v3477 = vadd.f32 0.0, %v3476
      %v3478 = vpop.f32.mrb[0].mxu0
      %3479 = vmatprep.mubr.bf16.mxu0 0
      %3480 = vmatmul.mubr.bf16.gmra.mrb[0].mxu0 %v3336
      %v3481 = vpop.f32.mrb[0].mxu0
      %v3482 = vadd.f32 0.0, %v3481
      %v3483 = vpop.f32.mrb[0].mxu0
      %v3484 = vpop.f32.mrb[0].mxu0
      %v3485 = vadd.f32 0.0, %v3484
      %v3486 = vpop.f32.mrb[0].mxu0
      %3487 = vmatprep.mubr.bf16.mxu0 0
      %3488 = vmatmul.mubr.bf16.gmra.mrb[0].mxu0 %v3339
      %v3489 = vpop.f32.mrb[0].mxu0
      %v3490 = vadd.f32 0.0, %v3489
      %v3491 = vpop.f32.mrb[0].mxu0
      %v3492 = vpop.f32.mrb[0].mxu0
      %v3493 = vadd.f32 0.0, %v3492
      %v3494 = vpop.f32.mrb[0].mxu0
      %3495 = vmatprep.mubr.bf16.mxu0 0
      %3496 = vmatmul.mubr.bf16.gmra.mrb[0].mxu0 %v3342
      %v3497 = vpop.f32.mrb[0].mxu0
      %v3498 = vadd.f32 0.0, %v3497
      %v3499 = vpop.f32.mrb[0].mxu0
      %v3500 = vpop.f32.mrb[0].mxu0
      %v3501 = vadd.f32 0.0, %v3500
      %v3502 = vpop.f32.mrb[0].mxu0
      %3503 = vmatprep.mubr.bf16.mxu0 0
      %3504 = vmatmul.mubr.bf16.gmra.mrb[0].mxu0 %v3345
      %v3505 = vpop.f32.mrb[0].mxu0
      %v3506 = vadd.f32 0.0, %v3505
      %v3507 = vpop.f32.mrb[0].mxu0
      %v3508 = vpop.f32.mrb[0].mxu0
      %v3509 = vadd.f32 0.0, %v3508
      %v3510 = vpop.f32.mrb[0].mxu0
      %3511 = vdwg.mxu0
      %v3512 = vadd.f32 %v3153, %v3386
      %v3513 = vadd.f32 %v3154, %v3389
      %v3514 = vadd.f32 %v3155, %v3394
      %v3515 = vadd.f32 %v3156, %v3397
      %v3516 = vadd.f32 %v3157, %v3402
      %v3517 = vadd.f32 %v3158, %v3405
      %v3518 = vadd.f32 %v3159, %v3410
      %v3519 = vadd.f32 %v3160, %v3413
      %v3520 = vadd.f32 %v3161, %v3418
      %v3521 = vadd.f32 %v3162, %v3421
      %v3522 = vadd.f32 %v3163, %v3426
      %v3523 = vadd.f32 %v3164, %v3429
      %v3524 = vadd.f32 %v3165, %v3434
      %v3525 = vadd.f32 %v3166, %v3437
      %v3526 = vadd.f32 %v3167, %v3442
      %v3527 = vadd.f32 %v3168, %v3445
      %v3528 = vadd.f32 %v3169, %v3450
      %v3529 = vadd.f32 %v3170, %v3453
      %v3530 = vadd.f32 %v3171, %v3458
      %v3531 = vadd.f32 %v3172, %v3461
      %v3532 = vadd.f32 %v3173, %v3466
      %v3533 = vadd.f32 %v3174, %v3469
      %v3534 = vadd.f32 %v3175, %v3474
      %v3535 = vadd.f32 %v3176, %v3477
      %v3536 = vadd.f32 %v3177, %v3482
      %v3537 = vadd.f32 %v3178, %v3485
      %v3538 = vadd.f32 %v3179, %v3490
      %v3539 = vadd.f32 %v3180, %v3493
      %v3540 = vadd.f32 %v3181, %v3498
      %v3541 = vadd.f32 %v3182, %v3501
      %v3542 = vadd.f32 %v3183, %v3506
      %v3543 = vadd.f32 %v3184, %v3509
      %v3544 = vld [vmem:[%s4] sm:$0x1]
      %v3546 = vlaneseq
      %v3547 = vshrl.u32 %v3546, 7
      %v3548 = vsub.s32 0, %v3547
      %v3549 = vrot.slane %v3544, %v3548
      %v3551 = vadd.f32 %v3512, %v3549
      %v3552 = vadd.f32 %v3513, %v3549
      %v3553 = vadd.f32 %v3514, %v3549
      %v3554 = vadd.f32 %v3515, %v3549
      %v3555 = vadd.f32 %v3516, %v3549
      %v3556 = vadd.f32 %v3517, %v3549
      %v3557 = vadd.f32 %v3518, %v3549
      %v3558 = vadd.f32 %v3519, %v3549
      %v3559 = vadd.f32 %v3520, %v3549
      %v3560 = vadd.f32 %v3521, %v3549
      %v3561 = vadd.f32 %v3522, %v3549
      %v3562 = vadd.f32 %v3523, %v3549
      %v3563 = vadd.f32 %v3524, %v3549
      %v3564 = vadd.f32 %v3525, %v3549
      %v3565 = vadd.f32 %v3526, %v3549
      %v3566 = vadd.f32 %v3527, %v3549
      %v3567 = vadd.f32 %v3528, %v3549
      %v3568 = vadd.f32 %v3529, %v3549
      %v3569 = vadd.f32 %v3530, %v3549
      %v3570 = vadd.f32 %v3531, %v3549
      %v3571 = vadd.f32 %v3532, %v3549
      %v3572 = vadd.f32 %v3533, %v3549
      %v3573 = vadd.f32 %v3534, %v3549
      %v3574 = vadd.f32 %v3535, %v3549
      %v3575 = vadd.f32 %v3536, %v3549
      %v3576 = vadd.f32 %v3537, %v3549
      %v3577 = vadd.f32 %v3538, %v3549
      %v3578 = vadd.f32 %v3539, %v3549
      %v3579 = vadd.f32 %v3540, %v3549
      %v3580 = vadd.f32 %v3541, %v3549
      %v3581 = vadd.f32 %v3542, %v3549
      %v3582 = vadd.f32 %v3543, %v3549
      %v3583 = vlaneseq
      %v3584 = vand.u32 %v3583, 127
      %vm3585 = vcmp.lt.s32.totalorder %v3584, 8
      %v3586 = vmax.f32 %v3551, 0.0
      %v3587 = vmax.f32 %v3552, 0.0
      %v3588 = vmax.f32 %v3553, 0.0
      %v3589 = vmax.f32 %v3554, 0.0
      %v3590 = vmax.f32 %v3555, 0.0
      %v3591 = vmax.f32 %v3556, 0.0
      %v3592 = vmax.f32 %v3557, 0.0
      %v3593 = vmax.f32 %v3558, 0.0
      %v3594 = vmax.f32 %v3559, 0.0
      %v3595 = vmax.f32 %v3560, 0.0
      %v3596 = vmax.f32 %v3561, 0.0
      %v3597 = vmax.f32 %v3562, 0.0
      %v3598 = vmax.f32 %v3563, 0.0
      %v3599 = vmax.f32 %v3564, 0.0
      %v3600 = vmax.f32 %v3565, 0.0
      %v3601 = vmax.f32 %v3566, 0.0
      %v3602 = vmax.f32 %v3567, 0.0
      %v3603 = vmax.f32 %v3568, 0.0
      %v3604 = vmax.f32 %v3569, 0.0
      %v3605 = vmax.f32 %v3570, 0.0
      %v3606 = vmax.f32 %v3571, 0.0
      %v3607 = vmax.f32 %v3572, 0.0
      %v3608 = vmax.f32 %v3573, 0.0
      %v3609 = vmax.f32 %v3574, 0.0
      %v3610 = vmax.f32 %v3575, 0.0
      %v3611 = vmax.f32 %v3576, 0.0
      %v3612 = vmax.f32 %v3577, 0.0
      %v3613 = vmax.f32 %v3578, 0.0
      %v3614 = vmax.f32 %v3579, 0.0
      %v3615 = vmax.f32 %v3580, 0.0
      %v3616 = vmax.f32 %v3581, 0.0
      %v3617 = vmax.f32 %v3582, 0.0
      %v3618 = vsel %vm3585, 1, 0
      %vm3619 = vcmp.eq.s32.totalorder %v3618, 1
      %v3620 = vsel %vm3619, %v3586, %v3551
      %v3621 = vsel %vm3619, %v3587, %v3552
      %v3622 = vsel %vm3619, %v3588, %v3553
      %v3623 = vsel %vm3619, %v3589, %v3554
      %v3624 = vsel %vm3619, %v3590, %v3555
      %v3625 = vsel %vm3619, %v3591, %v3556
      %v3626 = vsel %vm3619, %v3592, %v3557
      %v3627 = vsel %vm3619, %v3593, %v3558
      %v3628 = vsel %vm3619, %v3594, %v3559
      %v3629 = vsel %vm3619, %v3595, %v3560
      %v3630 = vsel %vm3619, %v3596, %v3561
      %v3631 = vsel %vm3619, %v3597, %v3562
      %v3632 = vsel %vm3619, %v3598, %v3563
      %v3633 = vsel %vm3619, %v3599, %v3564
      %v3634 = vsel %vm3619, %v3600, %v3565
      %v3635 = vsel %vm3619, %v3601, %v3566
      %v3636 = vsel %vm3619, %v3602, %v3567
      %v3637 = vsel %vm3619, %v3603, %v3568
      %v3638 = vsel %vm3619, %v3604, %v3569
      %v3639 = vsel %vm3619, %v3605, %v3570
      %v3640 = vsel %vm3619, %v3606, %v3571
      %v3641 = vsel %vm3619, %v3607, %v3572
      %v3642 = vsel %vm3619, %v3608, %v3573
      %v3643 = vsel %vm3619, %v3609, %v3574
      %v3644 = vsel %vm3619, %v3610, %v3575
      %v3645 = vsel %vm3619, %v3611, %v3576
      %v3646 = vsel %vm3619, %v3612, %v3577
      %v3647 = vsel %vm3619, %v3613, %v3578
      %v3648 = vsel %vm3619, %v3614, %v3579
      %v3649 = vsel %vm3619, %v3615, %v3580
      %v3650 = vsel %vm3619, %v3616, %v3581
      %v3651 = vsel %vm3619, %v3617, %v3582
      %vm3652 = vcmask 105472
      %3653 = vst.msk [vmem:[%s244] sm:$0xff] %vm3652, %v3620
      %3654 = vst.msk [vmem:[%s244 + $0x8] sm:$0xff] %vm3652, %v3621
      %3655 = vst.msk [vmem:[%s244 + $0x10] sm:$0xff] %vm3652, %v3622
      %3656 = vst.msk [vmem:[%s244 + $0x18] sm:$0xff] %vm3652, %v3623
      %3657 = vst.msk [vmem:[%s244 + $0x20] sm:$0xff] %vm3652, %v3624
      %3658 = vst.msk [vmem:[%s244 + $0x28] sm:$0xff] %vm3652, %v3625
      %3659 = vst.msk [vmem:[%s244 + $0x30] sm:$0xff] %vm3652, %v3626
      %3660 = vst.msk [vmem:[%s244 + $0x38] sm:$0xff] %vm3652, %v3627
      %3661 = vst.msk [vmem:[%s244 + $0x40] sm:$0xff] %vm3652, %v3628
      %3662 = vst.msk [vmem:[%s244 + $0x48] sm:$0xff] %vm3652, %v3629
      %3663 = vst.msk [vmem:[%s244 + $0x50] sm:$0xff] %vm3652, %v3630
      %3664 = vst.msk [vmem:[%s244 + $0x58] sm:$0xff] %vm3652, %v3631
      %3665 = vst.msk [vmem:[%s244 + $0x60] sm:$0xff] %vm3652, %v3632
      %3666 = vst.msk [vmem:[%s244 + $0x68] sm:$0xff] %vm3652, %v3633
      %3667 = vst.msk [vmem:[%s244 + $0x70] sm:$0xff] %vm3652, %v3634
      %3668 = vst.msk [vmem:[%s244 + $0x78] sm:$0xff] %vm3652, %v3635
      %3669 = vst.msk [vmem:[%s244 + $0x80] sm:$0xff] %vm3652, %v3636
      %3670 = vst.msk [vmem:[%s244 + $0x88] sm:$0xff] %vm3652, %v3637
      %3671 = vst.msk [vmem:[%s244 + $0x90] sm:$0xff] %vm3652, %v3638
      %3672 = vst.msk [vmem:[%s244 + $0x98] sm:$0xff] %vm3652, %v3639
      %3673 = vst.msk [vmem:[%s244 + $0xa0] sm:$0xff] %vm3652, %v3640
      %3674 = vst.msk [vmem:[%s244 + $0xa8] sm:$0xff] %vm3652, %v3641
      %3675 = vst.msk [vmem:[%s244 + $0xb0] sm:$0xff] %vm3652, %v3642
      %3676 = vst.msk [vmem:[%s244 + $0xb8] sm:$0xff] %vm3652, %v3643
      %3677 = vst.msk [vmem:[%s244 + $0xc0] sm:$0xff] %vm3652, %v3644
      %3678 = vst.msk [vmem:[%s244 + $0xc8] sm:$0xff] %vm3652, %v3645
      %3679 = vst.msk [vmem:[%s244 + $0xd0] sm:$0xff] %vm3652, %v3646
      %3680 = vst.msk [vmem:[%s244 + $0xd8] sm:$0xff] %vm3652, %v3647
      %3681 = vst.msk [vmem:[%s244 + $0xe0] sm:$0xff] %vm3652, %v3648
      %3682 = vst.msk [vmem:[%s244 + $0xe8] sm:$0xff] %vm3652, %v3649
      %3683 = vst.msk [vmem:[%s244 + $0xf0] sm:$0xff] %vm3652, %v3650
      %3684 = vst.msk [vmem:[%s244 + $0xf8] sm:$0xff] %vm3652, %v3651
      %p3685 = scmp.lt.s32.totalorder %s16, 1
      %s3686 = scalar_select %p3685, %s16, 1
      %s3687 = smul.addr %s3686, 32
      %s3688 = smul.addr %s3687, 8
      %s3689 = scalar_lea.vmem %s5, %s3688
      // Predicated region
      $region41: #{tpu_custom_call.1} parent=39 // pred_check
        %p3690 = pneg %p149
      $region42: #{tpu_custom_call.1} parent=39 // pred_check_branch
        %3692 = sbr.rel (%p3690) target = $region44
      $region43: #{tpu_custom_call.1} parent=39 // pred_region
        _
      $region44: #{tpu_custom_call.1} parent=39 // pred_fallthru
        _
    $region40: #{tpu_custom_call.1} parent=5 // pred_fallthru
      _
    %p3693 = scmp.le.s32.totalorder 2, %s11
    // Predicated region
    $region45: #{tpu_custom_call.1} parent=5 // pred_check
      %p3694 = pneg %p3693
    $region46: #{tpu_custom_call.1} parent=5 // pred_check_branch
      %3696 = sbr.rel (%p3694) target = $region48
    $region47: #{tpu_custom_call.1} parent=5 // pred_region
      %s3697 = ssub.s32 %s11, 2
      // Predicated region
      $region49: #{tpu_custom_call.1} parent=47 // pred_check
        %p3698 = pneg %p155
      $region50: #{tpu_custom_call.1} parent=47 // pred_check_branch
        %3700 = sbr.rel (%p3698) target = $region52
      $region51: #{tpu_custom_call.1} parent=47 // pred_region
        %p3701 = scmp.lt.s32.totalorder %s17, 1
        %s3702 = scalar_select %p3701, %s17, 1
        %s3703 = smul.addr %s3702, 32
        %s3704 = smul.addr %s3703, 8
        %s3705 = scalar_lea.vmem %s5, %s3704
      $region52: #{tpu_custom_call.1} parent=47 // pred_fallthru
        _
    $region48: #{tpu_custom_call.1} parent=5 // pred_fallthru
      _
  $region6: #{tpu_custom_call.1} parent=0 // loop_footer
    %s15 = sadd.s32 1, %s11
  $region7: #{tpu_custom_call.1} parent=0 // loop_footer_branch
    %10 = sbr.rel target = $region3
  $region8: #{tpu_custom_call.1} parent=0 // loop_exit
    _

</llo_original>
